<compile_context>
chip_gen: v7x
topology: tpu7x:2x2x1
jax: 0.10.0
libtpu: 0.0.40
codegen_flags: <defaults>
</compile_context>

<pallas_src>
import jax
import jax.numpy as jnp
from jax import lax
from jax.experimental import pallas as pl
from jax.experimental.pallas import tpu as pltpu

_BN_EPS = 1e-5


# ----------------------------------------------------------------------------
# Fused per-block Pallas kernel
# ----------------------------------------------------------------------------
def _make_block_kernel(H, W, cin, conv_channels, has_out, compute_dtype):
    """ConvTranspose2x2 -> [conv3x3 + BN + ReLU]* -> +residual -> (out conv).

    In-kernel activations are (C, P) f32: channels on sublanes, the flattened
    zero-padded upsampled grid P = (2H+2)*(2W+2) on lanes.
    """
    Hi, Wi = H + 2, W + 2                         # padded *input* grid
    P_in = Hi * Wi
    Wp = 2 * W + 2                                # padded upsampled grid
    P = (2 * H + 2) * Wp
    n_convs = len(conv_channels) - 1
    # flat-lane offsets of the 9 conv taps (kh, kw) on the padded grid
    tap_offsets = [(kh - 1) * Wp + (kw - 1) for kh in range(3) for kw in range(3)]

    def conv3x3(act, mask, w_ref, sb_ref, relu):
        # act: (ci, P) f32 with zero 1-px halo.  One MXU matmul, lanes=spatial.
        slabs = [act if d == 0 else pltpu.roll(act, shift=(-d) % P, axis=1)
                 for d in tap_offsets]
        patches = jnp.concatenate(slabs, axis=0).astype(compute_dtype)  # (9ci, P)
        y = jnp.dot(w_ref[...], patches, preferred_element_type=jnp.float32)
        sb = sb_ref[...]                                   # (co, 2) f32
        y = y * sb[:, 0:1] + sb[:, 1:2]                    # folded BN affine
        if relu:
            y = jnp.maximum(y, 0.0)
        return y * mask                                    # keep the halo zero

    def kernel(*refs):
        mask_ref, x_ref, upw_ref, upb_ref = refs[:4]
        conv_refs = [(refs[4 + 2 * i], refs[5 + 2 * i]) for i in range(n_convs)]
        h_ref = refs[4 + 2 * n_convs]
        if has_out:
            outw_ref, outsb_ref = refs[5 + 2 * n_convs], refs[6 + 2 * n_convs]
        o_ref = refs[-1]

        mask = mask_ref[...]                               # (1, P) f32

        # --- ConvTranspose2d(k=2, s=2): ONE matmul over the padded input grid.
        #     Folded weight rows are ordered (row phase a, col phase b, out ch),
        #     so per-phase slabs are cheap major-dim slices.
        x = x_ref[0].astype(compute_dtype)                 # (cin, P_in)
        y = jnp.dot(upw_ref[...], x, preferred_element_type=jnp.float32)
        y = y + upb_ref[...]                               # (4*cin, P_in)

        # Assemble the upsampled image directly in the flat padded layout by a
        # single lane-axis concatenation (zero halo) + even/odd column
        # interleave per upsampled row.
        zc2 = jnp.zeros((cin, 2), jnp.float32)
        zedge = jnp.zeros((cin, Wp + 1), jnp.float32)
        pieces = [zedge]                                   # top halo + left pad
        for i in range(H):
            c0 = (i + 1) * Wi + 1                          # interior of input row i
            yr = y[:, c0:c0 + W]                           # (4*cin, W)
            for a in (0, 1):                               # upsampled row phase
                ev = yr[(2 * a) * cin:(2 * a + 1) * cin]       # col phase b = 0
                od = yr[(2 * a + 1) * cin:(2 * a + 2) * cin]   # col phase b = 1
                row = jnp.stack([ev, od], axis=-1).reshape(cin, 2 * W)
                pieces.append(row)
                pieces.append(zedge if (i == H - 1 and a == 1) else zc2)
        act = jnp.concatenate(pieces, axis=1)              # (cin, P), zero halo

        # --- conv_block: [3x3 conv + folded BN + ReLU] per channel pair -------
        for i in range(n_convs):
            w_ref, sb_ref = conv_refs[i]
            act = conv3x3(act, mask, w_ref, sb_ref, relu=True)

        # --- residual:  x = x + center_pad(h)  (h arrives padded & flat, f32) -
        act = act + h_ref[0]

        # --- (last block only) fused out_block 3x3 conv ------------------------
        if has_out:
            act = conv3x3(act, mask, outw_ref, outsb_ref, relu=False)

        o_ref[...] = act[None].astype(o_ref.dtype)

    return kernel


def _tpu_vmem_limit():
    """Generation-aware VMEM limit (v7x: 64 MiB/core, v5e/v6e: 128 MiB)."""
    try:
        cap = int(getattr(pltpu.get_tpu_info(), "vmem_capacity_bytes"))
        return max(32 * 2 ** 20, min(int(0.75 * cap), 96 * 2 ** 20))
    except Exception:
        return 48 * 2 ** 20            # safe default on every generation


def _fused_upsample_block(x_pad, H, W, kblk, h_pad, border_mask, kout,
                          compute_dtype, out_dtype, vmem_limit):
    """One UpsampleBlock (+ optional fused out conv) as a single pallas_call."""
    N, cin, P_in = x_pad.shape
    assert P_in == (H + 2) * (W + 2)
    P = (2 * H + 2) * (2 * W + 2)
    conv_channels = kblk["conv_channels"]
    c_last = conv_channels[-1]
    has_out = kout is not None
    c_final = int(kout["w"].shape[0]) if has_out else c_last

    inputs = [border_mask, x_pad, kblk["up_w"], kblk["up_b"]]
    in_specs = [
        pl.BlockSpec((1, P), lambda n: (0, 0)),
        pl.BlockSpec((1, cin, P_in), lambda n: (n, 0, 0)),
        pl.BlockSpec((4 * cin, cin), lambda n: (0, 0)),
        pl.BlockSpec((4 * cin, 1), lambda n: (0, 0)),
    ]
    for w_t, sb in zip(kblk["conv_w"], kblk["conv_sb"]):
        inputs += [w_t, sb]
        in_specs += [pl.BlockSpec(tuple(w_t.shape), lambda n: (0, 0)),
                     pl.BlockSpec(tuple(sb.shape), lambda n: (0, 0))]
    inputs.append(h_pad)
    in_specs.append(pl.BlockSpec((1, c_last, P), lambda n: (n, 0, 0)))
    if has_out:
        inputs += [kout["w"], kout["sb"]]
        in_specs += [pl.BlockSpec(tuple(kout["w"].shape), lambda n: (0, 0)),
                     pl.BlockSpec(tuple(kout["sb"].shape), lambda n: (0, 0))]

    kernel = _make_block_kernel(H, W, cin, conv_channels, has_out, compute_dtype)
    # TODO(synk): for v7x (2 TensorCores, 64 MiB VMEM) add a halo-aware row-tile
    # grid axis so each core gets several pipelined steps even at small batch.
    return pl.pallas_call(
        kernel,
        out_shape=jax.ShapeDtypeStruct((N, c_final, P), out_dtype),
        grid_spec=pltpu.PrefetchScalarGridSpec(
            num_scalar_prefetch=0,
            grid=(N,),
            in_specs=in_specs,
            out_specs=pl.BlockSpec((1, c_final, P), lambda n: (n, 0, 0))),
        compiler_params=pltpu.CompilerParams(
            dimension_semantics=("parallel",),       # batch across TensorCores
            vmem_limit_bytes=vmem_limit),
    )(*inputs)


# ----------------------------------------------------------------------------
# Parameter folding / wrapper glue
# ----------------------------------------------------------------------------
def _fold_conv_bn(conv):
    """Fold eval-mode BatchNorm (running stats) + conv bias into scale/bias."""
    co = conv["w"].shape[-1]
    if "gamma" in conv:
        scale = conv["gamma"] / jnp.sqrt(conv["var"] + _BN_EPS)
        bias = conv["beta"] + (conv["b"] - conv["mean"]) * scale
    else:
        scale = jnp.ones((co,), jnp.float32)
        bias = conv["b"]
    return scale.astype(jnp.float32), bias.astype(jnp.float32)


def _prep_block_params(blk, compute_dtype):
    """Reshape/fold one UpsampleBlock's parameters for the kernel."""
    cin = int(blk["up_w"].shape[2])
    up_w = jnp.transpose(blk["up_w"], (0, 1, 3, 2)).reshape(4 * cin, cin)
    kblk = {
        "cin": cin,
        "up_w": up_w.astype(compute_dtype),
        "up_b": jnp.tile(blk["up_b"].astype(jnp.float32), 4).reshape(4 * cin, 1),
        "conv_w": [], "conv_sb": [],
        "conv_channels": tuple([cin] + [int(c["w"].shape[-1])
                                        for c in blk["convs"]]),
    }
    for c in blk["convs"]:
        ci, co = int(c["w"].shape[2]), int(c["w"].shape[3])
        w_t = jnp.transpose(c["w"], (3, 0, 1, 2)).reshape(co, 9 * ci)
        scale, bias = _fold_conv_bn(c)
        kblk["conv_w"].append(w_t.astype(compute_dtype))
        kblk["conv_sb"].append(jnp.stack([scale, bias], axis=1))   # (co, 2)
    return kblk


def _border_mask(H2, W2):
    """(1, (H2+2)*(W2+2)) f32 mask: 1 on the interior, 0 on the 1-px halo."""
    m = jnp.zeros((H2 + 2, W2 + 2), jnp.float32).at[1:H2 + 1, 1:W2 + 1].set(1.0)
    return m.reshape(1, (H2 + 2) * (W2 + 2))


def center_pad(h, target_hw, spatial_axes=(2, 3)):
    """Center crop / zero-pad the two spatial dims of `h` to `target_hw`."""
    ah, aw = spatial_axes
    tH, tW = target_hw
    for axis, tgt in ((ah, tH), (aw, tW)):
        size = h.shape[axis]
        if size > tgt:
            start = (size - tgt) // 2
            h = lax.slice_in_dim(h, start, start + tgt, axis=axis)
    H, W = h.shape[ah], h.shape[aw]
    if H < tH or W < tW:
        pads = [(0, 0)] * h.ndim
        pads[ah] = ((tH - H) // 2, tH - H - (tH - H) // 2)
        pads[aw] = ((tW - W) // 2, tW - W - (tW - W) // 2)
        h = jnp.pad(h, pads)
    return h


# ----------------------------------------------------------------------------
# Decoder forward (Pallas) and pure-JAX reference
# ----------------------------------------------------------------------------
def unet_decoder_forward(params, x_nchw, hidden_states_nchw, concat_hidden=False,
                         use_pallas=True, compute_dtype=jnp.float32):
    """UNetDecoder.forward.  x / hidden_states / output are NCHW."""
    if not use_pallas:
        return unet_decoder_ref(params, x_nchw, hidden_states_nchw, concat_hidden)
    if concat_hidden:
        # TODO(synk): concat_hidden=True changes the first conv's in_channels;
        # only the default residual path is implemented as a Pallas kernel.
        raise NotImplementedError("concat_hidden=True Pallas path not implemented")

    vmem_limit = _tpu_vmem_limit()
    n_blocks = len(params["blocks"])
    out_c = int(params["out"]["w"].shape[-1])

    N, c, Hc, Wc = x_nchw.shape
    # Pad the decoder input once -> channel-major, flattened padded grid.
    x_pad = jnp.pad(x_nchw, ((0, 0), (0, 0), (1, 1), (1, 1)))
    x_pad = x_pad.reshape(N, c, (Hc + 2) * (Wc + 2))

    # TODO(synk): on v5e/v6e (128 MiB VMEM, single TC) adjacent blocks could be
    # fused into one pallas_call to avoid the inter-block HBM round trip.
    for bi, (blk, h) in enumerate(zip(params["blocks"],
                                      reversed(hidden_states_nchw))):
        kblk = _prep_block_params(blk, compute_dtype)
        assert kblk["cin"] == c
        c_last = kblk["conv_channels"][-1]
        H2, W2 = 2 * Hc, 2 * Wc
        P = (H2 + 2) * (W2 + 2)

        # residual: center_pad(h) to the upsampled size, add a 1-px zero halo,
        # flatten the (padded) spatial grid onto the lane axis.
        h = center_pad(h, (H2, W2), spatial_axes=(2, 3))
        assert h.shape[1] == c_last, "hidden channels must match conv_block out"
        h_pad = jnp.pad(h, ((0, 0), (0, 0), (1, 1), (1, 1)))
        h_pad = h_pad.reshape(N, c_last, P).astype(jnp.float32)

        is_last = bi == n_blocks - 1
        kout = None
        if is_last:                             # fuse the final out_block conv
            w = params["out"]["w"]
            kout = {
                "w": jnp.transpose(w, (3, 0, 1, 2))
                        .reshape(out_c, 9 * c_last).astype(compute_dtype),
                "sb": jnp.stack([jnp.ones((out_c,), jnp.float32),
                                 params["out"]["b"].astype(jnp.float32)],
                                axis=1),
            }
        out_dtype = jnp.float32 if is_last else compute_dtype
        x_pad = _fused_upsample_block(x_pad, Hc, Wc, kblk, h_pad,
                                      _border_mask(H2, W2), kout,
                                      compute_dtype, out_dtype, vmem_limit)
        Hc, Wc = H2, W2
        c = out_c if is_last else c_last

    # strip the zero halo of the last block's channel-major output -> NCHW.
    out = x_pad.reshape(N, c, Hc + 2, Wc + 2)[:, :, 1:-1, 1:-1]
    return out.astype(jnp.float32)


def _conv3x3_ref(x, w, b):
    y = lax.conv_general_dilated(x, w, (1, 1), "SAME",
                                 dimension_numbers=("NHWC", "HWIO", "NHWC"))
    return y + b


def _conv_transpose2x2_ref(x, w, b):
    N, H, W, _ = x.shape
    co = w.shape[-1]
    y = jnp.einsum("nhwi,abio->nhawbo", x, w)
    return y.reshape(N, 2 * H, 2 * W, co) + b


def unet_decoder_ref(params, x_nchw, hidden_states_nchw, concat_hidden=False):
    """Pure-JAX reference (correctness checking only)."""
    assert not concat_hidden
    x = jnp.transpose(x_nchw, (0, 2, 3, 1))
    hiddens = [jnp.transpose(h, (0, 2, 3, 1)) for h in hidden_states_nchw]
    for blk, h in zip(params["blocks"], reversed(hiddens)):
        x = _conv_transpose2x2_ref(x, blk["up_w"], blk["up_b"])
        for cv in blk["convs"]:
            y = _conv3x3_ref(x, cv["w"], cv["b"])
            if "gamma" in cv:                       # eval-mode BatchNorm
                y = (y - cv["mean"]) / jnp.sqrt(cv["var"] + _BN_EPS) \
                    * cv["gamma"] + cv["beta"]
            x = jnp.maximum(y, 0.0)
        h = center_pad(h, (x.shape[1], x.shape[2]), spatial_axes=(1, 2))
        x = x + h
    x = _conv3x3_ref(x, params["out"]["w"], params["out"]["b"])
    return jnp.transpose(x, (0, 3, 1, 2))


def init_unet_decoder_params(key, in_channels, blocks, out_channels,
                             batch_norm=True):
    """Deterministic synthetic parameters matching the module's shapes."""
    params = {"blocks": []}
    c = in_channels
    for channels in blocks:
        assert channels[0] == c, "block input channels must match running x"
        key, k1, k2 = jax.random.split(key, 3)
        blk = {"up_w": 0.2 * jax.random.normal(k1, (2, 2, c, c), jnp.float32),
               "up_b": 0.1 * jax.random.normal(k2, (c,), jnp.float32),
               "convs": []}
        ci = c
        for co in channels[1:]:
            key, kw, kb, kg, kbe, km, kv = jax.random.split(key, 7)
            cv = {"w": 0.2 * jax.random.normal(kw, (3, 3, ci, co), jnp.float32),
                  "b": 0.1 * jax.random.normal(kb, (co,), jnp.float32)}
            if batch_norm:                         # eval-mode running statistics
                cv.update(
                    gamma=1.0 + 0.1 * jax.random.normal(kg, (co,), jnp.float32),
                    beta=0.1 * jax.random.normal(kbe, (co,), jnp.float32),
                    mean=0.1 * jax.random.normal(km, (co,), jnp.float32),
                    var=0.5 + jax.random.uniform(kv, (co,), jnp.float32))
            blk["convs"].append(cv)
            ci = co
        params["blocks"].append(blk)
        c = channels[-1]
    key, kw, kb = jax.random.split(key, 3)
    params["out"] = {
        "w": 0.2 * jax.random.normal(kw, (3, 3, c, out_channels), jnp.float32),
        "b": 0.1 * jax.random.normal(kb, (out_channels,), jnp.float32)}
    return params


# ----------------------------------------------------------------------------
if __name__ == "__main__":
    key = jax.random.PRNGKey(0)
    N = 2
    in_channels = 16
    blocks = ((16, 8), (8, 8))        # two upsample blocks: 16->8, 8->8 channels
    out_channels = 4
    H0 = W0 = 4                       # decoder input spatial size

    kx, kh1, kh2, kp = jax.random.split(key, 4)
    x = jax.random.normal(kx, (N, in_channels, H0, W0), jnp.float32)      # NCHW
    # hidden_states (NCHW), shallowest first (forward iterates them reversed):
    hidden_states = [
        jax.random.normal(kh1, (N, 8, 16, 16), jnp.float32),  # pairs with blocks[1]
        jax.random.normal(kh2, (N, 8, 8, 8), jnp.float32),    # pairs with blocks[0]
    ]
    params = init_unet_decoder_params(kp, in_channels, blocks, out_channels)

    ref = unet_decoder_ref(params, x, hidden_states)
    assert ref.shape == (N, out_channels, 16, 16), ref.shape

    # f32-matmul path: strict check against the XLA reference.
    out_f32 = jax.block_until_ready(
        unet_decoder_forward(params, x, hidden_states, use_pallas=True,
                             compute_dtype=jnp.float32))
    assert out_f32.shape == ref.shape, out_f32.shape
    max_err = float(jnp.max(jnp.abs(out_f32 - ref)))
    assert jnp.allclose(out_f32, ref, rtol=2e-3, atol=2e-3), f"max_err={max_err}"

    # bf16-MXU path (f32 accumulation; BN/ReLU/residual stay f32): sanity check.
    out_bf16 = jax.block_until_ready(
        unet_decoder_forward(params, x, hidden_states, use_pallas=True,
                             compute_dtype=jnp.bfloat16))
    rel_l2 = float(jnp.sqrt(jnp.sum((out_bf16 - ref) ** 2))
                   / jnp.sqrt(jnp.sum(ref ** 2)))
    assert rel_l2 < 3e-2, f"bf16 rel_l2={rel_l2}"

    print("KERNEL_OK")
</pallas_src>

<mosaic_0001>
module attributes {stable_mosaic.version = 11 : i64} {
  func.func @kernel(%arg0: i32, %arg1: memref<1x100xf32, #tpu.memory_space<vmem>>, %arg2: memref<1x16x36xf32, #tpu.memory_space<vmem>>, %arg3: memref<64x16xf32, #tpu.memory_space<vmem>>, %arg4: memref<64x1xf32, #tpu.memory_space<vmem>>, %arg5: memref<8x144xf32, #tpu.memory_space<vmem>>, %arg6: memref<8x2xf32, #tpu.memory_space<vmem>>, %arg7: memref<1x8x100xf32, #tpu.memory_space<vmem>>, %arg8: memref<1x8x100xf32, #tpu.memory_space<vmem>>) attributes {dimension_semantics = [#tpu.dimension_semantics<parallel>], iteration_bounds = array<i64: 2>, scalar_prefetch = 0 : i64, scratch_operands = 0 : i64, tpu.core_type = #tpu.core_type<tc>, window_params = [{pipeline_mode = #tpu.pipeline_mode<synchronous>, transform_indices = @transform_0, window_bounds = array<i64: 1, 100>}, {transform_indices = @transform_1, window_bounds = array<i64: 1, 16, 36>}, {pipeline_mode = #tpu.pipeline_mode<synchronous>, transform_indices = @transform_2, window_bounds = array<i64: 64, 16>}, {pipeline_mode = #tpu.pipeline_mode<synchronous>, transform_indices = @transform_3, window_bounds = array<i64: 64, 1>}, {pipeline_mode = #tpu.pipeline_mode<synchronous>, transform_indices = @transform_4, window_bounds = array<i64: 8, 144>}, {pipeline_mode = #tpu.pipeline_mode<synchronous>, transform_indices = @transform_5, window_bounds = array<i64: 8, 2>}, {transform_indices = @transform_6, window_bounds = array<i64: 1, 8, 100>}, {transform_indices = @transform_7, window_bounds = array<i64: 1, 8, 100>}]} {
    %c0 = arith.constant 0 : index
    %c0_0 = arith.constant 0 : index
    %0 = vector.load %arg1[%c0, %c0_0] : memref<1x100xf32, #tpu.memory_space<vmem>>, vector<1x100xf32>
    %c0_1 = arith.constant 0 : index
    %c0_2 = arith.constant 0 : index
    %c0_3 = arith.constant 0 : index
    %1 = vector.load %arg2[%c0_1, %c0_2, %c0_3] : memref<1x16x36xf32, #tpu.memory_space<vmem>>, vector<1x16x36xf32>
    %2 = vector.shape_cast %1 : vector<1x16x36xf32> to vector<16x36xf32>
    %c0_4 = arith.constant 0 : index
    %c0_5 = arith.constant 0 : index
    %3 = vector.load %arg3[%c0_4, %c0_5] : memref<64x16xf32, #tpu.memory_space<vmem>>, vector<64x16xf32>
    %cst = arith.constant dense<0.000000e+00> : vector<64x36xf32>
    %4 = tpu.matmul %3, %2, %cst {dimension_numbers = #tpu.dot_dimension_numbers<[1], [0], [0], [1], [0, 0, 1, 1], [], []>} : vector<64x16xf32>, vector<16x36xf32>, vector<64x36xf32> -> vector<64x36xf32>
    %c0_6 = arith.constant 0 : index
    %c0_7 = arith.constant 0 : index
    %5 = vector.load %arg4[%c0_6, %c0_7] : memref<64x1xf32, #tpu.memory_space<vmem>>, vector<64x1xf32>
    %6 = vector.broadcast %5 : vector<64x1xf32> to vector<64x36xf32>
    %7 = arith.addf %4, %6 : vector<64x36xf32>
    %cst_8 = arith.constant 0.000000e+00 : f32
    %8 = vector.broadcast %cst_8 : f32 to vector<16x2xf32>
    %cst_9 = arith.constant 0.000000e+00 : f32
    %9 = vector.broadcast %cst_9 : f32 to vector<16x11xf32>
    %10 = vector.extract_strided_slice %7 {offsets = [0, 7], sizes = [64, 4], strides = [1, 1]} : vector<64x36xf32> to vector<64x4xf32>
    %11 = vector.extract_strided_slice %10 {offsets = [0, 0], sizes = [16, 4], strides = [1, 1]} : vector<64x4xf32> to vector<16x4xf32>
    %12 = vector.extract_strided_slice %10 {offsets = [16, 0], sizes = [16, 4], strides = [1, 1]} : vector<64x4xf32> to vector<16x4xf32>
    %13 = vector.shape_cast %11 : vector<16x4xf32> to vector<16x4x1xf32>
    %14 = vector.shape_cast %12 : vector<16x4xf32> to vector<16x4x1xf32>
    %15 = tpu.concatenate %13, %14 in 2 : vector<16x4x1xf32>, vector<16x4x1xf32> -> vector<16x4x2xf32>
    %16 = vector.shape_cast %15 : vector<16x4x2xf32> to vector<16x8xf32>
    %17 = vector.extract_strided_slice %10 {offsets = [32, 0], sizes = [16, 4], strides = [1, 1]} : vector<64x4xf32> to vector<16x4xf32>
    %18 = vector.extract_strided_slice %10 {offsets = [48, 0], sizes = [16, 4], strides = [1, 1]} : vector<64x4xf32> to vector<16x4xf32>
    %19 = vector.shape_cast %17 : vector<16x4xf32> to vector<16x4x1xf32>
    %20 = vector.shape_cast %18 : vector<16x4xf32> to vector<16x4x1xf32>
    %21 = tpu.concatenate %19, %20 in 2 : vector<16x4x1xf32>, vector<16x4x1xf32> -> vector<16x4x2xf32>
    %22 = vector.shape_cast %21 : vector<16x4x2xf32> to vector<16x8xf32>
    %23 = vector.extract_strided_slice %7 {offsets = [0, 13], sizes = [64, 4], strides = [1, 1]} : vector<64x36xf32> to vector<64x4xf32>
    %24 = vector.extract_strided_slice %23 {offsets = [0, 0], sizes = [16, 4], strides = [1, 1]} : vector<64x4xf32> to vector<16x4xf32>
    %25 = vector.extract_strided_slice %23 {offsets = [16, 0], sizes = [16, 4], strides = [1, 1]} : vector<64x4xf32> to vector<16x4xf32>
    %26 = vector.shape_cast %24 : vector<16x4xf32> to vector<16x4x1xf32>
    %27 = vector.shape_cast %25 : vector<16x4xf32> to vector<16x4x1xf32>
    %28 = tpu.concatenate %26, %27 in 2 : vector<16x4x1xf32>, vector<16x4x1xf32> -> vector<16x4x2xf32>
    %29 = vector.shape_cast %28 : vector<16x4x2xf32> to vector<16x8xf32>
    %30 = vector.extract_strided_slice %23 {offsets = [32, 0], sizes = [16, 4], strides = [1, 1]} : vector<64x4xf32> to vector<16x4xf32>
    %31 = vector.extract_strided_slice %23 {offsets = [48, 0], sizes = [16, 4], strides = [1, 1]} : vector<64x4xf32> to vector<16x4xf32>
    %32 = vector.shape_cast %30 : vector<16x4xf32> to vector<16x4x1xf32>
    %33 = vector.shape_cast %31 : vector<16x4xf32> to vector<16x4x1xf32>
    %34 = tpu.concatenate %32, %33 in 2 : vector<16x4x1xf32>, vector<16x4x1xf32> -> vector<16x4x2xf32>
    %35 = vector.shape_cast %34 : vector<16x4x2xf32> to vector<16x8xf32>
    %36 = vector.extract_strided_slice %7 {offsets = [0, 19], sizes = [64, 4], strides = [1, 1]} : vector<64x36xf32> to vector<64x4xf32>
    %37 = vector.extract_strided_slice %36 {offsets = [0, 0], sizes = [16, 4], strides = [1, 1]} : vector<64x4xf32> to vector<16x4xf32>
    %38 = vector.extract_strided_slice %36 {offsets = [16, 0], sizes = [16, 4], strides = [1, 1]} : vector<64x4xf32> to vector<16x4xf32>
    %39 = vector.shape_cast %37 : vector<16x4xf32> to vector<16x4x1xf32>
    %40 = vector.shape_cast %38 : vector<16x4xf32> to vector<16x4x1xf32>
    %41 = tpu.concatenate %39, %40 in 2 : vector<16x4x1xf32>, vector<16x4x1xf32> -> vector<16x4x2xf32>
    %42 = vector.shape_cast %41 : vector<16x4x2xf32> to vector<16x8xf32>
    %43 = vector.extract_strided_slice %36 {offsets = [32, 0], sizes = [16, 4], strides = [1, 1]} : vector<64x4xf32> to vector<16x4xf32>
    %44 = vector.extract_strided_slice %36 {offsets = [48, 0], sizes = [16, 4], strides = [1, 1]} : vector<64x4xf32> to vector<16x4xf32>
    %45 = vector.shape_cast %43 : vector<16x4xf32> to vector<16x4x1xf32>
    %46 = vector.shape_cast %44 : vector<16x4xf32> to vector<16x4x1xf32>
    %47 = tpu.concatenate %45, %46 in 2 : vector<16x4x1xf32>, vector<16x4x1xf32> -> vector<16x4x2xf32>
    %48 = vector.shape_cast %47 : vector<16x4x2xf32> to vector<16x8xf32>
    %49 = vector.extract_strided_slice %7 {offsets = [0, 25], sizes = [64, 4], strides = [1, 1]} : vector<64x36xf32> to vector<64x4xf32>
    %50 = vector.extract_strided_slice %49 {offsets = [0, 0], sizes = [16, 4], strides = [1, 1]} : vector<64x4xf32> to vector<16x4xf32>
    %51 = vector.extract_strided_slice %49 {offsets = [16, 0], sizes = [16, 4], strides = [1, 1]} : vector<64x4xf32> to vector<16x4xf32>
    %52 = vector.shape_cast %50 : vector<16x4xf32> to vector<16x4x1xf32>
    %53 = vector.shape_cast %51 : vector<16x4xf32> to vector<16x4x1xf32>
    %54 = tpu.concatenate %52, %53 in 2 : vector<16x4x1xf32>, vector<16x4x1xf32> -> vector<16x4x2xf32>
    %55 = vector.shape_cast %54 : vector<16x4x2xf32> to vector<16x8xf32>
    %56 = vector.extract_strided_slice %49 {offsets = [32, 0], sizes = [16, 4], strides = [1, 1]} : vector<64x4xf32> to vector<16x4xf32>
    %57 = vector.extract_strided_slice %49 {offsets = [48, 0], sizes = [16, 4], strides = [1, 1]} : vector<64x4xf32> to vector<16x4xf32>
    %58 = vector.shape_cast %56 : vector<16x4xf32> to vector<16x4x1xf32>
    %59 = vector.shape_cast %57 : vector<16x4xf32> to vector<16x4x1xf32>
    %60 = tpu.concatenate %58, %59 in 2 : vector<16x4x1xf32>, vector<16x4x1xf32> -> vector<16x4x2xf32>
    %61 = vector.shape_cast %60 : vector<16x4x2xf32> to vector<16x8xf32>
    %62 = tpu.concatenate %9, %16, %8, %22, %8, %29, %8, %35, %8, %42, %8, %48, %8, %55, %8, %61 in 1 : vector<16x11xf32>, vector<16x8xf32>, vector<16x2xf32>, vector<16x8xf32>, vector<16x2xf32>, vector<16x8xf32>, vector<16x2xf32>, vector<16x8xf32>, vector<16x2xf32>, vector<16x8xf32>, vector<16x2xf32>, vector<16x8xf32>, vector<16x2xf32>, vector<16x8xf32>, vector<16x2xf32>, vector<16x8xf32> -> vector<16x89xf32>
    %63 = tpu.concatenate %62, %9 in 1 : vector<16x89xf32>, vector<16x11xf32> -> vector<16x100xf32>
    %c11_i32 = arith.constant 11 : i32
    %64 = tpu.dynamic_rotate %63 by %c11_i32 dim 1 : vector<16x100xf32>, i32 -> vector<16x100xf32>
    %c10_i32 = arith.constant 10 : i32
    %65 = tpu.dynamic_rotate %63 by %c10_i32 dim 1 : vector<16x100xf32>, i32 -> vector<16x100xf32>
    %c9_i32 = arith.constant 9 : i32
    %66 = tpu.dynamic_rotate %63 by %c9_i32 dim 1 : vector<16x100xf32>, i32 -> vector<16x100xf32>
    %c1_i32 = arith.constant 1 : i32
    %67 = tpu.dynamic_rotate %63 by %c1_i32 dim 1 : vector<16x100xf32>, i32 -> vector<16x100xf32>
    %c99_i32 = arith.constant 99 : i32
    %68 = tpu.dynamic_rotate %63 by %c99_i32 dim 1 : vector<16x100xf32>, i32 -> vector<16x100xf32>
    %c91_i32 = arith.constant 91 : i32
    %69 = tpu.dynamic_rotate %63 by %c91_i32 dim 1 : vector<16x100xf32>, i32 -> vector<16x100xf32>
    %c90_i32 = arith.constant 90 : i32
    %70 = tpu.dynamic_rotate %63 by %c90_i32 dim 1 : vector<16x100xf32>, i32 -> vector<16x100xf32>
    %c89_i32 = arith.constant 89 : i32
    %71 = tpu.dynamic_rotate %63 by %c89_i32 dim 1 : vector<16x100xf32>, i32 -> vector<16x100xf32>
    %72 = tpu.concatenate %64, %65, %66, %67, %63, %68, %69, %70, %71 in 0 : vector<16x100xf32>, vector<16x100xf32>, vector<16x100xf32>, vector<16x100xf32>, vector<16x100xf32>, vector<16x100xf32>, vector<16x100xf32>, vector<16x100xf32>, vector<16x100xf32> -> vector<144x100xf32>
    %c0_10 = arith.constant 0 : index
    %c0_11 = arith.constant 0 : index
    %73 = vector.load %arg5[%c0_10, %c0_11] : memref<8x144xf32, #tpu.memory_space<vmem>>, vector<8x144xf32>
    %cst_12 = arith.constant dense<0.000000e+00> : vector<8x100xf32>
    %74 = tpu.matmul %73, %72, %cst_12 {dimension_numbers = #tpu.dot_dimension_numbers<[1], [0], [0], [1], [0, 0, 1, 1], [], []>} : vector<8x144xf32>, vector<144x100xf32>, vector<8x100xf32> -> vector<8x100xf32>
    %c0_13 = arith.constant 0 : index
    %c0_14 = arith.constant 0 : index
    %75 = vector.load %arg6[%c0_13, %c0_14] : memref<8x2xf32, #tpu.memory_space<vmem>>, vector<8x2xf32>
    %76 = vector.extract_strided_slice %75 {offsets = [0, 0], sizes = [8, 1], strides = [1, 1]} : vector<8x2xf32> to vector<8x1xf32>
    %77 = vector.broadcast %76 : vector<8x1xf32> to vector<8x100xf32>
    %78 = arith.mulf %74, %77 : vector<8x100xf32>
    %79 = vector.extract_strided_slice %75 {offsets = [0, 1], sizes = [8, 1], strides = [1, 1]} : vector<8x2xf32> to vector<8x1xf32>
    %80 = vector.broadcast %79 : vector<8x1xf32> to vector<8x100xf32>
    %81 = arith.addf %78, %80 : vector<8x100xf32>
    %cst_15 = arith.constant 0.000000e+00 : f32
    %82 = vector.broadcast %cst_15 : f32 to vector<8x100xf32>
    %83 = arith.maximumf %81, %82 : vector<8x100xf32>
    %84 = vector.broadcast %0 : vector<1x100xf32> to vector<8x100xf32>
    %85 = arith.mulf %83, %84 : vector<8x100xf32>
    %c0_16 = arith.constant 0 : index
    %c0_17 = arith.constant 0 : index
    %c0_18 = arith.constant 0 : index
    %86 = vector.load %arg7[%c0_16, %c0_17, %c0_18] : memref<1x8x100xf32, #tpu.memory_space<vmem>>, vector<1x8x100xf32>
    %87 = vector.shape_cast %86 : vector<1x8x100xf32> to vector<8x100xf32>
    %88 = arith.addf %85, %87 : vector<8x100xf32>
    %89 = vector.shape_cast %88 : vector<8x100xf32> to vector<1x8x100xf32>
    %c0_19 = arith.constant 0 : index
    %c0_20 = arith.constant 0 : index
    %c0_21 = arith.constant 0 : index
    %90 = vector.load %arg8[%c0_19, %c0_20, %c0_21] : memref<1x8x100xf32, #tpu.memory_space<vmem>>, vector<1x8x100xf32>
    tpu.vector_store %arg8[%c0_19, %c0_20, %c0_21], %89 {strides = array<i32>} : memref<1x8x100xf32, #tpu.memory_space<vmem>>, vector<1x8x100xf32>,
    return
  }
  func.func @transform_0(%arg0: i32) -> (i32, i32) {
    %c0_i32 = arith.constant 0 : i32
    %c0_i32_0 = arith.constant 0 : i32
    %c0_i32_1 = arith.constant 0 : i32
    return %c0_i32, %c0_i32_0 : i32, i32
  }
  func.func @transform_1(%arg0: i32) -> (i32, i32, i32) {
    %c0_i32 = arith.constant 0 : i32
    %c0_i32_0 = arith.constant 0 : i32
    %c0_i32_1 = arith.constant 0 : i32
    return %arg0, %c0_i32, %c0_i32_0 : i32, i32, i32
  }
  func.func @transform_2(%arg0: i32) -> (i32, i32) {
    %c0_i32 = arith.constant 0 : i32
    %c0_i32_0 = arith.constant 0 : i32
    %c0_i32_1 = arith.constant 0 : i32
    return %c0_i32, %c0_i32_0 : i32, i32
  }
  func.func @transform_3(%arg0: i32) -> (i32, i32) {
    %c0_i32 = arith.constant 0 : i32
    %c0_i32_0 = arith.constant 0 : i32
    %c0_i32_1 = arith.constant 0 : i32
    return %c0_i32, %c0_i32_0 : i32, i32
  }
  func.func @transform_4(%arg0: i32) -> (i32, i32) {
    %c0_i32 = arith.constant 0 : i32
    %c0_i32_0 = arith.constant 0 : i32
    %c0_i32_1 = arith.constant 0 : i32
    return %c0_i32, %c0_i32_0 : i32, i32
  }
  func.func @transform_5(%arg0: i32) -> (i32, i32) {
    %c0_i32 = arith.constant 0 : i32
    %c0_i32_0 = arith.constant 0 : i32
    %c0_i32_1 = arith.constant 0 : i32
    return %c0_i32, %c0_i32_0 : i32, i32
  }
  func.func @transform_6(%arg0: i32) -> (i32, i32, i32) {
    %c0_i32 = arith.constant 0 : i32
    %c0_i32_0 = arith.constant 0 : i32
    %c0_i32_1 = arith.constant 0 : i32
    return %arg0, %c0_i32, %c0_i32_0 : i32, i32, i32
  }
  func.func @transform_7(%arg0: i32) -> (i32, i32, i32) {
    %c0_i32 = arith.constant 0 : i32
    %c0_i32_0 = arith.constant 0 : i32
    %c0_i32_1 = arith.constant 0 : i32
    return %arg0, %c0_i32, %c0_i32_0 : i32, i32, i32
  }
}

</mosaic_0001>

<llo_original>
// kernel: tpu_custom_call.1
$region0: #{tpu_custom_call.1}
  #allocation0 [shape = 'u32[]', space=smem, size = 0x4, offset = 0x4, fixed_abs, tag = 'smem constant byte address 0x4 - core index']
  #allocation1 [shape = 'u32[144,128]{1,0:T(1,128)}', space=vmem, size = 0x12000, scoped, tag = 'internal scratch']
  %s0 = inlined_call_operand.vmem [shape: f32[1,100], index: 0, kind: input, shape index: {}]
  %s1 = inlined_call_operand.vmem [shape: f32[2,16,36], index: 1, kind: input, shape index: {}]
  %s2 = inlined_call_operand.vmem [shape: f32[64,16], index: 2, kind: input, shape index: {}]
  %s3 = inlined_call_operand.vmem [shape: f32[64,1], index: 3, kind: input, shape index: {}]
  %s4 = inlined_call_operand.vmem [shape: f32[8,144], index: 4, kind: input, shape index: {}]
  %s5 = inlined_call_operand.vmem [shape: f32[8,2], index: 5, kind: input, shape index: {}]
  %s6 = inlined_call_operand.vmem [shape: f32[2,8,100], index: 6, kind: input, shape index: {}]
  %s7 = inlined_call_operand.hbm [shape: f32[2,8,100], index: 7, kind: output, shape index: {}]
  %s8 = sld [smem:[#allocation0]]
  $region61: #{tpu_custom_call.1} parent=0
    _
  %s10 = ssub.s32 1, %s8
  %s11 = scalar_select 0, %s10, %s8
  $region1: #{tpu_custom_call.1} parent=0
    #allocation2 [shape = 'u8[8192]{0}', space=vmem, size = 0x2000, scoped, tag = 'output window, operand 0']
    #allocation3 [shape = 's32[2]{0}', space=sflag, size = 0x8, scoped, tag = 'scoped memory for tpu_custom_call.1']
    %12 = vsyncpa [#allocation3], 0
    %s13 = scalar_lea.sflag [#allocation3], 1
    %14 = vsyncpa %s13, 0
    loop: start=0, step=1, limit=4
    $region2: #{tpu_custom_call.1} parent=1 // loop_pre_header
      _
    $region3: #{tpu_custom_call.1} parent=1 // loop_header
      %s16 = sphi 0, %s20
      %p17 = scmp.ge.s32.totalorder %s16, 4
      %s24 = sphi 0, %s24
      %s26 = sphi 0, %s24
      %s27 = sphi 0, %s26
      %s41 = sphi 0, %s27
      %s47 = sphi 0, %s49
      %s50 = sphi 0, %s47
      %s51 = sphi 0, %s50
      %s67 = sphi 0, %s51
      %s71 = sphi 0, %s71
      %s73 = sphi 0, %s71
      %s74 = sphi 0, %s73
      %s88 = sphi 0, %s74
      %s92 = sphi 0, %s92
      %s94 = sphi 0, %s92
      %s95 = sphi 0, %s94
      %s109 = sphi 0, %s95
      %s113 = sphi 0, %s113
      %s115 = sphi 0, %s113
      %s116 = sphi 0, %s115
      %s130 = sphi 0, %s116
      %s134 = sphi 0, %s134
      %s136 = sphi 0, %s134
      %s137 = sphi 0, %s136
      %s151 = sphi 0, %s137
      %s157 = sphi 0, %s159
      %s160 = sphi 0, %s157
      %s161 = sphi 0, %s160
      %s177 = sphi 0, %s161
      %s183 = sphi 0, %s185
      %s186 = sphi 0, %s183
      %s187 = sphi 0, %s186
      %s203 = sphi 0, %s187
    $region4: #{tpu_custom_call.1} parent=1 // loop_header_branch
      %19 = sbr.rel (%p17) target = $region8
    $region5: #{tpu_custom_call.1} parent=1 // loop_body
      %s21 = ssub.s32 %s16, 1
      %s22 = ssub.s32 %s16, 2
      %s23 = sadd.s32 %s16, 1
      %s25 = sadd.s32 %s24, 1
      %p28 = scmp.eq.s32.totalorder %s16, 1
      %p29 = scmp.ne.s32.totalorder %s24, %s26
      %p30 = scmp.eq.s32.totalorder %s16, 0
      %p31 = por %p29, %p30
      %p32 = scmp.ne.s32.totalorder %s24, %s26
      %p33 = scmp.eq.s32.totalorder %s21, 1
      %p34 = por %p32, %p33
      %p35 = scmp.ne.s32.totalorder %s26, %s27
      %p36 = scmp.eq.s32.totalorder %s21, 0
      %p37 = por %p35, %p36
      %p38 = scmp.ne.s32.totalorder %s26, %s27
      %p39 = scmp.eq.s32.totalorder %s22, 1
      %p40 = por %p38, %p39
      %p42 = scmp.ne.s32.totalorder %s27, %s41
      %p43 = scmp.eq.s32.totalorder %s22, 0
      %p44 = por %p42, %p43
      %s45 = ssub.s32 %s16, %s23
      %p46 = scmp.eq.s32.totalorder %s45, 0
      %s48 = sadd.s32 %s47, 1
      %s49 = scalar_select %p46, %s47, %s48
      %p52 = pneg %p46
      %p53 = scmp.eq.s32.totalorder %s16, 1
      %p54 = por %p52, %p53
      %p55 = scmp.ne.s32.totalorder %s47, %s50
      %p56 = scmp.eq.s32.totalorder %s16, 0
      %p57 = por %p55, %p56
      %p58 = scmp.ne.s32.totalorder %s47, %s50
      %p59 = scmp.eq.s32.totalorder %s21, 1
      %p60 = por %p58, %p59
      %p61 = scmp.ne.s32.totalorder %s50, %s51
      %p62 = scmp.eq.s32.totalorder %s21, 0
      %p63 = por %p61, %p62
      %p64 = scmp.ne.s32.totalorder %s50, %s51
      %p65 = scmp.eq.s32.totalorder %s22, 1
      %p66 = por %p64, %p65
      %p68 = scmp.ne.s32.totalorder %s51, %s67
      %p69 = scmp.eq.s32.totalorder %s22, 0
      %p70 = por %p68, %p69
      %s72 = sadd.s32 %s71, 1
      %p75 = scmp.eq.s32.totalorder %s16, 1
      %p76 = scmp.ne.s32.totalorder %s71, %s73
      %p77 = scmp.eq.s32.totalorder %s16, 0
      %p78 = por %p76, %p77
      %p79 = scmp.ne.s32.totalorder %s71, %s73
      %p80 = scmp.eq.s32.totalorder %s21, 1
      %p81 = por %p79, %p80
      %p82 = scmp.ne.s32.totalorder %s73, %s74
      %p83 = scmp.eq.s32.totalorder %s21, 0
      %p84 = por %p82, %p83
      %p85 = scmp.ne.s32.totalorder %s73, %s74
      %p86 = scmp.eq.s32.totalorder %s22, 1
      %p87 = por %p85, %p86
      %p89 = scmp.ne.s32.totalorder %s74, %s88
      %p90 = scmp.eq.s32.totalorder %s22, 0
      %p91 = por %p89, %p90
      %s93 = sadd.s32 %s92, 1
      %p96 = scmp.eq.s32.totalorder %s16, 1
      %p97 = scmp.ne.s32.totalorder %s92, %s94
      %p98 = scmp.eq.s32.totalorder %s16, 0
      %p99 = por %p97, %p98
      %p100 = scmp.ne.s32.totalorder %s92, %s94
      %p101 = scmp.eq.s32.totalorder %s21, 1
      %p102 = por %p100, %p101
      %p103 = scmp.ne.s32.totalorder %s94, %s95
      %p104 = scmp.eq.s32.totalorder %s21, 0
      %p105 = por %p103, %p104
      %p106 = scmp.ne.s32.totalorder %s94, %s95
      %p107 = scmp.eq.s32.totalorder %s22, 1
      %p108 = por %p106, %p107
      %p110 = scmp.ne.s32.totalorder %s95, %s109
      %p111 = scmp.eq.s32.totalorder %s22, 0
      %p112 = por %p110, %p111
      %s114 = sadd.s32 %s113, 1
      %p117 = scmp.eq.s32.totalorder %s16, 1
      %p118 = scmp.ne.s32.totalorder %s113, %s115
      %p119 = scmp.eq.s32.totalorder %s16, 0
      %p120 = por %p118, %p119
      %p121 = scmp.ne.s32.totalorder %s113, %s115
      %p122 = scmp.eq.s32.totalorder %s21, 1
      %p123 = por %p121, %p122
      %p124 = scmp.ne.s32.totalorder %s115, %s116
      %p125 = scmp.eq.s32.totalorder %s21, 0
      %p126 = por %p124, %p125
      %p127 = scmp.ne.s32.totalorder %s115, %s116
      %p128 = scmp.eq.s32.totalorder %s22, 1
      %p129 = por %p127, %p128
      %p131 = scmp.ne.s32.totalorder %s116, %s130
      %p132 = scmp.eq.s32.totalorder %s22, 0
      %p133 = por %p131, %p132
      %s135 = sadd.s32 %s134, 1
      %p138 = scmp.eq.s32.totalorder %s16, 1
      %p139 = scmp.ne.s32.totalorder %s134, %s136
      %p140 = scmp.eq.s32.totalorder %s16, 0
      %p141 = por %p139, %p140
      %p142 = scmp.ne.s32.totalorder %s134, %s136
      %p143 = scmp.eq.s32.totalorder %s21, 1
      %p144 = por %p142, %p143
      %p145 = scmp.ne.s32.totalorder %s136, %s137
      %p146 = scmp.eq.s32.totalorder %s21, 0
      %p147 = por %p145, %p146
      %p148 = scmp.ne.s32.totalorder %s136, %s137
      %p149 = scmp.eq.s32.totalorder %s22, 1
      %p150 = por %p148, %p149
      %p152 = scmp.ne.s32.totalorder %s137, %s151
      %p153 = scmp.eq.s32.totalorder %s22, 0
      %p154 = por %p152, %p153
      %s155 = ssub.s32 %s16, %s23
      %p156 = scmp.eq.s32.totalorder %s155, 0
      %s158 = sadd.s32 %s157, 1
      %s159 = scalar_select %p156, %s157, %s158
      %p162 = pneg %p156
      %p163 = scmp.eq.s32.totalorder %s16, 1
      %p164 = por %p162, %p163
      %p165 = scmp.ne.s32.totalorder %s157, %s160
      %p166 = scmp.eq.s32.totalorder %s16, 0
      %p167 = por %p165, %p166
      %p168 = scmp.ne.s32.totalorder %s157, %s160
      %p169 = scmp.eq.s32.totalorder %s21, 1
      %p170 = por %p168, %p169
      %p171 = scmp.ne.s32.totalorder %s160, %s161
      %p172 = scmp.eq.s32.totalorder %s21, 0
      %p173 = por %p171, %p172
      %p174 = scmp.ne.s32.totalorder %s160, %s161
      %p175 = scmp.eq.s32.totalorder %s22, 1
      %p176 = por %p174, %p175
      %p178 = scmp.ne.s32.totalorder %s161, %s177
      %p179 = scmp.eq.s32.totalorder %s22, 0
      %p180 = por %p178, %p179
      %s181 = ssub.s32 %s16, %s23
      %p182 = scmp.eq.s32.totalorder %s181, 0
      %s184 = sadd.s32 %s183, 1
      %s185 = scalar_select %p182, %s183, %s184
      %p188 = pneg %p182
      %p189 = scmp.eq.s32.totalorder %s16, 1
      %p190 = por %p188, %p189
      %p191 = scmp.ne.s32.totalorder %s183, %s186
      %p192 = scmp.eq.s32.totalorder %s16, 0
      %p193 = por %p191, %p192
      %p194 = scmp.ne.s32.totalorder %s183, %s186
      %p195 = scmp.eq.s32.totalorder %s21, 1
      %p196 = por %p194, %p195
      %p197 = scmp.ne.s32.totalorder %s186, %s187
      %p198 = scmp.eq.s32.totalorder %s21, 0
      %p199 = por %p197, %p198
      %p200 = scmp.ne.s32.totalorder %s186, %s187
      %p201 = scmp.eq.s32.totalorder %s22, 1
      %p202 = por %p200, %p201
      %p204 = scmp.ne.s32.totalorder %s187, %s203
      %p205 = scmp.eq.s32.totalorder %s22, 0
      %p206 = por %p204, %p205
      %p207 = scmp.le.s32.totalorder 1, %s16
      %p208 = scmp.lt.s32.totalorder %s16, 3
      %p209 = pnand %p207, %p208
      %p210 = pneg %p209
      // Predicated region
      $region9: #{tpu_custom_call.1} parent=5 // pred_check
        _
      $region10: #{tpu_custom_call.1} parent=5 // pred_check_branch
        %212 = sbr.rel (%p209) target = $region12
      $region11: #{tpu_custom_call.1} parent=5 // pred_region
        %s213 = ssub.s32 %s16, 1
        // Predicated region
        $region13: #{tpu_custom_call.1} parent=11 // pred_check
          %p214 = pneg %p37
        $region14: #{tpu_custom_call.1} parent=11 // pred_check_branch
          %216 = sbr.rel (%p214) target = $region16
        $region15: #{tpu_custom_call.1} parent=11 // pred_region
          _
        $region16: #{tpu_custom_call.1} parent=11 // pred_fallthru
          _
        // Predicated region
        $region17: #{tpu_custom_call.1} parent=11 // pred_check
          %p217 = pneg %p84
        $region18: #{tpu_custom_call.1} parent=11 // pred_check_branch
          %219 = sbr.rel (%p217) target = $region20
        $region19: #{tpu_custom_call.1} parent=11 // pred_region
          _
        $region20: #{tpu_custom_call.1} parent=11 // pred_fallthru
          _
        // Predicated region
        $region21: #{tpu_custom_call.1} parent=11 // pred_check
          %p220 = pneg %p105
        $region22: #{tpu_custom_call.1} parent=11 // pred_check_branch
          %222 = sbr.rel (%p220) target = $region24
        $region23: #{tpu_custom_call.1} parent=11 // pred_region
          _
        $region24: #{tpu_custom_call.1} parent=11 // pred_fallthru
          _
        // Predicated region
        $region25: #{tpu_custom_call.1} parent=11 // pred_check
          %p223 = pneg %p126
        $region26: #{tpu_custom_call.1} parent=11 // pred_check_branch
          %225 = sbr.rel (%p223) target = $region28
        $region27: #{tpu_custom_call.1} parent=11 // pred_region
          _
        $region28: #{tpu_custom_call.1} parent=11 // pred_fallthru
          _
        // Predicated region
        $region29: #{tpu_custom_call.1} parent=11 // pred_check
          %p226 = pneg %p147
        $region30: #{tpu_custom_call.1} parent=11 // pred_check_branch
          %228 = sbr.rel (%p226) target = $region32
        $region31: #{tpu_custom_call.1} parent=11 // pred_region
          _
        $region32: #{tpu_custom_call.1} parent=11 // pred_fallthru
          _
      $region12: #{tpu_custom_call.1} parent=5 // pred_fallthru
        _
      %p229 = scmp.lt.s32.totalorder %s16, 2
      // Predicated region
      $region33: #{tpu_custom_call.1} parent=5 // pred_check
        %p230 = pneg %p229
      $region34: #{tpu_custom_call.1} parent=5 // pred_check_branch
        %232 = sbr.rel (%p230) target = $region36
      $region35: #{tpu_custom_call.1} parent=5 // pred_region
        // Predicated region
        $region37: #{tpu_custom_call.1} parent=35 // pred_check
          %p233 = pneg %p57
        $region38: #{tpu_custom_call.1} parent=35 // pred_check_branch
          %235 = sbr.rel (%p233) target = $region40
        $region39: #{tpu_custom_call.1} parent=35 // pred_region
          %p236 = scmp.lt.s32.totalorder %s16, 1
          %s237 = scalar_select %p236, %s16, 1
          %s238 = smul.addr %s237, 2
          %s239 = smul.addr %s238, 8
          %s240 = scalar_lea.vmem %s1, %s239
        $region40: #{tpu_custom_call.1} parent=35 // pred_fallthru
          _
        // Predicated region
        $region41: #{tpu_custom_call.1} parent=35 // pred_check
          %p241 = pneg %p167
        $region42: #{tpu_custom_call.1} parent=35 // pred_check_branch
          %243 = sbr.rel (%p241) target = $region44
        $region43: #{tpu_custom_call.1} parent=35 // pred_region
          %p244 = scmp.lt.s32.totalorder %s16, 1
          %s245 = scalar_select %p244, %s16, 1
          %s246 = smul.addr %s245, 8
          %s247 = scalar_lea.vmem %s6, %s246
        $region44: #{tpu_custom_call.1} parent=35 // pred_fallthru
          _
      $region36: #{tpu_custom_call.1} parent=5 // pred_fallthru
        _
      %p248 = scmp.le.s32.totalorder 1, %s16
      %p249 = scmp.lt.s32.totalorder %s16, 3
      %p250 = pnand %p248, %p249
      %p251 = pneg %p250
      // Predicated region
      $region45: #{tpu_custom_call.1} parent=5 // pred_check
        _
      $region46: #{tpu_custom_call.1} parent=5 // pred_check_branch
        %253 = sbr.rel (%p250) target = $region48
      $region47: #{tpu_custom_call.1} parent=5 // pred_region
        %s254 = ssub.s32 %s16, 1
        %p255 = pneg %p37
        %p256 = pneg %p34
        %p257 = scmp.lt.s32.totalorder %s21, 1
        %s258 = scalar_select %p257, %s21, 1
        %s259 = smul.addr %s258, 2
        %s260 = smul.addr %s259, 8
        %s261 = scalar_lea.vmem %s1, %s260
        %p262 = pneg %p63
        %p263 = pneg %p60
        %p264 = pneg %p84
        %p265 = pneg %p81
        %p266 = pneg %p105
        %p267 = pneg %p102
        %p268 = pneg %p126
        %p269 = pneg %p123
        %p270 = pneg %p147
        %p271 = pneg %p144
        %p272 = scmp.lt.s32.totalorder %s21, 1
        %s273 = scalar_select %p272, %s21, 1
        %s274 = smul.addr %s273, 8
        %s275 = scalar_lea.vmem %s6, %s274
        %p276 = pneg %p173
        %p277 = pneg %p170
        %p278 = pneg %p199
        %p279 = pneg %p196
        %s280 = sand.u32 %s186, 1
        %s281 = scalar_lea.sflag [#allocation3], %s280
        %s282 = sand.u32 %s186, 1
        %s283 = smul.addr %s282, 8
        %s284 = scalar_lea.vmem [#allocation2], %s283
        %p285 = scmp.lt.s32.totalorder %s21, 1
        %s286 = scalar_select %p285, %s21, 1
        %s287 = smul.addr %s286, 2
        %s288 = smul.addr %s287, 8
        %s289 = scalar_lea.vmem %s1, %s288
        %p290 = scmp.lt.s32.totalorder %s21, 1
        %s291 = scalar_select %p290, %s21, 1
        %s292 = smul.addr %s291, 8
        %s293 = scalar_lea.vmem %s6, %s292
        %v294 = vld [vmem:[%s0] sm:$0x1]
        %v295 = vld [vmem:[%s289] sm:$0xff]
        %v296 = vld [vmem:[%s289 + $0x8] sm:$0xff]
        %v297 = vld [vmem:[%s2] sm:$0xff]
        %v298 = vld [vmem:[%s2 + $0x8] sm:$0xff]
        %v299 = vld [vmem:[%s2 + $0x10] sm:$0xff]
        %v300 = vld [vmem:[%s2 + $0x18] sm:$0xff]
        %v301 = vld [vmem:[%s2 + $0x20] sm:$0xff]
        %v302 = vld [vmem:[%s2 + $0x28] sm:$0xff]
        %v303 = vld [vmem:[%s2 + $0x30] sm:$0xff]
        %v304 = vld [vmem:[%s2 + $0x38] sm:$0xff]
        %v305 = vld [vmem:[%s3] sm:$0xff]
        %v306 = vld [vmem:[%s3 + $0x8] sm:$0xff]
        %v307 = vld [vmem:[%s3 + $0x10] sm:$0xff]
        %v308 = vld [vmem:[%s3 + $0x18] sm:$0xff]
        %v309 = vld [vmem:[%s3 + $0x20] sm:$0xff]
        %v310 = vld [vmem:[%s3 + $0x28] sm:$0xff]
        %v311 = vld [vmem:[%s3 + $0x30] sm:$0xff]
        %v312 = vld [vmem:[%s3 + $0x38] sm:$0xff]
        %314 = vset.pattern.permute.xlu0 0
        %315 = vperm.xlu0 %314, %v305
        %v316 = vpop.permute.xlu0 %315
        %319 = vset.pattern.permute.xlu0 0
        %320 = vperm.xlu0 %319, %v306
        %v321 = vpop.permute.xlu0 %320
        %324 = vset.pattern.permute.xlu0 0
        %325 = vperm.xlu0 %324, %v307
        %v326 = vpop.permute.xlu0 %325
        %329 = vset.pattern.permute.xlu0 0
        %330 = vperm.xlu0 %329, %v308
        %v331 = vpop.permute.xlu0 %330
        %334 = vset.pattern.permute.xlu0 0
        %335 = vperm.xlu0 %334, %v309
        %v336 = vpop.permute.xlu0 %335
        %339 = vset.pattern.permute.xlu0 0
        %340 = vperm.xlu0 %339, %v310
        %v341 = vpop.permute.xlu0 %340
        %344 = vset.pattern.permute.xlu0 0
        %345 = vperm.xlu0 %344, %v311
        %v346 = vpop.permute.xlu0 %345
        %349 = vset.pattern.permute.xlu0 0
        %350 = vperm.xlu0 %349, %v312
        %v351 = vpop.permute.xlu0 %350
        %vm353 = vcmask 130048
        %v355 = vsel %vm353, %v297, 0
        %v358 = vsel %vm353, %v298, 0
        %v361 = vsel %vm353, %v299, 0
        %v364 = vsel %vm353, %v300, 0
        %v367 = vsel %vm353, %v301, 0
        %v370 = vsel %vm353, %v302, 0
        %v373 = vsel %vm353, %v303, 0
        %v376 = vsel %vm353, %v304, 0
        %378 = vmatprep.subr.mxu0 0.0
        %379 = vmatpush1.msra.mxu0 %v295
        %380 = vmatprep.subr.mxu0 0.0
        %381 = vmatpush1.msra.mxu0 %v296
        %382 = vmatprep.subr.mxu0 0.0
        %383 = vmatpush1.msra.mxu0 0.0
        %384 = vmatprep.subr.mxu0 0.0
        %385 = vmatpush1.msra.mxu0 0.0
        %386 = vmatprep.subr.mxu0 0.0
        %387 = vmatpush1.msra.mxu0 0.0
        %388 = vmatprep.subr.mxu0 0.0
        %389 = vmatpush1.msra.mxu0 0.0
        %390 = vmatprep.subr.mxu0 0.0
        %391 = vmatpush1.msra.mxu0 0.0
        %392 = vmatprep.subr.mxu0 0.0
        %393 = vmatpush1.msra.mxu0 0.0
        %394 = vmatprep.subr.mxu0 0.0
        %395 = vmatpush1.msra.mxu0 0.0
        %396 = vmatprep.subr.mxu0 0.0
        %397 = vmatpush1.msra.mxu0 0.0
        %398 = vmatprep.subr.mxu0 0.0
        %399 = vmatpush1.msra.mxu0 0.0
        %400 = vmatprep.subr.mxu0 0.0
        %401 = vmatpush1.msra.mxu0 0.0
        %402 = vmatprep.subr.mxu0 0.0
        %403 = vmatpush1.msra.mxu0 0.0
        %404 = vmatprep.subr.mxu0 0.0
        %405 = vmatpush1.msra.mxu0 0.0
        %406 = vmatprep.subr.mxu0 0.0
        %407 = vmatpush1.msra.mxu0 0.0
        %408 = vmatprep.subr.mxu0 0.0
        %409 = vmatpush1.msra.mxu0 0.0
        %410 = vmatprep.subr.mxu0 0.0
        %411 = vmatpush1.msra.mxu0 0.0
        %412 = vmatprep.subr.mxu0 0.0
        %413 = vmatpush1.msra.mxu0 0.0
        %414 = vmatprep.subr.mxu0 0.0
        %415 = vmatpush1.msra.mxu0 0.0
        %416 = vmatprep.subr.mxu0 0.0
        %417 = vmatpush1.msra.mxu0 0.0
        %418 = vmatprep.subr.mxu0 0.0
        %419 = vmatpush1.msra.mxu0 0.0
        %420 = vmatprep.subr.mxu0 0.0
        %421 = vmatpush1.msra.mxu0 0.0
        %422 = vmatprep.subr.mxu0 0.0
        %423 = vmatpush1.msra.mxu0 0.0
        %424 = vmatprep.subr.mxu0 0.0
        %425 = vmatpush1.msra.mxu0 0.0
        %426 = vmatprep.subr.mxu0 0.0
        %427 = vmatpush1.msra.mxu0 0.0
        %428 = vmatprep.subr.mxu0 0.0
        %429 = vmatpush1.msra.mxu0 0.0
        %430 = vmatprep.subr.mxu0 0.0
        %431 = vmatpush1.msra.mxu0 0.0
        %432 = vmatprep.subr.mxu0 0.0
        %433 = vmatpush1.msra.mxu0 0.0
        %434 = vmatprep.subr.mxu0 0.0
        %435 = vmatpush1.msra.mxu0 0.0
        %436 = vmatprep.subr.mxu0 0.0
        %437 = vmatpush1.msra.mxu0 0.0
        %438 = vmatprep.subr.mxu0 0.0
        %439 = vmatpush1.msra.mxu0 0.0
        %440 = vmatprep.subr.mxu0 0.0
        %441 = vmatpush1.msra.mxu0 0.0
        %442 = vmatprep.mubr.f32.mxu0 0.0
        %443 = vmatmul.mubr.f32.gmra.mrb[0].mxu0 %v355
        %v444 = vpop.f32.mrb[0].mxu0
        %v445 = vadd.f32 %v316, %v444
        %v446 = vpop.f32.mrb[0].mxu0
        %447 = vmatprep.mubr.f32.mxu0 0.0
        %448 = vmatmul.mubr.f32.gmra.mrb[0].mxu0 %v358
        %v449 = vpop.f32.mrb[0].mxu0
        %v450 = vadd.f32 %v321, %v449
        %v451 = vpop.f32.mrb[0].mxu0
        %452 = vmatprep.mubr.f32.mxu0 0.0
        %453 = vmatmul.mubr.f32.gmra.mrb[0].mxu0 %v361
        %v454 = vpop.f32.mrb[0].mxu0
        %v455 = vadd.f32 %v326, %v454
        %v456 = vpop.f32.mrb[0].mxu0
        %457 = vmatprep.mubr.f32.mxu0 0.0
        %458 = vmatmul.mubr.f32.gmra.mrb[0].mxu0 %v364
        %v459 = vpop.f32.mrb[0].mxu0
        %v460 = vadd.f32 %v331, %v459
        %v461 = vpop.f32.mrb[0].mxu0
        %462 = vmatprep.mubr.f32.mxu0 0.0
        %463 = vmatmul.mubr.f32.gmra.mrb[0].mxu0 %v367
        %v464 = vpop.f32.mrb[0].mxu0
        %v465 = vadd.f32 %v336, %v464
        %v466 = vpop.f32.mrb[0].mxu0
        %467 = vmatprep.mubr.f32.mxu0 0.0
        %468 = vmatmul.mubr.f32.gmra.mrb[0].mxu0 %v370
        %v469 = vpop.f32.mrb[0].mxu0
        %v470 = vadd.f32 %v341, %v469
        %v471 = vpop.f32.mrb[0].mxu0
        %472 = vmatprep.mubr.f32.mxu0 0.0
        %473 = vmatmul.mubr.f32.gmra.mrb[0].mxu0 %v373
        %v474 = vpop.f32.mrb[0].mxu0
        %v475 = vadd.f32 %v346, %v474
        %v476 = vpop.f32.mrb[0].mxu0
        %477 = vmatprep.mubr.f32.mxu0 0.0
        %478 = vmatmul.mubr.f32.gmra.mrb[0].mxu0 %v376
        %v479 = vpop.f32.mrb[0].mxu0
        %v480 = vadd.f32 %v351, %v479
        %v481 = vpop.f32.mrb[0].mxu0
        %482 = vdwg.mxu0
        %v483 = vlaneseq
        %v484 = vshrl.u32 %v483, 7
        %v485 = vsub.s32 0, %v484
        %v486 = vrot.slane %v445, %v485
        %s488 = sor.u32 256, 7
        %489 = vbcast.lane.b32.xlu0 %v486, %s488
        %v490 = vpop.permute.xlu0 %489
        %v491 = vlaneseq
        %v492 = vshrl.u32 %v491, 7
        %v493 = vsub.s32 1, %v492
        %v494 = vrot.slane %v445, %v493
        %s496 = sor.u32 256, 7
        %497 = vbcast.lane.b32.xlu0 %v494, %s496
        %v498 = vpop.permute.xlu0 %497
        %v499 = vlaneseq
        %v500 = vshrl.u32 %v499, 7
        %v501 = vsub.s32 2, %v500
        %v502 = vrot.slane %v445, %v501
        %s504 = sor.u32 256, 7
        %505 = vbcast.lane.b32.xlu0 %v502, %s504
        %v506 = vpop.permute.xlu0 %505
        %v507 = vlaneseq
        %v508 = vshrl.u32 %v507, 7
        %v509 = vsub.s32 3, %v508
        %v510 = vrot.slane %v445, %v509
        %s512 = sor.u32 256, 7
        %513 = vbcast.lane.b32.xlu0 %v510, %s512
        %v514 = vpop.permute.xlu0 %513
        %v515 = vlaneseq
        %v516 = vshrl.u32 %v515, 7
        %v517 = vsub.s32 4, %v516
        %v518 = vrot.slane %v445, %v517
        %s520 = sor.u32 256, 7
        %521 = vbcast.lane.b32.xlu0 %v518, %s520
        %v522 = vpop.permute.xlu0 %521
        %v523 = vlaneseq
        %v524 = vshrl.u32 %v523, 7
        %v525 = vsub.s32 5, %v524
        %v526 = vrot.slane %v445, %v525
        %s528 = sor.u32 256, 7
        %529 = vbcast.lane.b32.xlu0 %v526, %s528
        %v530 = vpop.permute.xlu0 %529
        %v531 = vlaneseq
        %v532 = vshrl.u32 %v531, 7
        %v533 = vsub.s32 6, %v532
        %v534 = vrot.slane %v445, %v533
        %s536 = sor.u32 256, 7
        %537 = vbcast.lane.b32.xlu0 %v534, %s536
        %v538 = vpop.permute.xlu0 %537
        %v539 = vlaneseq
        %v540 = vshrl.u32 %v539, 7
        %v541 = vsub.s32 7, %v540
        %v542 = vrot.slane %v445, %v541
        %s544 = sor.u32 256, 7
        %545 = vbcast.lane.b32.xlu0 %v542, %s544
        %v546 = vpop.permute.xlu0 %545
        %v547 = vlaneseq
        %v548 = vshrl.u32 %v547, 7
        %v549 = vsub.s32 0, %v548
        %v550 = vrot.slane %v450, %v549
        %s552 = sor.u32 256, 7
        %553 = vbcast.lane.b32.xlu0 %v550, %s552
        %v554 = vpop.permute.xlu0 %553
        %v555 = vlaneseq
        %v556 = vshrl.u32 %v555, 7
        %v557 = vsub.s32 1, %v556
        %v558 = vrot.slane %v450, %v557
        %s560 = sor.u32 256, 7
        %561 = vbcast.lane.b32.xlu0 %v558, %s560
        %v562 = vpop.permute.xlu0 %561
        %v563 = vlaneseq
        %v564 = vshrl.u32 %v563, 7
        %v565 = vsub.s32 2, %v564
        %v566 = vrot.slane %v450, %v565
        %s568 = sor.u32 256, 7
        %569 = vbcast.lane.b32.xlu0 %v566, %s568
        %v570 = vpop.permute.xlu0 %569
        %v571 = vlaneseq
        %v572 = vshrl.u32 %v571, 7
        %v573 = vsub.s32 3, %v572
        %v574 = vrot.slane %v450, %v573
        %s576 = sor.u32 256, 7
        %577 = vbcast.lane.b32.xlu0 %v574, %s576
        %v578 = vpop.permute.xlu0 %577
        %v579 = vlaneseq
        %v580 = vshrl.u32 %v579, 7
        %v581 = vsub.s32 4, %v580
        %v582 = vrot.slane %v450, %v581
        %s584 = sor.u32 256, 7
        %585 = vbcast.lane.b32.xlu0 %v582, %s584
        %v586 = vpop.permute.xlu0 %585
        %v587 = vlaneseq
        %v588 = vshrl.u32 %v587, 7
        %v589 = vsub.s32 5, %v588
        %v590 = vrot.slane %v450, %v589
        %s592 = sor.u32 256, 7
        %593 = vbcast.lane.b32.xlu0 %v590, %s592
        %v594 = vpop.permute.xlu0 %593
        %v595 = vlaneseq
        %v596 = vshrl.u32 %v595, 7
        %v597 = vsub.s32 6, %v596
        %v598 = vrot.slane %v450, %v597
        %s600 = sor.u32 256, 7
        %601 = vbcast.lane.b32.xlu0 %v598, %s600
        %v602 = vpop.permute.xlu0 %601
        %v603 = vlaneseq
        %v604 = vshrl.u32 %v603, 7
        %v605 = vsub.s32 7, %v604
        %v606 = vrot.slane %v450, %v605
        %s608 = sor.u32 256, 7
        %609 = vbcast.lane.b32.xlu0 %v606, %s608
        %v610 = vpop.permute.xlu0 %609
        %v611 = vlaneseq
        %v612 = vshrl.u32 %v611, 7
        %v613 = vsub.s32 0, %v612
        %v614 = vrot.slane %v455, %v613
        %s616 = sor.u32 256, 7
        %617 = vbcast.lane.b32.xlu0 %v614, %s616
        %v618 = vpop.permute.xlu0 %617
        %v619 = vlaneseq
        %v620 = vshrl.u32 %v619, 7
        %v621 = vsub.s32 1, %v620
        %v622 = vrot.slane %v455, %v621
        %s624 = sor.u32 256, 7
        %625 = vbcast.lane.b32.xlu0 %v622, %s624
        %v626 = vpop.permute.xlu0 %625
        %v627 = vlaneseq
        %v628 = vshrl.u32 %v627, 7
        %v629 = vsub.s32 2, %v628
        %v630 = vrot.slane %v455, %v629
        %s632 = sor.u32 256, 7
        %633 = vbcast.lane.b32.xlu0 %v630, %s632
        %v634 = vpop.permute.xlu0 %633
        %v635 = vlaneseq
        %v636 = vshrl.u32 %v635, 7
        %v637 = vsub.s32 3, %v636
        %v638 = vrot.slane %v455, %v637
        %s640 = sor.u32 256, 7
        %641 = vbcast.lane.b32.xlu0 %v638, %s640
        %v642 = vpop.permute.xlu0 %641
        %v643 = vlaneseq
        %v644 = vshrl.u32 %v643, 7
        %v645 = vsub.s32 4, %v644
        %v646 = vrot.slane %v455, %v645
        %s648 = sor.u32 256, 7
        %649 = vbcast.lane.b32.xlu0 %v646, %s648
        %v650 = vpop.permute.xlu0 %649
        %v651 = vlaneseq
        %v652 = vshrl.u32 %v651, 7
        %v653 = vsub.s32 5, %v652
        %v654 = vrot.slane %v455, %v653
        %s656 = sor.u32 256, 7
        %657 = vbcast.lane.b32.xlu0 %v654, %s656
        %v658 = vpop.permute.xlu0 %657
        %v659 = vlaneseq
        %v660 = vshrl.u32 %v659, 7
        %v661 = vsub.s32 6, %v660
        %v662 = vrot.slane %v455, %v661
        %s664 = sor.u32 256, 7
        %665 = vbcast.lane.b32.xlu0 %v662, %s664
        %v666 = vpop.permute.xlu0 %665
        %v667 = vlaneseq
        %v668 = vshrl.u32 %v667, 7
        %v669 = vsub.s32 7, %v668
        %v670 = vrot.slane %v455, %v669
        %s672 = sor.u32 256, 7
        %673 = vbcast.lane.b32.xlu0 %v670, %s672
        %v674 = vpop.permute.xlu0 %673
        %v675 = vlaneseq
        %v676 = vshrl.u32 %v675, 7
        %v677 = vsub.s32 0, %v676
        %v678 = vrot.slane %v460, %v677
        %s680 = sor.u32 256, 7
        %681 = vbcast.lane.b32.xlu0 %v678, %s680
        %v682 = vpop.permute.xlu0 %681
        %v683 = vlaneseq
        %v684 = vshrl.u32 %v683, 7
        %v685 = vsub.s32 1, %v684
        %v686 = vrot.slane %v460, %v685
        %s688 = sor.u32 256, 7
        %689 = vbcast.lane.b32.xlu0 %v686, %s688
        %v690 = vpop.permute.xlu0 %689
        %v691 = vlaneseq
        %v692 = vshrl.u32 %v691, 7
        %v693 = vsub.s32 2, %v692
        %v694 = vrot.slane %v460, %v693
        %s696 = sor.u32 256, 7
        %697 = vbcast.lane.b32.xlu0 %v694, %s696
        %v698 = vpop.permute.xlu0 %697
        %v699 = vlaneseq
        %v700 = vshrl.u32 %v699, 7
        %v701 = vsub.s32 3, %v700
        %v702 = vrot.slane %v460, %v701
        %s704 = sor.u32 256, 7
        %705 = vbcast.lane.b32.xlu0 %v702, %s704
        %v706 = vpop.permute.xlu0 %705
        %v707 = vlaneseq
        %v708 = vshrl.u32 %v707, 7
        %v709 = vsub.s32 4, %v708
        %v710 = vrot.slane %v460, %v709
        %s712 = sor.u32 256, 7
        %713 = vbcast.lane.b32.xlu0 %v710, %s712
        %v714 = vpop.permute.xlu0 %713
        %v715 = vlaneseq
        %v716 = vshrl.u32 %v715, 7
        %v717 = vsub.s32 5, %v716
        %v718 = vrot.slane %v460, %v717
        %s720 = sor.u32 256, 7
        %721 = vbcast.lane.b32.xlu0 %v718, %s720
        %v722 = vpop.permute.xlu0 %721
        %v723 = vlaneseq
        %v724 = vshrl.u32 %v723, 7
        %v725 = vsub.s32 6, %v724
        %v726 = vrot.slane %v460, %v725
        %s728 = sor.u32 256, 7
        %729 = vbcast.lane.b32.xlu0 %v726, %s728
        %v730 = vpop.permute.xlu0 %729
        %v731 = vlaneseq
        %v732 = vshrl.u32 %v731, 7
        %v733 = vsub.s32 7, %v732
        %v734 = vrot.slane %v460, %v733
        %s736 = sor.u32 256, 7
        %737 = vbcast.lane.b32.xlu0 %v734, %s736
        %v738 = vpop.permute.xlu0 %737
        %vm739 = vcmask 7168
        %v740 = vsel %vm739, %v490, %v618
        %v741 = vsel %vm739, %v498, %v626
        %v742 = vsel %vm739, %v506, %v634
        %v743 = vsel %vm739, %v514, %v642
        %v744 = vsel %vm739, %v522, %v650
        %v745 = vsel %vm739, %v530, %v658
        %v746 = vsel %vm739, %v538, %v666
        %v747 = vsel %vm739, %v546, %v674
        %v748 = vsel %vm739, %v554, %v682
        %v749 = vsel %vm739, %v562, %v690
        %v750 = vsel %vm739, %v570, %v698
        %v751 = vsel %vm739, %v578, %v706
        %v752 = vsel %vm739, %v586, %v714
        %v753 = vsel %vm739, %v594, %v722
        %v754 = vsel %vm739, %v602, %v730
        %v755 = vsel %vm739, %v610, %v738
        %v756 = vcombine.low %v740, %v742
        %v758 = vunpack.c.l.s4 1983009808
        %v759 = vunpack.c.0.s8 %v758
        %v760 = vlaneseq
        %v761 = vshrl.u32 %v760, 7
        %v762 = vsub.s32 %v759, %v761
        %v763 = vrot.slane %v756, %v762
        %v764 = vcombine.low %v741, %v743
        %v766 = vunpack.c.l.s4 1983009808
        %v767 = vunpack.c.0.s8 %v766
        %v768 = vlaneseq
        %v769 = vshrl.u32 %v768, 7
        %v770 = vsub.s32 %v767, %v769
        %v771 = vrot.slane %v764, %v770
        %v772 = vcombine.low %v744, %v746
        %v774 = vunpack.c.l.s4 1983009808
        %v775 = vunpack.c.0.s8 %v774
        %v776 = vlaneseq
        %v777 = vshrl.u32 %v776, 7
        %v778 = vsub.s32 %v775, %v777
        %v779 = vrot.slane %v772, %v778
        %v780 = vcombine.low %v745, %v747
        %v782 = vunpack.c.l.s4 1983009808
        %v783 = vunpack.c.0.s8 %v782
        %v784 = vlaneseq
        %v785 = vshrl.u32 %v784, 7
        %v786 = vsub.s32 %v783, %v785
        %v787 = vrot.slane %v780, %v786
        %v788 = vcombine.low %v763, %v771
        %v789 = vcombine.high %v763, %v771
        %v791 = vunpack.c.l.s4 1934713408
        %v792 = vunpack.c.0.s8 %v791
        %v793 = vlaneseq
        %v794 = vshrl.u32 %v793, 7
        %v795 = vsub.s32 %v792, %v794
        %v796 = vrot.slane %v788, %v795
        %v798 = vunpack.c.l.s4 1934713408
        %v799 = vunpack.c.0.s8 %v798
        %v800 = vlaneseq
        %v801 = vshrl.u32 %v800, 7
        %v802 = vsub.s32 %v799, %v801
        %v803 = vrot.slane %v789, %v802
        %v804 = vcombine.low %v779, %v787
        %v805 = vcombine.high %v779, %v787
        %v807 = vunpack.c.l.s4 1934713408
        %v808 = vunpack.c.0.s8 %v807
        %v809 = vlaneseq
        %v810 = vshrl.u32 %v809, 7
        %v811 = vsub.s32 %v808, %v810
        %v812 = vrot.slane %v804, %v811
        %v814 = vunpack.c.l.s4 1934713408
        %v815 = vunpack.c.0.s8 %v814
        %v816 = vlaneseq
        %v817 = vshrl.u32 %v816, 7
        %v818 = vsub.s32 %v815, %v817
        %v819 = vrot.slane %v805, %v818
        %v820 = vcombine.low %v796, %v812
        %v821 = vcombine.high %v796, %v812
        %v822 = vcombine.low %v803, %v819
        %v823 = vcombine.high %v803, %v819
        %v824 = vcombine.low %v748, %v750
        %v826 = vunpack.c.l.s4 1983009808
        %v827 = vunpack.c.0.s8 %v826
        %v828 = vlaneseq
        %v829 = vshrl.u32 %v828, 7
        %v830 = vsub.s32 %v827, %v829
        %v831 = vrot.slane %v824, %v830
        %v832 = vcombine.low %v749, %v751
        %v834 = vunpack.c.l.s4 1983009808
        %v835 = vunpack.c.0.s8 %v834
        %v836 = vlaneseq
        %v837 = vshrl.u32 %v836, 7
        %v838 = vsub.s32 %v835, %v837
        %v839 = vrot.slane %v832, %v838
        %v840 = vcombine.low %v752, %v754
        %v842 = vunpack.c.l.s4 1983009808
        %v843 = vunpack.c.0.s8 %v842
        %v844 = vlaneseq
        %v845 = vshrl.u32 %v844, 7
        %v846 = vsub.s32 %v843, %v845
        %v847 = vrot.slane %v840, %v846
        %v848 = vcombine.low %v753, %v755
        %v850 = vunpack.c.l.s4 1983009808
        %v851 = vunpack.c.0.s8 %v850
        %v852 = vlaneseq
        %v853 = vshrl.u32 %v852, 7
        %v854 = vsub.s32 %v851, %v853
        %v855 = vrot.slane %v848, %v854
        %v856 = vcombine.low %v831, %v839
        %v857 = vcombine.high %v831, %v839
        %v859 = vunpack.c.l.s4 1934713408
        %v860 = vunpack.c.0.s8 %v859
        %v861 = vlaneseq
        %v862 = vshrl.u32 %v861, 7
        %v863 = vsub.s32 %v860, %v862
        %v864 = vrot.slane %v856, %v863
        %v866 = vunpack.c.l.s4 1934713408
        %v867 = vunpack.c.0.s8 %v866
        %v868 = vlaneseq
        %v869 = vshrl.u32 %v868, 7
        %v870 = vsub.s32 %v867, %v869
        %v871 = vrot.slane %v857, %v870
        %v872 = vcombine.low %v847, %v855
        %v873 = vcombine.high %v847, %v855
        %v875 = vunpack.c.l.s4 1934713408
        %v876 = vunpack.c.0.s8 %v875
        %v877 = vlaneseq
        %v878 = vshrl.u32 %v877, 7
        %v879 = vsub.s32 %v876, %v878
        %v880 = vrot.slane %v872, %v879
        %v882 = vunpack.c.l.s4 1934713408
        %v883 = vunpack.c.0.s8 %v882
        %v884 = vlaneseq
        %v885 = vshrl.u32 %v884, 7
        %v886 = vsub.s32 %v883, %v885
        %v887 = vrot.slane %v873, %v886
        %v888 = vcombine.low %v864, %v880
        %v889 = vcombine.high %v864, %v880
        %v890 = vcombine.low %v871, %v887
        %v891 = vcombine.high %v871, %v887
        %894 = vrot.lane.b32.xlu0 %v821, 2
        %v895 = vpop.permute.xlu0 %894
        %896 = vrot.lane.b32.xlu0 %v889, 2
        %v897 = vpop.permute.xlu0 %896
        %902 = vrot.lane.b32.xlu0 %v822, 4
        %v903 = vpop.permute.xlu0 %902
        %904 = vrot.lane.b32.xlu0 %v890, 4
        %v905 = vpop.permute.xlu0 %904
        %910 = vrot.lane.b32.xlu0 %v823, 6
        %v911 = vpop.permute.xlu0 %910
        %912 = vrot.lane.b32.xlu0 %v891, 6
        %v913 = vpop.permute.xlu0 %912
        %vm916 = vcmask 15360
        %v917 = vsel %vm916, %v820, %v895
        %v918 = vsel %vm916, %v888, %v897
        %vm919 = vcmask 31744
        %v920 = vsel %vm919, %v917, %v903
        %v921 = vsel %vm919, %v918, %v905
        %vm922 = vcmask 48128
        %v923 = vsel %vm922, %v920, %v911
        %v924 = vsel %vm922, %v921, %v913
        %v925 = vlaneseq
        %v926 = vshrl.u32 %v925, 7
        %v927 = vsub.s32 0, %v926
        %v928 = vrot.slane %v465, %v927
        %s930 = sor.u32 256, 7
        %931 = vbcast.lane.b32.xlu0 %v928, %s930
        %v932 = vpop.permute.xlu0 %931
        %v933 = vlaneseq
        %v934 = vshrl.u32 %v933, 7
        %v935 = vsub.s32 1, %v934
        %v936 = vrot.slane %v465, %v935
        %s938 = sor.u32 256, 7
        %939 = vbcast.lane.b32.xlu0 %v936, %s938
        %v940 = vpop.permute.xlu0 %939
        %v941 = vlaneseq
        %v942 = vshrl.u32 %v941, 7
        %v943 = vsub.s32 2, %v942
        %v944 = vrot.slane %v465, %v943
        %s946 = sor.u32 256, 7
        %947 = vbcast.lane.b32.xlu0 %v944, %s946
        %v948 = vpop.permute.xlu0 %947
        %v949 = vlaneseq
        %v950 = vshrl.u32 %v949, 7
        %v951 = vsub.s32 3, %v950
        %v952 = vrot.slane %v465, %v951
        %s954 = sor.u32 256, 7
        %955 = vbcast.lane.b32.xlu0 %v952, %s954
        %v956 = vpop.permute.xlu0 %955
        %v957 = vlaneseq
        %v958 = vshrl.u32 %v957, 7
        %v959 = vsub.s32 4, %v958
        %v960 = vrot.slane %v465, %v959
        %s962 = sor.u32 256, 7
        %963 = vbcast.lane.b32.xlu0 %v960, %s962
        %v964 = vpop.permute.xlu0 %963
        %v965 = vlaneseq
        %v966 = vshrl.u32 %v965, 7
        %v967 = vsub.s32 5, %v966
        %v968 = vrot.slane %v465, %v967
        %s970 = sor.u32 256, 7
        %971 = vbcast.lane.b32.xlu0 %v968, %s970
        %v972 = vpop.permute.xlu0 %971
        %v973 = vlaneseq
        %v974 = vshrl.u32 %v973, 7
        %v975 = vsub.s32 6, %v974
        %v976 = vrot.slane %v465, %v975
        %s978 = sor.u32 256, 7
        %979 = vbcast.lane.b32.xlu0 %v976, %s978
        %v980 = vpop.permute.xlu0 %979
        %v981 = vlaneseq
        %v982 = vshrl.u32 %v981, 7
        %v983 = vsub.s32 7, %v982
        %v984 = vrot.slane %v465, %v983
        %s986 = sor.u32 256, 7
        %987 = vbcast.lane.b32.xlu0 %v984, %s986
        %v988 = vpop.permute.xlu0 %987
        %v989 = vlaneseq
        %v990 = vshrl.u32 %v989, 7
        %v991 = vsub.s32 0, %v990
        %v992 = vrot.slane %v470, %v991
        %s994 = sor.u32 256, 7
        %995 = vbcast.lane.b32.xlu0 %v992, %s994
        %v996 = vpop.permute.xlu0 %995
        %v997 = vlaneseq
        %v998 = vshrl.u32 %v997, 7
        %v999 = vsub.s32 1, %v998
        %v1000 = vrot.slane %v470, %v999
        %s1002 = sor.u32 256, 7
        %1003 = vbcast.lane.b32.xlu0 %v1000, %s1002
        %v1004 = vpop.permute.xlu0 %1003
        %v1005 = vlaneseq
        %v1006 = vshrl.u32 %v1005, 7
        %v1007 = vsub.s32 2, %v1006
        %v1008 = vrot.slane %v470, %v1007
        %s1010 = sor.u32 256, 7
        %1011 = vbcast.lane.b32.xlu0 %v1008, %s1010
        %v1012 = vpop.permute.xlu0 %1011
        %v1013 = vlaneseq
        %v1014 = vshrl.u32 %v1013, 7
        %v1015 = vsub.s32 3, %v1014
        %v1016 = vrot.slane %v470, %v1015
        %s1018 = sor.u32 256, 7
        %1019 = vbcast.lane.b32.xlu0 %v1016, %s1018
        %v1020 = vpop.permute.xlu0 %1019
        %v1021 = vlaneseq
        %v1022 = vshrl.u32 %v1021, 7
        %v1023 = vsub.s32 4, %v1022
        %v1024 = vrot.slane %v470, %v1023
        %s1026 = sor.u32 256, 7
        %1027 = vbcast.lane.b32.xlu0 %v1024, %s1026
        %v1028 = vpop.permute.xlu0 %1027
        %v1029 = vlaneseq
        %v1030 = vshrl.u32 %v1029, 7
        %v1031 = vsub.s32 5, %v1030
        %v1032 = vrot.slane %v470, %v1031
        %s1034 = sor.u32 256, 7
        %1035 = vbcast.lane.b32.xlu0 %v1032, %s1034
        %v1036 = vpop.permute.xlu0 %1035
        %v1037 = vlaneseq
        %v1038 = vshrl.u32 %v1037, 7
        %v1039 = vsub.s32 6, %v1038
        %v1040 = vrot.slane %v470, %v1039
        %s1042 = sor.u32 256, 7
        %1043 = vbcast.lane.b32.xlu0 %v1040, %s1042
        %v1044 = vpop.permute.xlu0 %1043
        %v1045 = vlaneseq
        %v1046 = vshrl.u32 %v1045, 7
        %v1047 = vsub.s32 7, %v1046
        %v1048 = vrot.slane %v470, %v1047
        %s1050 = sor.u32 256, 7
        %1051 = vbcast.lane.b32.xlu0 %v1048, %s1050
        %v1052 = vpop.permute.xlu0 %1051
        %v1053 = vlaneseq
        %v1054 = vshrl.u32 %v1053, 7
        %v1055 = vsub.s32 0, %v1054
        %v1056 = vrot.slane %v475, %v1055
        %s1058 = sor.u32 256, 7
        %1059 = vbcast.lane.b32.xlu0 %v1056, %s1058
        %v1060 = vpop.permute.xlu0 %1059
        %v1061 = vlaneseq
        %v1062 = vshrl.u32 %v1061, 7
        %v1063 = vsub.s32 1, %v1062
        %v1064 = vrot.slane %v475, %v1063
        %s1066 = sor.u32 256, 7
        %1067 = vbcast.lane.b32.xlu0 %v1064, %s1066
        %v1068 = vpop.permute.xlu0 %1067
        %v1069 = vlaneseq
        %v1070 = vshrl.u32 %v1069, 7
        %v1071 = vsub.s32 2, %v1070
        %v1072 = vrot.slane %v475, %v1071
        %s1074 = sor.u32 256, 7
        %1075 = vbcast.lane.b32.xlu0 %v1072, %s1074
        %v1076 = vpop.permute.xlu0 %1075
        %v1077 = vlaneseq
        %v1078 = vshrl.u32 %v1077, 7
        %v1079 = vsub.s32 3, %v1078
        %v1080 = vrot.slane %v475, %v1079
        %s1082 = sor.u32 256, 7
        %1083 = vbcast.lane.b32.xlu0 %v1080, %s1082
        %v1084 = vpop.permute.xlu0 %1083
        %v1085 = vlaneseq
        %v1086 = vshrl.u32 %v1085, 7
        %v1087 = vsub.s32 4, %v1086
        %v1088 = vrot.slane %v475, %v1087
        %s1090 = sor.u32 256, 7
        %1091 = vbcast.lane.b32.xlu0 %v1088, %s1090
        %v1092 = vpop.permute.xlu0 %1091
        %v1093 = vlaneseq
        %v1094 = vshrl.u32 %v1093, 7
        %v1095 = vsub.s32 5, %v1094
        %v1096 = vrot.slane %v475, %v1095
        %s1098 = sor.u32 256, 7
        %1099 = vbcast.lane.b32.xlu0 %v1096, %s1098
        %v1100 = vpop.permute.xlu0 %1099
        %v1101 = vlaneseq
        %v1102 = vshrl.u32 %v1101, 7
        %v1103 = vsub.s32 6, %v1102
        %v1104 = vrot.slane %v475, %v1103
        %s1106 = sor.u32 256, 7
        %1107 = vbcast.lane.b32.xlu0 %v1104, %s1106
        %v1108 = vpop.permute.xlu0 %1107
        %v1109 = vlaneseq
        %v1110 = vshrl.u32 %v1109, 7
        %v1111 = vsub.s32 7, %v1110
        %v1112 = vrot.slane %v475, %v1111
        %s1114 = sor.u32 256, 7
        %1115 = vbcast.lane.b32.xlu0 %v1112, %s1114
        %v1116 = vpop.permute.xlu0 %1115
        %v1117 = vlaneseq
        %v1118 = vshrl.u32 %v1117, 7
        %v1119 = vsub.s32 0, %v1118
        %v1120 = vrot.slane %v480, %v1119
        %s1122 = sor.u32 256, 7
        %1123 = vbcast.lane.b32.xlu0 %v1120, %s1122
        %v1124 = vpop.permute.xlu0 %1123
        %v1125 = vlaneseq
        %v1126 = vshrl.u32 %v1125, 7
        %v1127 = vsub.s32 1, %v1126
        %v1128 = vrot.slane %v480, %v1127
        %s1130 = sor.u32 256, 7
        %1131 = vbcast.lane.b32.xlu0 %v1128, %s1130
        %v1132 = vpop.permute.xlu0 %1131
        %v1133 = vlaneseq
        %v1134 = vshrl.u32 %v1133, 7
        %v1135 = vsub.s32 2, %v1134
        %v1136 = vrot.slane %v480, %v1135
        %s1138 = sor.u32 256, 7
        %1139 = vbcast.lane.b32.xlu0 %v1136, %s1138
        %v1140 = vpop.permute.xlu0 %1139
        %v1141 = vlaneseq
        %v1142 = vshrl.u32 %v1141, 7
        %v1143 = vsub.s32 3, %v1142
        %v1144 = vrot.slane %v480, %v1143
        %s1146 = sor.u32 256, 7
        %1147 = vbcast.lane.b32.xlu0 %v1144, %s1146
        %v1148 = vpop.permute.xlu0 %1147
        %v1149 = vlaneseq
        %v1150 = vshrl.u32 %v1149, 7
        %v1151 = vsub.s32 4, %v1150
        %v1152 = vrot.slane %v480, %v1151
        %s1154 = sor.u32 256, 7
        %1155 = vbcast.lane.b32.xlu0 %v1152, %s1154
        %v1156 = vpop.permute.xlu0 %1155
        %v1157 = vlaneseq
        %v1158 = vshrl.u32 %v1157, 7
        %v1159 = vsub.s32 5, %v1158
        %v1160 = vrot.slane %v480, %v1159
        %s1162 = sor.u32 256, 7
        %1163 = vbcast.lane.b32.xlu0 %v1160, %s1162
        %v1164 = vpop.permute.xlu0 %1163
        %v1165 = vlaneseq
        %v1166 = vshrl.u32 %v1165, 7
        %v1167 = vsub.s32 6, %v1166
        %v1168 = vrot.slane %v480, %v1167
        %s1170 = sor.u32 256, 7
        %1171 = vbcast.lane.b32.xlu0 %v1168, %s1170
        %v1172 = vpop.permute.xlu0 %1171
        %v1173 = vlaneseq
        %v1174 = vshrl.u32 %v1173, 7
        %v1175 = vsub.s32 7, %v1174
        %v1176 = vrot.slane %v480, %v1175
        %s1178 = sor.u32 256, 7
        %1179 = vbcast.lane.b32.xlu0 %v1176, %s1178
        %v1180 = vpop.permute.xlu0 %1179
        %v1181 = vsel %vm739, %v932, %v1060
        %v1182 = vsel %vm739, %v940, %v1068
        %v1183 = vsel %vm739, %v948, %v1076
        %v1184 = vsel %vm739, %v956, %v1084
        %v1185 = vsel %vm739, %v964, %v1092
        %v1186 = vsel %vm739, %v972, %v1100
        %v1187 = vsel %vm739, %v980, %v1108
        %v1188 = vsel %vm739, %v988, %v1116
        %v1189 = vsel %vm739, %v996, %v1124
        %v1190 = vsel %vm739, %v1004, %v1132
        %v1191 = vsel %vm739, %v1012, %v1140
        %v1192 = vsel %vm739, %v1020, %v1148
        %v1193 = vsel %vm739, %v1028, %v1156
        %v1194 = vsel %vm739, %v1036, %v1164
        %v1195 = vsel %vm739, %v1044, %v1172
        %v1196 = vsel %vm739, %v1052, %v1180
        %v1197 = vcombine.low %v1181, %v1183
        %v1199 = vunpack.c.l.s4 1983009808
        %v1200 = vunpack.c.0.s8 %v1199
        %v1201 = vlaneseq
        %v1202 = vshrl.u32 %v1201, 7
        %v1203 = vsub.s32 %v1200, %v1202
        %v1204 = vrot.slane %v1197, %v1203
        %v1205 = vcombine.low %v1182, %v1184
        %v1207 = vunpack.c.l.s4 1983009808
        %v1208 = vunpack.c.0.s8 %v1207
        %v1209 = vlaneseq
        %v1210 = vshrl.u32 %v1209, 7
        %v1211 = vsub.s32 %v1208, %v1210
        %v1212 = vrot.slane %v1205, %v1211
        %v1213 = vcombine.low %v1185, %v1187
        %v1215 = vunpack.c.l.s4 1983009808
        %v1216 = vunpack.c.0.s8 %v1215
        %v1217 = vlaneseq
        %v1218 = vshrl.u32 %v1217, 7
        %v1219 = vsub.s32 %v1216, %v1218
        %v1220 = vrot.slane %v1213, %v1219
        %v1221 = vcombine.low %v1186, %v1188
        %v1223 = vunpack.c.l.s4 1983009808
        %v1224 = vunpack.c.0.s8 %v1223
        %v1225 = vlaneseq
        %v1226 = vshrl.u32 %v1225, 7
        %v1227 = vsub.s32 %v1224, %v1226
        %v1228 = vrot.slane %v1221, %v1227
        %v1229 = vcombine.low %v1204, %v1212
        %v1230 = vcombine.high %v1204, %v1212
        %v1232 = vunpack.c.l.s4 1934713408
        %v1233 = vunpack.c.0.s8 %v1232
        %v1234 = vlaneseq
        %v1235 = vshrl.u32 %v1234, 7
        %v1236 = vsub.s32 %v1233, %v1235
        %v1237 = vrot.slane %v1229, %v1236
        %v1239 = vunpack.c.l.s4 1934713408
        %v1240 = vunpack.c.0.s8 %v1239
        %v1241 = vlaneseq
        %v1242 = vshrl.u32 %v1241, 7
        %v1243 = vsub.s32 %v1240, %v1242
        %v1244 = vrot.slane %v1230, %v1243
        %v1245 = vcombine.low %v1220, %v1228
        %v1246 = vcombine.high %v1220, %v1228
        %v1248 = vunpack.c.l.s4 1934713408
        %v1249 = vunpack.c.0.s8 %v1248
        %v1250 = vlaneseq
        %v1251 = vshrl.u32 %v1250, 7
        %v1252 = vsub.s32 %v1249, %v1251
        %v1253 = vrot.slane %v1245, %v1252
        %v1255 = vunpack.c.l.s4 1934713408
        %v1256 = vunpack.c.0.s8 %v1255
        %v1257 = vlaneseq
        %v1258 = vshrl.u32 %v1257, 7
        %v1259 = vsub.s32 %v1256, %v1258
        %v1260 = vrot.slane %v1246, %v1259
        %v1261 = vcombine.low %v1237, %v1253
        %v1262 = vcombine.high %v1237, %v1253
        %v1263 = vcombine.low %v1244, %v1260
        %v1264 = vcombine.high %v1244, %v1260
        %v1265 = vcombine.low %v1189, %v1191
        %v1267 = vunpack.c.l.s4 1983009808
        %v1268 = vunpack.c.0.s8 %v1267
        %v1269 = vlaneseq
        %v1270 = vshrl.u32 %v1269, 7
        %v1271 = vsub.s32 %v1268, %v1270
        %v1272 = vrot.slane %v1265, %v1271
        %v1273 = vcombine.low %v1190, %v1192
        %v1275 = vunpack.c.l.s4 1983009808
        %v1276 = vunpack.c.0.s8 %v1275
        %v1277 = vlaneseq
        %v1278 = vshrl.u32 %v1277, 7
        %v1279 = vsub.s32 %v1276, %v1278
        %v1280 = vrot.slane %v1273, %v1279
        %v1281 = vcombine.low %v1193, %v1195
        %v1283 = vunpack.c.l.s4 1983009808
        %v1284 = vunpack.c.0.s8 %v1283
        %v1285 = vlaneseq
        %v1286 = vshrl.u32 %v1285, 7
        %v1287 = vsub.s32 %v1284, %v1286
        %v1288 = vrot.slane %v1281, %v1287
        %v1289 = vcombine.low %v1194, %v1196
        %v1291 = vunpack.c.l.s4 1983009808
        %v1292 = vunpack.c.0.s8 %v1291
        %v1293 = vlaneseq
        %v1294 = vshrl.u32 %v1293, 7
        %v1295 = vsub.s32 %v1292, %v1294
        %v1296 = vrot.slane %v1289, %v1295
        %v1297 = vcombine.low %v1272, %v1280
        %v1298 = vcombine.high %v1272, %v1280
        %v1300 = vunpack.c.l.s4 1934713408
        %v1301 = vunpack.c.0.s8 %v1300
        %v1302 = vlaneseq
        %v1303 = vshrl.u32 %v1302, 7
        %v1304 = vsub.s32 %v1301, %v1303
        %v1305 = vrot.slane %v1297, %v1304
        %v1307 = vunpack.c.l.s4 1934713408
        %v1308 = vunpack.c.0.s8 %v1307
        %v1309 = vlaneseq
        %v1310 = vshrl.u32 %v1309, 7
        %v1311 = vsub.s32 %v1308, %v1310
        %v1312 = vrot.slane %v1298, %v1311
        %v1313 = vcombine.low %v1288, %v1296
        %v1314 = vcombine.high %v1288, %v1296
        %v1316 = vunpack.c.l.s4 1934713408
        %v1317 = vunpack.c.0.s8 %v1316
        %v1318 = vlaneseq
        %v1319 = vshrl.u32 %v1318, 7
        %v1320 = vsub.s32 %v1317, %v1319
        %v1321 = vrot.slane %v1313, %v1320
        %v1323 = vunpack.c.l.s4 1934713408
        %v1324 = vunpack.c.0.s8 %v1323
        %v1325 = vlaneseq
        %v1326 = vshrl.u32 %v1325, 7
        %v1327 = vsub.s32 %v1324, %v1326
        %v1328 = vrot.slane %v1314, %v1327
        %v1329 = vcombine.low %v1305, %v1321
        %v1330 = vcombine.high %v1305, %v1321
        %v1331 = vcombine.low %v1312, %v1328
        %v1332 = vcombine.high %v1312, %v1328
        %1335 = vrot.lane.b32.xlu0 %v1262, 2
        %v1336 = vpop.permute.xlu0 %1335
        %1337 = vrot.lane.b32.xlu0 %v1330, 2
        %v1338 = vpop.permute.xlu0 %1337
        %1343 = vrot.lane.b32.xlu0 %v1263, 4
        %v1344 = vpop.permute.xlu0 %1343
        %1345 = vrot.lane.b32.xlu0 %v1331, 4
        %v1346 = vpop.permute.xlu0 %1345
        %1351 = vrot.lane.b32.xlu0 %v1264, 6
        %v1352 = vpop.permute.xlu0 %1351
        %1353 = vrot.lane.b32.xlu0 %v1332, 6
        %v1354 = vpop.permute.xlu0 %1353
        %v1357 = vsel %vm916, %v1261, %v1336
        %v1358 = vsel %vm916, %v1329, %v1338
        %v1359 = vsel %vm919, %v1357, %v1344
        %v1360 = vsel %vm919, %v1358, %v1346
        %v1361 = vsel %vm922, %v1359, %v1352
        %v1362 = vsel %vm922, %v1360, %v1354
        %s1364 = sor.u32 256, 13
        %1365 = vbcast.lane.b32.xlu0 %v486, %s1364
        %v1366 = vpop.permute.xlu0 %1365
        %s1368 = sor.u32 256, 13
        %1369 = vbcast.lane.b32.xlu0 %v494, %s1368
        %v1370 = vpop.permute.xlu0 %1369
        %s1372 = sor.u32 256, 13
        %1373 = vbcast.lane.b32.xlu0 %v502, %s1372
        %v1374 = vpop.permute.xlu0 %1373
        %s1376 = sor.u32 256, 13
        %1377 = vbcast.lane.b32.xlu0 %v510, %s1376
        %v1378 = vpop.permute.xlu0 %1377
        %s1380 = sor.u32 256, 13
        %1381 = vbcast.lane.b32.xlu0 %v518, %s1380
        %v1382 = vpop.permute.xlu0 %1381
        %s1384 = sor.u32 256, 13
        %1385 = vbcast.lane.b32.xlu0 %v526, %s1384
        %v1386 = vpop.permute.xlu0 %1385
        %s1388 = sor.u32 256, 13
        %1389 = vbcast.lane.b32.xlu0 %v534, %s1388
        %v1390 = vpop.permute.xlu0 %1389
        %s1392 = sor.u32 256, 13
        %1393 = vbcast.lane.b32.xlu0 %v542, %s1392
        %v1394 = vpop.permute.xlu0 %1393
        %s1396 = sor.u32 256, 13
        %1397 = vbcast.lane.b32.xlu0 %v550, %s1396
        %v1398 = vpop.permute.xlu0 %1397
        %s1400 = sor.u32 256, 13
        %1401 = vbcast.lane.b32.xlu0 %v558, %s1400
        %v1402 = vpop.permute.xlu0 %1401
        %s1404 = sor.u32 256, 13
        %1405 = vbcast.lane.b32.xlu0 %v566, %s1404
        %v1406 = vpop.permute.xlu0 %1405
        %s1408 = sor.u32 256, 13
        %1409 = vbcast.lane.b32.xlu0 %v574, %s1408
        %v1410 = vpop.permute.xlu0 %1409
        %s1412 = sor.u32 256, 13
        %1413 = vbcast.lane.b32.xlu0 %v582, %s1412
        %v1414 = vpop.permute.xlu0 %1413
        %s1416 = sor.u32 256, 13
        %1417 = vbcast.lane.b32.xlu0 %v590, %s1416
        %v1418 = vpop.permute.xlu0 %1417
        %s1420 = sor.u32 256, 13
        %1421 = vbcast.lane.b32.xlu0 %v598, %s1420
        %v1422 = vpop.permute.xlu0 %1421
        %s1424 = sor.u32 256, 13
        %1425 = vbcast.lane.b32.xlu0 %v606, %s1424
        %v1426 = vpop.permute.xlu0 %1425
        %s1428 = sor.u32 256, 13
        %1429 = vbcast.lane.b32.xlu0 %v614, %s1428
        %v1430 = vpop.permute.xlu0 %1429
        %s1432 = sor.u32 256, 13
        %1433 = vbcast.lane.b32.xlu0 %v622, %s1432
        %v1434 = vpop.permute.xlu0 %1433
        %s1436 = sor.u32 256, 13
        %1437 = vbcast.lane.b32.xlu0 %v630, %s1436
        %v1438 = vpop.permute.xlu0 %1437
        %s1440 = sor.u32 256, 13
        %1441 = vbcast.lane.b32.xlu0 %v638, %s1440
        %v1442 = vpop.permute.xlu0 %1441
        %s1444 = sor.u32 256, 13
        %1445 = vbcast.lane.b32.xlu0 %v646, %s1444
        %v1446 = vpop.permute.xlu0 %1445
        %s1448 = sor.u32 256, 13
        %1449 = vbcast.lane.b32.xlu0 %v654, %s1448
        %v1450 = vpop.permute.xlu0 %1449
        %s1452 = sor.u32 256, 13
        %1453 = vbcast.lane.b32.xlu0 %v662, %s1452
        %v1454 = vpop.permute.xlu0 %1453
        %s1456 = sor.u32 256, 13
        %1457 = vbcast.lane.b32.xlu0 %v670, %s1456
        %v1458 = vpop.permute.xlu0 %1457
        %s1460 = sor.u32 256, 13
        %1461 = vbcast.lane.b32.xlu0 %v678, %s1460
        %v1462 = vpop.permute.xlu0 %1461
        %s1464 = sor.u32 256, 13
        %1465 = vbcast.lane.b32.xlu0 %v686, %s1464
        %v1466 = vpop.permute.xlu0 %1465
        %s1468 = sor.u32 256, 13
        %1469 = vbcast.lane.b32.xlu0 %v694, %s1468
        %v1470 = vpop.permute.xlu0 %1469
        %s1472 = sor.u32 256, 13
        %1473 = vbcast.lane.b32.xlu0 %v702, %s1472
        %v1474 = vpop.permute.xlu0 %1473
        %s1476 = sor.u32 256, 13
        %1477 = vbcast.lane.b32.xlu0 %v710, %s1476
        %v1478 = vpop.permute.xlu0 %1477
        %s1480 = sor.u32 256, 13
        %1481 = vbcast.lane.b32.xlu0 %v718, %s1480
        %v1482 = vpop.permute.xlu0 %1481
        %s1484 = sor.u32 256, 13
        %1485 = vbcast.lane.b32.xlu0 %v726, %s1484
        %v1486 = vpop.permute.xlu0 %1485
        %s1488 = sor.u32 256, 13
        %1489 = vbcast.lane.b32.xlu0 %v734, %s1488
        %v1490 = vpop.permute.xlu0 %1489
        %v1491 = vsel %vm739, %v1366, %v1430
        %v1492 = vsel %vm739, %v1370, %v1434
        %v1493 = vsel %vm739, %v1374, %v1438
        %v1494 = vsel %vm739, %v1378, %v1442
        %v1495 = vsel %vm739, %v1382, %v1446
        %v1496 = vsel %vm739, %v1386, %v1450
        %v1497 = vsel %vm739, %v1390, %v1454
        %v1498 = vsel %vm739, %v1394, %v1458
        %v1499 = vsel %vm739, %v1398, %v1462
        %v1500 = vsel %vm739, %v1402, %v1466
        %v1501 = vsel %vm739, %v1406, %v1470
        %v1502 = vsel %vm739, %v1410, %v1474
        %v1503 = vsel %vm739, %v1414, %v1478
        %v1504 = vsel %vm739, %v1418, %v1482
        %v1505 = vsel %vm739, %v1422, %v1486
        %v1506 = vsel %vm739, %v1426, %v1490
        %v1507 = vcombine.low %v1491, %v1493
        %v1509 = vunpack.c.l.s4 1983009808
        %v1510 = vunpack.c.0.s8 %v1509
        %v1511 = vlaneseq
        %v1512 = vshrl.u32 %v1511, 7
        %v1513 = vsub.s32 %v1510, %v1512
        %v1514 = vrot.slane %v1507, %v1513
        %v1515 = vcombine.low %v1492, %v1494
        %v1517 = vunpack.c.l.s4 1983009808
        %v1518 = vunpack.c.0.s8 %v1517
        %v1519 = vlaneseq
        %v1520 = vshrl.u32 %v1519, 7
        %v1521 = vsub.s32 %v1518, %v1520
        %v1522 = vrot.slane %v1515, %v1521
        %v1523 = vcombine.low %v1495, %v1497
        %v1525 = vunpack.c.l.s4 1983009808
        %v1526 = vunpack.c.0.s8 %v1525
        %v1527 = vlaneseq
        %v1528 = vshrl.u32 %v1527, 7
        %v1529 = vsub.s32 %v1526, %v1528
        %v1530 = vrot.slane %v1523, %v1529
        %v1531 = vcombine.low %v1496, %v1498
        %v1533 = vunpack.c.l.s4 1983009808
        %v1534 = vunpack.c.0.s8 %v1533
        %v1535 = vlaneseq
        %v1536 = vshrl.u32 %v1535, 7
        %v1537 = vsub.s32 %v1534, %v1536
        %v1538 = vrot.slane %v1531, %v1537
        %v1539 = vcombine.low %v1514, %v1522
        %v1540 = vcombine.high %v1514, %v1522
        %v1542 = vunpack.c.l.s4 1934713408
        %v1543 = vunpack.c.0.s8 %v1542
        %v1544 = vlaneseq
        %v1545 = vshrl.u32 %v1544, 7
        %v1546 = vsub.s32 %v1543, %v1545
        %v1547 = vrot.slane %v1539, %v1546
        %v1549 = vunpack.c.l.s4 1934713408
        %v1550 = vunpack.c.0.s8 %v1549
        %v1551 = vlaneseq
        %v1552 = vshrl.u32 %v1551, 7
        %v1553 = vsub.s32 %v1550, %v1552
        %v1554 = vrot.slane %v1540, %v1553
        %v1555 = vcombine.low %v1530, %v1538
        %v1556 = vcombine.high %v1530, %v1538
        %v1558 = vunpack.c.l.s4 1934713408
        %v1559 = vunpack.c.0.s8 %v1558
        %v1560 = vlaneseq
        %v1561 = vshrl.u32 %v1560, 7
        %v1562 = vsub.s32 %v1559, %v1561
        %v1563 = vrot.slane %v1555, %v1562
        %v1565 = vunpack.c.l.s4 1934713408
        %v1566 = vunpack.c.0.s8 %v1565
        %v1567 = vlaneseq
        %v1568 = vshrl.u32 %v1567, 7
        %v1569 = vsub.s32 %v1566, %v1568
        %v1570 = vrot.slane %v1556, %v1569
        %v1571 = vcombine.low %v1547, %v1563
        %v1572 = vcombine.high %v1547, %v1563
        %v1573 = vcombine.low %v1554, %v1570
        %v1574 = vcombine.high %v1554, %v1570
        %v1575 = vcombine.low %v1499, %v1501
        %v1577 = vunpack.c.l.s4 1983009808
        %v1578 = vunpack.c.0.s8 %v1577
        %v1579 = vlaneseq
        %v1580 = vshrl.u32 %v1579, 7
        %v1581 = vsub.s32 %v1578, %v1580
        %v1582 = vrot.slane %v1575, %v1581
        %v1583 = vcombine.low %v1500, %v1502
        %v1585 = vunpack.c.l.s4 1983009808
        %v1586 = vunpack.c.0.s8 %v1585
        %v1587 = vlaneseq
        %v1588 = vshrl.u32 %v1587, 7
        %v1589 = vsub.s32 %v1586, %v1588
        %v1590 = vrot.slane %v1583, %v1589
        %v1591 = vcombine.low %v1503, %v1505
        %v1593 = vunpack.c.l.s4 1983009808
        %v1594 = vunpack.c.0.s8 %v1593
        %v1595 = vlaneseq
        %v1596 = vshrl.u32 %v1595, 7
        %v1597 = vsub.s32 %v1594, %v1596
        %v1598 = vrot.slane %v1591, %v1597
        %v1599 = vcombine.low %v1504, %v1506
        %v1601 = vunpack.c.l.s4 1983009808
        %v1602 = vunpack.c.0.s8 %v1601
        %v1603 = vlaneseq
        %v1604 = vshrl.u32 %v1603, 7
        %v1605 = vsub.s32 %v1602, %v1604
        %v1606 = vrot.slane %v1599, %v1605
        %v1607 = vcombine.low %v1582, %v1590
        %v1608 = vcombine.high %v1582, %v1590
        %v1610 = vunpack.c.l.s4 1934713408
        %v1611 = vunpack.c.0.s8 %v1610
        %v1612 = vlaneseq
        %v1613 = vshrl.u32 %v1612, 7
        %v1614 = vsub.s32 %v1611, %v1613
        %v1615 = vrot.slane %v1607, %v1614
        %v1617 = vunpack.c.l.s4 1934713408
        %v1618 = vunpack.c.0.s8 %v1617
        %v1619 = vlaneseq
        %v1620 = vshrl.u32 %v1619, 7
        %v1621 = vsub.s32 %v1618, %v1620
        %v1622 = vrot.slane %v1608, %v1621
        %v1623 = vcombine.low %v1598, %v1606
        %v1624 = vcombine.high %v1598, %v1606
        %v1626 = vunpack.c.l.s4 1934713408
        %v1627 = vunpack.c.0.s8 %v1626
        %v1628 = vlaneseq
        %v1629 = vshrl.u32 %v1628, 7
        %v1630 = vsub.s32 %v1627, %v1629
        %v1631 = vrot.slane %v1623, %v1630
        %v1633 = vunpack.c.l.s4 1934713408
        %v1634 = vunpack.c.0.s8 %v1633
        %v1635 = vlaneseq
        %v1636 = vshrl.u32 %v1635, 7
        %v1637 = vsub.s32 %v1634, %v1636
        %v1638 = vrot.slane %v1624, %v1637
        %v1639 = vcombine.low %v1615, %v1631
        %v1640 = vcombine.high %v1615, %v1631
        %v1641 = vcombine.low %v1622, %v1638
        %v1642 = vcombine.high %v1622, %v1638
        %1645 = vrot.lane.b32.xlu0 %v1572, 2
        %v1646 = vpop.permute.xlu0 %1645
        %1647 = vrot.lane.b32.xlu0 %v1640, 2
        %v1648 = vpop.permute.xlu0 %1647
        %1653 = vrot.lane.b32.xlu0 %v1573, 4
        %v1654 = vpop.permute.xlu0 %1653
        %1655 = vrot.lane.b32.xlu0 %v1641, 4
        %v1656 = vpop.permute.xlu0 %1655
        %1661 = vrot.lane.b32.xlu0 %v1574, 6
        %v1662 = vpop.permute.xlu0 %1661
        %1663 = vrot.lane.b32.xlu0 %v1642, 6
        %v1664 = vpop.permute.xlu0 %1663
        %v1667 = vsel %vm916, %v1571, %v1646
        %v1668 = vsel %vm916, %v1639, %v1648
        %v1669 = vsel %vm919, %v1667, %v1654
        %v1670 = vsel %vm919, %v1668, %v1656
        %v1671 = vsel %vm922, %v1669, %v1662
        %v1672 = vsel %vm922, %v1670, %v1664
        %s1674 = sor.u32 256, 13
        %1675 = vbcast.lane.b32.xlu0 %v928, %s1674
        %v1676 = vpop.permute.xlu0 %1675
        %s1678 = sor.u32 256, 13
        %1679 = vbcast.lane.b32.xlu0 %v936, %s1678
        %v1680 = vpop.permute.xlu0 %1679
        %s1682 = sor.u32 256, 13
        %1683 = vbcast.lane.b32.xlu0 %v944, %s1682
        %v1684 = vpop.permute.xlu0 %1683
        %s1686 = sor.u32 256, 13
        %1687 = vbcast.lane.b32.xlu0 %v952, %s1686
        %v1688 = vpop.permute.xlu0 %1687
        %s1690 = sor.u32 256, 13
        %1691 = vbcast.lane.b32.xlu0 %v960, %s1690
        %v1692 = vpop.permute.xlu0 %1691
        %s1694 = sor.u32 256, 13
        %1695 = vbcast.lane.b32.xlu0 %v968, %s1694
        %v1696 = vpop.permute.xlu0 %1695
        %s1698 = sor.u32 256, 13
        %1699 = vbcast.lane.b32.xlu0 %v976, %s1698
        %v1700 = vpop.permute.xlu0 %1699
        %s1702 = sor.u32 256, 13
        %1703 = vbcast.lane.b32.xlu0 %v984, %s1702
        %v1704 = vpop.permute.xlu0 %1703
        %s1706 = sor.u32 256, 13
        %1707 = vbcast.lane.b32.xlu0 %v992, %s1706
        %v1708 = vpop.permute.xlu0 %1707
        %s1710 = sor.u32 256, 13
        %1711 = vbcast.lane.b32.xlu0 %v1000, %s1710
        %v1712 = vpop.permute.xlu0 %1711
        %s1714 = sor.u32 256, 13
        %1715 = vbcast.lane.b32.xlu0 %v1008, %s1714
        %v1716 = vpop.permute.xlu0 %1715
        %s1718 = sor.u32 256, 13
        %1719 = vbcast.lane.b32.xlu0 %v1016, %s1718
        %v1720 = vpop.permute.xlu0 %1719
        %s1722 = sor.u32 256, 13
        %1723 = vbcast.lane.b32.xlu0 %v1024, %s1722
        %v1724 = vpop.permute.xlu0 %1723
        %s1726 = sor.u32 256, 13
        %1727 = vbcast.lane.b32.xlu0 %v1032, %s1726
        %v1728 = vpop.permute.xlu0 %1727
        %s1730 = sor.u32 256, 13
        %1731 = vbcast.lane.b32.xlu0 %v1040, %s1730
        %v1732 = vpop.permute.xlu0 %1731
        %s1734 = sor.u32 256, 13
        %1735 = vbcast.lane.b32.xlu0 %v1048, %s1734
        %v1736 = vpop.permute.xlu0 %1735
        %s1738 = sor.u32 256, 13
        %1739 = vbcast.lane.b32.xlu0 %v1056, %s1738
        %v1740 = vpop.permute.xlu0 %1739
        %s1742 = sor.u32 256, 13
        %1743 = vbcast.lane.b32.xlu0 %v1064, %s1742
        %v1744 = vpop.permute.xlu0 %1743
        %s1746 = sor.u32 256, 13
        %1747 = vbcast.lane.b32.xlu0 %v1072, %s1746
        %v1748 = vpop.permute.xlu0 %1747
        %s1750 = sor.u32 256, 13
        %1751 = vbcast.lane.b32.xlu0 %v1080, %s1750
        %v1752 = vpop.permute.xlu0 %1751
        %s1754 = sor.u32 256, 13
        %1755 = vbcast.lane.b32.xlu0 %v1088, %s1754
        %v1756 = vpop.permute.xlu0 %1755
        %s1758 = sor.u32 256, 13
        %1759 = vbcast.lane.b32.xlu0 %v1096, %s1758
        %v1760 = vpop.permute.xlu0 %1759
        %s1762 = sor.u32 256, 13
        %1763 = vbcast.lane.b32.xlu0 %v1104, %s1762
        %v1764 = vpop.permute.xlu0 %1763
        %s1766 = sor.u32 256, 13
        %1767 = vbcast.lane.b32.xlu0 %v1112, %s1766
        %v1768 = vpop.permute.xlu0 %1767
        %s1770 = sor.u32 256, 13
        %1771 = vbcast.lane.b32.xlu0 %v1120, %s1770
        %v1772 = vpop.permute.xlu0 %1771
        %s1774 = sor.u32 256, 13
        %1775 = vbcast.lane.b32.xlu0 %v1128, %s1774
        %v1776 = vpop.permute.xlu0 %1775
        %s1778 = sor.u32 256, 13
        %1779 = vbcast.lane.b32.xlu0 %v1136, %s1778
        %v1780 = vpop.permute.xlu0 %1779
        %s1782 = sor.u32 256, 13
        %1783 = vbcast.lane.b32.xlu0 %v1144, %s1782
        %v1784 = vpop.permute.xlu0 %1783
        %s1786 = sor.u32 256, 13
        %1787 = vbcast.lane.b32.xlu0 %v1152, %s1786
        %v1788 = vpop.permute.xlu0 %1787
        %s1790 = sor.u32 256, 13
        %1791 = vbcast.lane.b32.xlu0 %v1160, %s1790
        %v1792 = vpop.permute.xlu0 %1791
        %s1794 = sor.u32 256, 13
        %1795 = vbcast.lane.b32.xlu0 %v1168, %s1794
        %v1796 = vpop.permute.xlu0 %1795
        %s1798 = sor.u32 256, 13
        %1799 = vbcast.lane.b32.xlu0 %v1176, %s1798
        %v1800 = vpop.permute.xlu0 %1799
        %v1801 = vsel %vm739, %v1676, %v1740
        %v1802 = vsel %vm739, %v1680, %v1744
        %v1803 = vsel %vm739, %v1684, %v1748
        %v1804 = vsel %vm739, %v1688, %v1752
        %v1805 = vsel %vm739, %v1692, %v1756
        %v1806 = vsel %vm739, %v1696, %v1760
        %v1807 = vsel %vm739, %v1700, %v1764
        %v1808 = vsel %vm739, %v1704, %v1768
        %v1809 = vsel %vm739, %v1708, %v1772
        %v1810 = vsel %vm739, %v1712, %v1776
        %v1811 = vsel %vm739, %v1716, %v1780
        %v1812 = vsel %vm739, %v1720, %v1784
        %v1813 = vsel %vm739, %v1724, %v1788
        %v1814 = vsel %vm739, %v1728, %v1792
        %v1815 = vsel %vm739, %v1732, %v1796
        %v1816 = vsel %vm739, %v1736, %v1800
        %v1817 = vcombine.low %v1801, %v1803
        %v1819 = vunpack.c.l.s4 1983009808
        %v1820 = vunpack.c.0.s8 %v1819
        %v1821 = vlaneseq
        %v1822 = vshrl.u32 %v1821, 7
        %v1823 = vsub.s32 %v1820, %v1822
        %v1824 = vrot.slane %v1817, %v1823
        %v1825 = vcombine.low %v1802, %v1804
        %v1827 = vunpack.c.l.s4 1983009808
        %v1828 = vunpack.c.0.s8 %v1827
        %v1829 = vlaneseq
        %v1830 = vshrl.u32 %v1829, 7
        %v1831 = vsub.s32 %v1828, %v1830
        %v1832 = vrot.slane %v1825, %v1831
        %v1833 = vcombine.low %v1805, %v1807
        %v1835 = vunpack.c.l.s4 1983009808
        %v1836 = vunpack.c.0.s8 %v1835
        %v1837 = vlaneseq
        %v1838 = vshrl.u32 %v1837, 7
        %v1839 = vsub.s32 %v1836, %v1838
        %v1840 = vrot.slane %v1833, %v1839
        %v1841 = vcombine.low %v1806, %v1808
        %v1843 = vunpack.c.l.s4 1983009808
        %v1844 = vunpack.c.0.s8 %v1843
        %v1845 = vlaneseq
        %v1846 = vshrl.u32 %v1845, 7
        %v1847 = vsub.s32 %v1844, %v1846
        %v1848 = vrot.slane %v1841, %v1847
        %v1849 = vcombine.low %v1824, %v1832
        %v1850 = vcombine.high %v1824, %v1832
        %v1852 = vunpack.c.l.s4 1934713408
        %v1853 = vunpack.c.0.s8 %v1852
        %v1854 = vlaneseq
        %v1855 = vshrl.u32 %v1854, 7
        %v1856 = vsub.s32 %v1853, %v1855
        %v1857 = vrot.slane %v1849, %v1856
        %v1859 = vunpack.c.l.s4 1934713408
        %v1860 = vunpack.c.0.s8 %v1859
        %v1861 = vlaneseq
        %v1862 = vshrl.u32 %v1861, 7
        %v1863 = vsub.s32 %v1860, %v1862
        %v1864 = vrot.slane %v1850, %v1863
        %v1865 = vcombine.low %v1840, %v1848
        %v1866 = vcombine.high %v1840, %v1848
        %v1868 = vunpack.c.l.s4 1934713408
        %v1869 = vunpack.c.0.s8 %v1868
        %v1870 = vlaneseq
        %v1871 = vshrl.u32 %v1870, 7
        %v1872 = vsub.s32 %v1869, %v1871
        %v1873 = vrot.slane %v1865, %v1872
        %v1875 = vunpack.c.l.s4 1934713408
        %v1876 = vunpack.c.0.s8 %v1875
        %v1877 = vlaneseq
        %v1878 = vshrl.u32 %v1877, 7
        %v1879 = vsub.s32 %v1876, %v1878
        %v1880 = vrot.slane %v1866, %v1879
        %v1881 = vcombine.low %v1857, %v1873
        %v1882 = vcombine.high %v1857, %v1873
        %v1883 = vcombine.low %v1864, %v1880
        %v1884 = vcombine.high %v1864, %v1880
        %v1885 = vcombine.low %v1809, %v1811
        %v1887 = vunpack.c.l.s4 1983009808
        %v1888 = vunpack.c.0.s8 %v1887
        %v1889 = vlaneseq
        %v1890 = vshrl.u32 %v1889, 7
        %v1891 = vsub.s32 %v1888, %v1890
        %v1892 = vrot.slane %v1885, %v1891
        %v1893 = vcombine.low %v1810, %v1812
        %v1895 = vunpack.c.l.s4 1983009808
        %v1896 = vunpack.c.0.s8 %v1895
        %v1897 = vlaneseq
        %v1898 = vshrl.u32 %v1897, 7
        %v1899 = vsub.s32 %v1896, %v1898
        %v1900 = vrot.slane %v1893, %v1899
        %v1901 = vcombine.low %v1813, %v1815
        %v1903 = vunpack.c.l.s4 1983009808
        %v1904 = vunpack.c.0.s8 %v1903
        %v1905 = vlaneseq
        %v1906 = vshrl.u32 %v1905, 7
        %v1907 = vsub.s32 %v1904, %v1906
        %v1908 = vrot.slane %v1901, %v1907
        %v1909 = vcombine.low %v1814, %v1816
        %v1911 = vunpack.c.l.s4 1983009808
        %v1912 = vunpack.c.0.s8 %v1911
        %v1913 = vlaneseq
        %v1914 = vshrl.u32 %v1913, 7
        %v1915 = vsub.s32 %v1912, %v1914
        %v1916 = vrot.slane %v1909, %v1915
        %v1917 = vcombine.low %v1892, %v1900
        %v1918 = vcombine.high %v1892, %v1900
        %v1920 = vunpack.c.l.s4 1934713408
        %v1921 = vunpack.c.0.s8 %v1920
        %v1922 = vlaneseq
        %v1923 = vshrl.u32 %v1922, 7
        %v1924 = vsub.s32 %v1921, %v1923
        %v1925 = vrot.slane %v1917, %v1924
        %v1927 = vunpack.c.l.s4 1934713408
        %v1928 = vunpack.c.0.s8 %v1927
        %v1929 = vlaneseq
        %v1930 = vshrl.u32 %v1929, 7
        %v1931 = vsub.s32 %v1928, %v1930
        %v1932 = vrot.slane %v1918, %v1931
        %v1933 = vcombine.low %v1908, %v1916
        %v1934 = vcombine.high %v1908, %v1916
        %v1936 = vunpack.c.l.s4 1934713408
        %v1937 = vunpack.c.0.s8 %v1936
        %v1938 = vlaneseq
        %v1939 = vshrl.u32 %v1938, 7
        %v1940 = vsub.s32 %v1937, %v1939
        %v1941 = vrot.slane %v1933, %v1940
        %v1943 = vunpack.c.l.s4 1934713408
        %v1944 = vunpack.c.0.s8 %v1943
        %v1945 = vlaneseq
        %v1946 = vshrl.u32 %v1945, 7
        %v1947 = vsub.s32 %v1944, %v1946
        %v1948 = vrot.slane %v1934, %v1947
        %v1949 = vcombine.low %v1925, %v1941
        %v1950 = vcombine.high %v1925, %v1941
        %v1951 = vcombine.low %v1932, %v1948
        %v1952 = vcombine.high %v1932, %v1948
        %1955 = vrot.lane.b32.xlu0 %v1882, 2
        %v1956 = vpop.permute.xlu0 %1955
        %1957 = vrot.lane.b32.xlu0 %v1950, 2
        %v1958 = vpop.permute.xlu0 %1957
        %1963 = vrot.lane.b32.xlu0 %v1883, 4
        %v1964 = vpop.permute.xlu0 %1963
        %1965 = vrot.lane.b32.xlu0 %v1951, 4
        %v1966 = vpop.permute.xlu0 %1965
        %1971 = vrot.lane.b32.xlu0 %v1884, 6
        %v1972 = vpop.permute.xlu0 %1971
        %1973 = vrot.lane.b32.xlu0 %v1952, 6
        %v1974 = vpop.permute.xlu0 %1973
        %v1977 = vsel %vm916, %v1881, %v1956
        %v1978 = vsel %vm916, %v1949, %v1958
        %v1979 = vsel %vm919, %v1977, %v1964
        %v1980 = vsel %vm919, %v1978, %v1966
        %v1981 = vsel %vm922, %v1979, %v1972
        %v1982 = vsel %vm922, %v1980, %v1974
        %s1984 = sor.u32 256, 19
        %1985 = vbcast.lane.b32.xlu0 %v486, %s1984
        %v1986 = vpop.permute.xlu0 %1985
        %s1988 = sor.u32 256, 19
        %1989 = vbcast.lane.b32.xlu0 %v494, %s1988
        %v1990 = vpop.permute.xlu0 %1989
        %s1992 = sor.u32 256, 19
        %1993 = vbcast.lane.b32.xlu0 %v502, %s1992
        %v1994 = vpop.permute.xlu0 %1993
        %s1996 = sor.u32 256, 19
        %1997 = vbcast.lane.b32.xlu0 %v510, %s1996
        %v1998 = vpop.permute.xlu0 %1997
        %s2000 = sor.u32 256, 19
        %2001 = vbcast.lane.b32.xlu0 %v518, %s2000
        %v2002 = vpop.permute.xlu0 %2001
        %s2004 = sor.u32 256, 19
        %2005 = vbcast.lane.b32.xlu0 %v526, %s2004
        %v2006 = vpop.permute.xlu0 %2005
        %s2008 = sor.u32 256, 19
        %2009 = vbcast.lane.b32.xlu0 %v534, %s2008
        %v2010 = vpop.permute.xlu0 %2009
        %s2012 = sor.u32 256, 19
        %2013 = vbcast.lane.b32.xlu0 %v542, %s2012
        %v2014 = vpop.permute.xlu0 %2013
        %s2016 = sor.u32 256, 19
        %2017 = vbcast.lane.b32.xlu0 %v550, %s2016
        %v2018 = vpop.permute.xlu0 %2017
        %s2020 = sor.u32 256, 19
        %2021 = vbcast.lane.b32.xlu0 %v558, %s2020
        %v2022 = vpop.permute.xlu0 %2021
        %s2024 = sor.u32 256, 19
        %2025 = vbcast.lane.b32.xlu0 %v566, %s2024
        %v2026 = vpop.permute.xlu0 %2025
        %s2028 = sor.u32 256, 19
        %2029 = vbcast.lane.b32.xlu0 %v574, %s2028
        %v2030 = vpop.permute.xlu0 %2029
        %s2032 = sor.u32 256, 19
        %2033 = vbcast.lane.b32.xlu0 %v582, %s2032
        %v2034 = vpop.permute.xlu0 %2033
        %s2036 = sor.u32 256, 19
        %2037 = vbcast.lane.b32.xlu0 %v590, %s2036
        %v2038 = vpop.permute.xlu0 %2037
        %s2040 = sor.u32 256, 19
        %2041 = vbcast.lane.b32.xlu0 %v598, %s2040
        %v2042 = vpop.permute.xlu0 %2041
        %s2044 = sor.u32 256, 19
        %2045 = vbcast.lane.b32.xlu0 %v606, %s2044
        %v2046 = vpop.permute.xlu0 %2045
        %s2048 = sor.u32 256, 19
        %2049 = vbcast.lane.b32.xlu0 %v614, %s2048
        %v2050 = vpop.permute.xlu0 %2049
        %s2052 = sor.u32 256, 19
        %2053 = vbcast.lane.b32.xlu0 %v622, %s2052
        %v2054 = vpop.permute.xlu0 %2053
        %s2056 = sor.u32 256, 19
        %2057 = vbcast.lane.b32.xlu0 %v630, %s2056
        %v2058 = vpop.permute.xlu0 %2057
        %s2060 = sor.u32 256, 19
        %2061 = vbcast.lane.b32.xlu0 %v638, %s2060
        %v2062 = vpop.permute.xlu0 %2061
        %s2064 = sor.u32 256, 19
        %2065 = vbcast.lane.b32.xlu0 %v646, %s2064
        %v2066 = vpop.permute.xlu0 %2065
        %s2068 = sor.u32 256, 19
        %2069 = vbcast.lane.b32.xlu0 %v654, %s2068
        %v2070 = vpop.permute.xlu0 %2069
        %s2072 = sor.u32 256, 19
        %2073 = vbcast.lane.b32.xlu0 %v662, %s2072
        %v2074 = vpop.permute.xlu0 %2073
        %s2076 = sor.u32 256, 19
        %2077 = vbcast.lane.b32.xlu0 %v670, %s2076
        %v2078 = vpop.permute.xlu0 %2077
        %s2080 = sor.u32 256, 19
        %2081 = vbcast.lane.b32.xlu0 %v678, %s2080
        %v2082 = vpop.permute.xlu0 %2081
        %s2084 = sor.u32 256, 19
        %2085 = vbcast.lane.b32.xlu0 %v686, %s2084
        %v2086 = vpop.permute.xlu0 %2085
        %s2088 = sor.u32 256, 19
        %2089 = vbcast.lane.b32.xlu0 %v694, %s2088
        %v2090 = vpop.permute.xlu0 %2089
        %s2092 = sor.u32 256, 19
        %2093 = vbcast.lane.b32.xlu0 %v702, %s2092
        %v2094 = vpop.permute.xlu0 %2093
        %s2096 = sor.u32 256, 19
        %2097 = vbcast.lane.b32.xlu0 %v710, %s2096
        %v2098 = vpop.permute.xlu0 %2097
        %s2100 = sor.u32 256, 19
        %2101 = vbcast.lane.b32.xlu0 %v718, %s2100
        %v2102 = vpop.permute.xlu0 %2101
        %s2104 = sor.u32 256, 19
        %2105 = vbcast.lane.b32.xlu0 %v726, %s2104
        %v2106 = vpop.permute.xlu0 %2105
        %s2108 = sor.u32 256, 19
        %2109 = vbcast.lane.b32.xlu0 %v734, %s2108
        %v2110 = vpop.permute.xlu0 %2109
        %v2111 = vsel %vm739, %v1986, %v2050
        %v2112 = vsel %vm739, %v1990, %v2054
        %v2113 = vsel %vm739, %v1994, %v2058
        %v2114 = vsel %vm739, %v1998, %v2062
        %v2115 = vsel %vm739, %v2002, %v2066
        %v2116 = vsel %vm739, %v2006, %v2070
        %v2117 = vsel %vm739, %v2010, %v2074
        %v2118 = vsel %vm739, %v2014, %v2078
        %v2119 = vsel %vm739, %v2018, %v2082
        %v2120 = vsel %vm739, %v2022, %v2086
        %v2121 = vsel %vm739, %v2026, %v2090
        %v2122 = vsel %vm739, %v2030, %v2094
        %v2123 = vsel %vm739, %v2034, %v2098
        %v2124 = vsel %vm739, %v2038, %v2102
        %v2125 = vsel %vm739, %v2042, %v2106
        %v2126 = vsel %vm739, %v2046, %v2110
        %v2127 = vcombine.low %v2111, %v2113
        %v2129 = vunpack.c.l.s4 1983009808
        %v2130 = vunpack.c.0.s8 %v2129
        %v2131 = vlaneseq
        %v2132 = vshrl.u32 %v2131, 7
        %v2133 = vsub.s32 %v2130, %v2132
        %v2134 = vrot.slane %v2127, %v2133
        %v2135 = vcombine.low %v2112, %v2114
        %v2137 = vunpack.c.l.s4 1983009808
        %v2138 = vunpack.c.0.s8 %v2137
        %v2139 = vlaneseq
        %v2140 = vshrl.u32 %v2139, 7
        %v2141 = vsub.s32 %v2138, %v2140
        %v2142 = vrot.slane %v2135, %v2141
        %v2143 = vcombine.low %v2115, %v2117
        %v2145 = vunpack.c.l.s4 1983009808
        %v2146 = vunpack.c.0.s8 %v2145
        %v2147 = vlaneseq
        %v2148 = vshrl.u32 %v2147, 7
        %v2149 = vsub.s32 %v2146, %v2148
        %v2150 = vrot.slane %v2143, %v2149
        %v2151 = vcombine.low %v2116, %v2118
        %v2153 = vunpack.c.l.s4 1983009808
        %v2154 = vunpack.c.0.s8 %v2153
        %v2155 = vlaneseq
        %v2156 = vshrl.u32 %v2155, 7
        %v2157 = vsub.s32 %v2154, %v2156
        %v2158 = vrot.slane %v2151, %v2157
        %v2159 = vcombine.low %v2134, %v2142
        %v2160 = vcombine.high %v2134, %v2142
        %v2162 = vunpack.c.l.s4 1934713408
        %v2163 = vunpack.c.0.s8 %v2162
        %v2164 = vlaneseq
        %v2165 = vshrl.u32 %v2164, 7
        %v2166 = vsub.s32 %v2163, %v2165
        %v2167 = vrot.slane %v2159, %v2166
        %v2169 = vunpack.c.l.s4 1934713408
        %v2170 = vunpack.c.0.s8 %v2169
        %v2171 = vlaneseq
        %v2172 = vshrl.u32 %v2171, 7
        %v2173 = vsub.s32 %v2170, %v2172
        %v2174 = vrot.slane %v2160, %v2173
        %v2175 = vcombine.low %v2150, %v2158
        %v2176 = vcombine.high %v2150, %v2158
        %v2178 = vunpack.c.l.s4 1934713408
        %v2179 = vunpack.c.0.s8 %v2178
        %v2180 = vlaneseq
        %v2181 = vshrl.u32 %v2180, 7
        %v2182 = vsub.s32 %v2179, %v2181
        %v2183 = vrot.slane %v2175, %v2182
        %v2185 = vunpack.c.l.s4 1934713408
        %v2186 = vunpack.c.0.s8 %v2185
        %v2187 = vlaneseq
        %v2188 = vshrl.u32 %v2187, 7
        %v2189 = vsub.s32 %v2186, %v2188
        %v2190 = vrot.slane %v2176, %v2189
        %v2191 = vcombine.low %v2167, %v2183
        %v2192 = vcombine.high %v2167, %v2183
        %v2193 = vcombine.low %v2174, %v2190
        %v2194 = vcombine.high %v2174, %v2190
        %v2195 = vcombine.low %v2119, %v2121
        %v2197 = vunpack.c.l.s4 1983009808
        %v2198 = vunpack.c.0.s8 %v2197
        %v2199 = vlaneseq
        %v2200 = vshrl.u32 %v2199, 7
        %v2201 = vsub.s32 %v2198, %v2200
        %v2202 = vrot.slane %v2195, %v2201
        %v2203 = vcombine.low %v2120, %v2122
        %v2205 = vunpack.c.l.s4 1983009808
        %v2206 = vunpack.c.0.s8 %v2205
        %v2207 = vlaneseq
        %v2208 = vshrl.u32 %v2207, 7
        %v2209 = vsub.s32 %v2206, %v2208
        %v2210 = vrot.slane %v2203, %v2209
        %v2211 = vcombine.low %v2123, %v2125
        %v2213 = vunpack.c.l.s4 1983009808
        %v2214 = vunpack.c.0.s8 %v2213
        %v2215 = vlaneseq
        %v2216 = vshrl.u32 %v2215, 7
        %v2217 = vsub.s32 %v2214, %v2216
        %v2218 = vrot.slane %v2211, %v2217
        %v2219 = vcombine.low %v2124, %v2126
        %v2221 = vunpack.c.l.s4 1983009808
        %v2222 = vunpack.c.0.s8 %v2221
        %v2223 = vlaneseq
        %v2224 = vshrl.u32 %v2223, 7
        %v2225 = vsub.s32 %v2222, %v2224
        %v2226 = vrot.slane %v2219, %v2225
        %v2227 = vcombine.low %v2202, %v2210
        %v2228 = vcombine.high %v2202, %v2210
        %v2230 = vunpack.c.l.s4 1934713408
        %v2231 = vunpack.c.0.s8 %v2230
        %v2232 = vlaneseq
        %v2233 = vshrl.u32 %v2232, 7
        %v2234 = vsub.s32 %v2231, %v2233
        %v2235 = vrot.slane %v2227, %v2234
        %v2237 = vunpack.c.l.s4 1934713408
        %v2238 = vunpack.c.0.s8 %v2237
        %v2239 = vlaneseq
        %v2240 = vshrl.u32 %v2239, 7
        %v2241 = vsub.s32 %v2238, %v2240
        %v2242 = vrot.slane %v2228, %v2241
        %v2243 = vcombine.low %v2218, %v2226
        %v2244 = vcombine.high %v2218, %v2226
        %v2246 = vunpack.c.l.s4 1934713408
        %v2247 = vunpack.c.0.s8 %v2246
        %v2248 = vlaneseq
        %v2249 = vshrl.u32 %v2248, 7
        %v2250 = vsub.s32 %v2247, %v2249
        %v2251 = vrot.slane %v2243, %v2250
        %v2253 = vunpack.c.l.s4 1934713408
        %v2254 = vunpack.c.0.s8 %v2253
        %v2255 = vlaneseq
        %v2256 = vshrl.u32 %v2255, 7
        %v2257 = vsub.s32 %v2254, %v2256
        %v2258 = vrot.slane %v2244, %v2257
        %v2259 = vcombine.low %v2235, %v2251
        %v2260 = vcombine.high %v2235, %v2251
        %v2261 = vcombine.low %v2242, %v2258
        %v2262 = vcombine.high %v2242, %v2258
        %2265 = vrot.lane.b32.xlu0 %v2192, 2
        %v2266 = vpop.permute.xlu0 %2265
        %2267 = vrot.lane.b32.xlu0 %v2260, 2
        %v2268 = vpop.permute.xlu0 %2267
        %2273 = vrot.lane.b32.xlu0 %v2193, 4
        %v2274 = vpop.permute.xlu0 %2273
        %2275 = vrot.lane.b32.xlu0 %v2261, 4
        %v2276 = vpop.permute.xlu0 %2275
        %2281 = vrot.lane.b32.xlu0 %v2194, 6
        %v2282 = vpop.permute.xlu0 %2281
        %2283 = vrot.lane.b32.xlu0 %v2262, 6
        %v2284 = vpop.permute.xlu0 %2283
        %v2287 = vsel %vm916, %v2191, %v2266
        %v2288 = vsel %vm916, %v2259, %v2268
        %v2289 = vsel %vm919, %v2287, %v2274
        %v2290 = vsel %vm919, %v2288, %v2276
        %v2291 = vsel %vm922, %v2289, %v2282
        %v2292 = vsel %vm922, %v2290, %v2284
        %s2294 = sor.u32 256, 19
        %2295 = vbcast.lane.b32.xlu0 %v928, %s2294
        %v2296 = vpop.permute.xlu0 %2295
        %s2298 = sor.u32 256, 19
        %2299 = vbcast.lane.b32.xlu0 %v936, %s2298
        %v2300 = vpop.permute.xlu0 %2299
        %s2302 = sor.u32 256, 19
        %2303 = vbcast.lane.b32.xlu0 %v944, %s2302
        %v2304 = vpop.permute.xlu0 %2303
        %s2306 = sor.u32 256, 19
        %2307 = vbcast.lane.b32.xlu0 %v952, %s2306
        %v2308 = vpop.permute.xlu0 %2307
        %s2310 = sor.u32 256, 19
        %2311 = vbcast.lane.b32.xlu0 %v960, %s2310
        %v2312 = vpop.permute.xlu0 %2311
        %s2314 = sor.u32 256, 19
        %2315 = vbcast.lane.b32.xlu0 %v968, %s2314
        %v2316 = vpop.permute.xlu0 %2315
        %s2318 = sor.u32 256, 19
        %2319 = vbcast.lane.b32.xlu0 %v976, %s2318
        %v2320 = vpop.permute.xlu0 %2319
        %s2322 = sor.u32 256, 19
        %2323 = vbcast.lane.b32.xlu0 %v984, %s2322
        %v2324 = vpop.permute.xlu0 %2323
        %s2326 = sor.u32 256, 19
        %2327 = vbcast.lane.b32.xlu0 %v992, %s2326
        %v2328 = vpop.permute.xlu0 %2327
        %s2330 = sor.u32 256, 19
        %2331 = vbcast.lane.b32.xlu0 %v1000, %s2330
        %v2332 = vpop.permute.xlu0 %2331
        %s2334 = sor.u32 256, 19
        %2335 = vbcast.lane.b32.xlu0 %v1008, %s2334
        %v2336 = vpop.permute.xlu0 %2335
        %s2338 = sor.u32 256, 19
        %2339 = vbcast.lane.b32.xlu0 %v1016, %s2338
        %v2340 = vpop.permute.xlu0 %2339
        %s2342 = sor.u32 256, 19
        %2343 = vbcast.lane.b32.xlu0 %v1024, %s2342
        %v2344 = vpop.permute.xlu0 %2343
        %s2346 = sor.u32 256, 19
        %2347 = vbcast.lane.b32.xlu0 %v1032, %s2346
        %v2348 = vpop.permute.xlu0 %2347
        %s2350 = sor.u32 256, 19
        %2351 = vbcast.lane.b32.xlu0 %v1040, %s2350
        %v2352 = vpop.permute.xlu0 %2351
        %s2354 = sor.u32 256, 19
        %2355 = vbcast.lane.b32.xlu0 %v1048, %s2354
        %v2356 = vpop.permute.xlu0 %2355
        %s2358 = sor.u32 256, 19
        %2359 = vbcast.lane.b32.xlu0 %v1056, %s2358
        %v2360 = vpop.permute.xlu0 %2359
        %s2362 = sor.u32 256, 19
        %2363 = vbcast.lane.b32.xlu0 %v1064, %s2362
        %v2364 = vpop.permute.xlu0 %2363
        %s2366 = sor.u32 256, 19
        %2367 = vbcast.lane.b32.xlu0 %v1072, %s2366
        %v2368 = vpop.permute.xlu0 %2367
        %s2370 = sor.u32 256, 19
        %2371 = vbcast.lane.b32.xlu0 %v1080, %s2370
        %v2372 = vpop.permute.xlu0 %2371
        %s2374 = sor.u32 256, 19
        %2375 = vbcast.lane.b32.xlu0 %v1088, %s2374
        %v2376 = vpop.permute.xlu0 %2375
        %s2378 = sor.u32 256, 19
        %2379 = vbcast.lane.b32.xlu0 %v1096, %s2378
        %v2380 = vpop.permute.xlu0 %2379
        %s2382 = sor.u32 256, 19
        %2383 = vbcast.lane.b32.xlu0 %v1104, %s2382
        %v2384 = vpop.permute.xlu0 %2383
        %s2386 = sor.u32 256, 19
        %2387 = vbcast.lane.b32.xlu0 %v1112, %s2386
        %v2388 = vpop.permute.xlu0 %2387
        %s2390 = sor.u32 256, 19
        %2391 = vbcast.lane.b32.xlu0 %v1120, %s2390
        %v2392 = vpop.permute.xlu0 %2391
        %s2394 = sor.u32 256, 19
        %2395 = vbcast.lane.b32.xlu0 %v1128, %s2394
        %v2396 = vpop.permute.xlu0 %2395
        %s2398 = sor.u32 256, 19
        %2399 = vbcast.lane.b32.xlu0 %v1136, %s2398
        %v2400 = vpop.permute.xlu0 %2399
        %s2402 = sor.u32 256, 19
        %2403 = vbcast.lane.b32.xlu0 %v1144, %s2402
        %v2404 = vpop.permute.xlu0 %2403
        %s2406 = sor.u32 256, 19
        %2407 = vbcast.lane.b32.xlu0 %v1152, %s2406
        %v2408 = vpop.permute.xlu0 %2407
        %s2410 = sor.u32 256, 19
        %2411 = vbcast.lane.b32.xlu0 %v1160, %s2410
        %v2412 = vpop.permute.xlu0 %2411
        %s2414 = sor.u32 256, 19
        %2415 = vbcast.lane.b32.xlu0 %v1168, %s2414
        %v2416 = vpop.permute.xlu0 %2415
        %s2418 = sor.u32 256, 19
        %2419 = vbcast.lane.b32.xlu0 %v1176, %s2418
        %v2420 = vpop.permute.xlu0 %2419
        %v2421 = vsel %vm739, %v2296, %v2360
        %v2422 = vsel %vm739, %v2300, %v2364
        %v2423 = vsel %vm739, %v2304, %v2368
        %v2424 = vsel %vm739, %v2308, %v2372
        %v2425 = vsel %vm739, %v2312, %v2376
        %v2426 = vsel %vm739, %v2316, %v2380
        %v2427 = vsel %vm739, %v2320, %v2384
        %v2428 = vsel %vm739, %v2324, %v2388
        %v2429 = vsel %vm739, %v2328, %v2392
        %v2430 = vsel %vm739, %v2332, %v2396
        %v2431 = vsel %vm739, %v2336, %v2400
        %v2432 = vsel %vm739, %v2340, %v2404
        %v2433 = vsel %vm739, %v2344, %v2408
        %v2434 = vsel %vm739, %v2348, %v2412
        %v2435 = vsel %vm739, %v2352, %v2416
        %v2436 = vsel %vm739, %v2356, %v2420
        %v2437 = vcombine.low %v2421, %v2423
        %v2439 = vunpack.c.l.s4 1983009808
        %v2440 = vunpack.c.0.s8 %v2439
        %v2441 = vlaneseq
        %v2442 = vshrl.u32 %v2441, 7
        %v2443 = vsub.s32 %v2440, %v2442
        %v2444 = vrot.slane %v2437, %v2443
        %v2445 = vcombine.low %v2422, %v2424
        %v2447 = vunpack.c.l.s4 1983009808
        %v2448 = vunpack.c.0.s8 %v2447
        %v2449 = vlaneseq
        %v2450 = vshrl.u32 %v2449, 7
        %v2451 = vsub.s32 %v2448, %v2450
        %v2452 = vrot.slane %v2445, %v2451
        %v2453 = vcombine.low %v2425, %v2427
        %v2455 = vunpack.c.l.s4 1983009808
        %v2456 = vunpack.c.0.s8 %v2455
        %v2457 = vlaneseq
        %v2458 = vshrl.u32 %v2457, 7
        %v2459 = vsub.s32 %v2456, %v2458
        %v2460 = vrot.slane %v2453, %v2459
        %v2461 = vcombine.low %v2426, %v2428
        %v2463 = vunpack.c.l.s4 1983009808
        %v2464 = vunpack.c.0.s8 %v2463
        %v2465 = vlaneseq
        %v2466 = vshrl.u32 %v2465, 7
        %v2467 = vsub.s32 %v2464, %v2466
        %v2468 = vrot.slane %v2461, %v2467
        %v2469 = vcombine.low %v2444, %v2452
        %v2470 = vcombine.high %v2444, %v2452
        %v2472 = vunpack.c.l.s4 1934713408
        %v2473 = vunpack.c.0.s8 %v2472
        %v2474 = vlaneseq
        %v2475 = vshrl.u32 %v2474, 7
        %v2476 = vsub.s32 %v2473, %v2475
        %v2477 = vrot.slane %v2469, %v2476
        %v2479 = vunpack.c.l.s4 1934713408
        %v2480 = vunpack.c.0.s8 %v2479
        %v2481 = vlaneseq
        %v2482 = vshrl.u32 %v2481, 7
        %v2483 = vsub.s32 %v2480, %v2482
        %v2484 = vrot.slane %v2470, %v2483
        %v2485 = vcombine.low %v2460, %v2468
        %v2486 = vcombine.high %v2460, %v2468
        %v2488 = vunpack.c.l.s4 1934713408
        %v2489 = vunpack.c.0.s8 %v2488
        %v2490 = vlaneseq
        %v2491 = vshrl.u32 %v2490, 7
        %v2492 = vsub.s32 %v2489, %v2491
        %v2493 = vrot.slane %v2485, %v2492
        %v2495 = vunpack.c.l.s4 1934713408
        %v2496 = vunpack.c.0.s8 %v2495
        %v2497 = vlaneseq
        %v2498 = vshrl.u32 %v2497, 7
        %v2499 = vsub.s32 %v2496, %v2498
        %v2500 = vrot.slane %v2486, %v2499
        %v2501 = vcombine.low %v2477, %v2493
        %v2502 = vcombine.high %v2477, %v2493
        %v2503 = vcombine.low %v2484, %v2500
        %v2504 = vcombine.high %v2484, %v2500
        %v2505 = vcombine.low %v2429, %v2431
        %v2507 = vunpack.c.l.s4 1983009808
        %v2508 = vunpack.c.0.s8 %v2507
        %v2509 = vlaneseq
        %v2510 = vshrl.u32 %v2509, 7
        %v2511 = vsub.s32 %v2508, %v2510
        %v2512 = vrot.slane %v2505, %v2511
        %v2513 = vcombine.low %v2430, %v2432
        %v2515 = vunpack.c.l.s4 1983009808
        %v2516 = vunpack.c.0.s8 %v2515
        %v2517 = vlaneseq
        %v2518 = vshrl.u32 %v2517, 7
        %v2519 = vsub.s32 %v2516, %v2518
        %v2520 = vrot.slane %v2513, %v2519
        %v2521 = vcombine.low %v2433, %v2435
        %v2523 = vunpack.c.l.s4 1983009808
        %v2524 = vunpack.c.0.s8 %v2523
        %v2525 = vlaneseq
        %v2526 = vshrl.u32 %v2525, 7
        %v2527 = vsub.s32 %v2524, %v2526
        %v2528 = vrot.slane %v2521, %v2527
        %v2529 = vcombine.low %v2434, %v2436
        %v2531 = vunpack.c.l.s4 1983009808
        %v2532 = vunpack.c.0.s8 %v2531
        %v2533 = vlaneseq
        %v2534 = vshrl.u32 %v2533, 7
        %v2535 = vsub.s32 %v2532, %v2534
        %v2536 = vrot.slane %v2529, %v2535
        %v2537 = vcombine.low %v2512, %v2520
        %v2538 = vcombine.high %v2512, %v2520
        %v2540 = vunpack.c.l.s4 1934713408
        %v2541 = vunpack.c.0.s8 %v2540
        %v2542 = vlaneseq
        %v2543 = vshrl.u32 %v2542, 7
        %v2544 = vsub.s32 %v2541, %v2543
        %v2545 = vrot.slane %v2537, %v2544
        %v2547 = vunpack.c.l.s4 1934713408
        %v2548 = vunpack.c.0.s8 %v2547
        %v2549 = vlaneseq
        %v2550 = vshrl.u32 %v2549, 7
        %v2551 = vsub.s32 %v2548, %v2550
        %v2552 = vrot.slane %v2538, %v2551
        %v2553 = vcombine.low %v2528, %v2536
        %v2554 = vcombine.high %v2528, %v2536
        %v2556 = vunpack.c.l.s4 1934713408
        %v2557 = vunpack.c.0.s8 %v2556
        %v2558 = vlaneseq
        %v2559 = vshrl.u32 %v2558, 7
        %v2560 = vsub.s32 %v2557, %v2559
        %v2561 = vrot.slane %v2553, %v2560
        %v2563 = vunpack.c.l.s4 1934713408
        %v2564 = vunpack.c.0.s8 %v2563
        %v2565 = vlaneseq
        %v2566 = vshrl.u32 %v2565, 7
        %v2567 = vsub.s32 %v2564, %v2566
        %v2568 = vrot.slane %v2554, %v2567
        %v2569 = vcombine.low %v2545, %v2561
        %v2570 = vcombine.high %v2545, %v2561
        %v2571 = vcombine.low %v2552, %v2568
        %v2572 = vcombine.high %v2552, %v2568
        %2575 = vrot.lane.b32.xlu0 %v2502, 2
        %v2576 = vpop.permute.xlu0 %2575
        %2577 = vrot.lane.b32.xlu0 %v2570, 2
        %v2578 = vpop.permute.xlu0 %2577
        %2583 = vrot.lane.b32.xlu0 %v2503, 4
        %v2584 = vpop.permute.xlu0 %2583
        %2585 = vrot.lane.b32.xlu0 %v2571, 4
        %v2586 = vpop.permute.xlu0 %2585
        %2591 = vrot.lane.b32.xlu0 %v2504, 6
        %v2592 = vpop.permute.xlu0 %2591
        %2593 = vrot.lane.b32.xlu0 %v2572, 6
        %v2594 = vpop.permute.xlu0 %2593
        %v2597 = vsel %vm916, %v2501, %v2576
        %v2598 = vsel %vm916, %v2569, %v2578
        %v2599 = vsel %vm919, %v2597, %v2584
        %v2600 = vsel %vm919, %v2598, %v2586
        %v2601 = vsel %vm922, %v2599, %v2592
        %v2602 = vsel %vm922, %v2600, %v2594
        %s2604 = sor.u32 256, 25
        %2605 = vbcast.lane.b32.xlu0 %v486, %s2604
        %v2606 = vpop.permute.xlu0 %2605
        %s2608 = sor.u32 256, 25
        %2609 = vbcast.lane.b32.xlu0 %v494, %s2608
        %v2610 = vpop.permute.xlu0 %2609
        %s2612 = sor.u32 256, 25
        %2613 = vbcast.lane.b32.xlu0 %v502, %s2612
        %v2614 = vpop.permute.xlu0 %2613
        %s2616 = sor.u32 256, 25
        %2617 = vbcast.lane.b32.xlu0 %v510, %s2616
        %v2618 = vpop.permute.xlu0 %2617
        %s2620 = sor.u32 256, 25
        %2621 = vbcast.lane.b32.xlu0 %v518, %s2620
        %v2622 = vpop.permute.xlu0 %2621
        %s2624 = sor.u32 256, 25
        %2625 = vbcast.lane.b32.xlu0 %v526, %s2624
        %v2626 = vpop.permute.xlu0 %2625
        %s2628 = sor.u32 256, 25
        %2629 = vbcast.lane.b32.xlu0 %v534, %s2628
        %v2630 = vpop.permute.xlu0 %2629
        %s2632 = sor.u32 256, 25
        %2633 = vbcast.lane.b32.xlu0 %v542, %s2632
        %v2634 = vpop.permute.xlu0 %2633
        %s2636 = sor.u32 256, 25
        %2637 = vbcast.lane.b32.xlu0 %v550, %s2636
        %v2638 = vpop.permute.xlu0 %2637
        %s2640 = sor.u32 256, 25
        %2641 = vbcast.lane.b32.xlu0 %v558, %s2640
        %v2642 = vpop.permute.xlu0 %2641
        %s2644 = sor.u32 256, 25
        %2645 = vbcast.lane.b32.xlu0 %v566, %s2644
        %v2646 = vpop.permute.xlu0 %2645
        %s2648 = sor.u32 256, 25
        %2649 = vbcast.lane.b32.xlu0 %v574, %s2648
        %v2650 = vpop.permute.xlu0 %2649
        %s2652 = sor.u32 256, 25
        %2653 = vbcast.lane.b32.xlu0 %v582, %s2652
        %v2654 = vpop.permute.xlu0 %2653
        %s2656 = sor.u32 256, 25
        %2657 = vbcast.lane.b32.xlu0 %v590, %s2656
        %v2658 = vpop.permute.xlu0 %2657
        %s2660 = sor.u32 256, 25
        %2661 = vbcast.lane.b32.xlu0 %v598, %s2660
        %v2662 = vpop.permute.xlu0 %2661
        %s2664 = sor.u32 256, 25
        %2665 = vbcast.lane.b32.xlu0 %v606, %s2664
        %v2666 = vpop.permute.xlu0 %2665
        %s2668 = sor.u32 256, 25
        %2669 = vbcast.lane.b32.xlu0 %v614, %s2668
        %v2670 = vpop.permute.xlu0 %2669
        %s2672 = sor.u32 256, 25
        %2673 = vbcast.lane.b32.xlu0 %v622, %s2672
        %v2674 = vpop.permute.xlu0 %2673
        %s2676 = sor.u32 256, 25
        %2677 = vbcast.lane.b32.xlu0 %v630, %s2676
        %v2678 = vpop.permute.xlu0 %2677
        %s2680 = sor.u32 256, 25
        %2681 = vbcast.lane.b32.xlu0 %v638, %s2680
        %v2682 = vpop.permute.xlu0 %2681
        %s2684 = sor.u32 256, 25
        %2685 = vbcast.lane.b32.xlu0 %v646, %s2684
        %v2686 = vpop.permute.xlu0 %2685
        %s2688 = sor.u32 256, 25
        %2689 = vbcast.lane.b32.xlu0 %v654, %s2688
        %v2690 = vpop.permute.xlu0 %2689
        %s2692 = sor.u32 256, 25
        %2693 = vbcast.lane.b32.xlu0 %v662, %s2692
        %v2694 = vpop.permute.xlu0 %2693
        %s2696 = sor.u32 256, 25
        %2697 = vbcast.lane.b32.xlu0 %v670, %s2696
        %v2698 = vpop.permute.xlu0 %2697
        %s2700 = sor.u32 256, 25
        %2701 = vbcast.lane.b32.xlu0 %v678, %s2700
        %v2702 = vpop.permute.xlu0 %2701
        %s2704 = sor.u32 256, 25
        %2705 = vbcast.lane.b32.xlu0 %v686, %s2704
        %v2706 = vpop.permute.xlu0 %2705
        %s2708 = sor.u32 256, 25
        %2709 = vbcast.lane.b32.xlu0 %v694, %s2708
        %v2710 = vpop.permute.xlu0 %2709
        %s2712 = sor.u32 256, 25
        %2713 = vbcast.lane.b32.xlu0 %v702, %s2712
        %v2714 = vpop.permute.xlu0 %2713
        %s2716 = sor.u32 256, 25
        %2717 = vbcast.lane.b32.xlu0 %v710, %s2716
        %v2718 = vpop.permute.xlu0 %2717
        %s2720 = sor.u32 256, 25
        %2721 = vbcast.lane.b32.xlu0 %v718, %s2720
        %v2722 = vpop.permute.xlu0 %2721
        %s2724 = sor.u32 256, 25
        %2725 = vbcast.lane.b32.xlu0 %v726, %s2724
        %v2726 = vpop.permute.xlu0 %2725
        %s2728 = sor.u32 256, 25
        %2729 = vbcast.lane.b32.xlu0 %v734, %s2728
        %v2730 = vpop.permute.xlu0 %2729
        %v2731 = vsel %vm739, %v2606, %v2670
        %v2732 = vsel %vm739, %v2610, %v2674
        %v2733 = vsel %vm739, %v2614, %v2678
        %v2734 = vsel %vm739, %v2618, %v2682
        %v2735 = vsel %vm739, %v2622, %v2686
        %v2736 = vsel %vm739, %v2626, %v2690
        %v2737 = vsel %vm739, %v2630, %v2694
        %v2738 = vsel %vm739, %v2634, %v2698
        %v2739 = vsel %vm739, %v2638, %v2702
        %v2740 = vsel %vm739, %v2642, %v2706
        %v2741 = vsel %vm739, %v2646, %v2710
        %v2742 = vsel %vm739, %v2650, %v2714
        %v2743 = vsel %vm739, %v2654, %v2718
        %v2744 = vsel %vm739, %v2658, %v2722
        %v2745 = vsel %vm739, %v2662, %v2726
        %v2746 = vsel %vm739, %v2666, %v2730
        %v2747 = vcombine.low %v2731, %v2733
        %v2749 = vunpack.c.l.s4 1983009808
        %v2750 = vunpack.c.0.s8 %v2749
        %v2751 = vlaneseq
        %v2752 = vshrl.u32 %v2751, 7
        %v2753 = vsub.s32 %v2750, %v2752
        %v2754 = vrot.slane %v2747, %v2753
        %v2755 = vcombine.low %v2732, %v2734
        %v2757 = vunpack.c.l.s4 1983009808
        %v2758 = vunpack.c.0.s8 %v2757
        %v2759 = vlaneseq
        %v2760 = vshrl.u32 %v2759, 7
        %v2761 = vsub.s32 %v2758, %v2760
        %v2762 = vrot.slane %v2755, %v2761
        %v2763 = vcombine.low %v2735, %v2737
        %v2765 = vunpack.c.l.s4 1983009808
        %v2766 = vunpack.c.0.s8 %v2765
        %v2767 = vlaneseq
        %v2768 = vshrl.u32 %v2767, 7
        %v2769 = vsub.s32 %v2766, %v2768
        %v2770 = vrot.slane %v2763, %v2769
        %v2771 = vcombine.low %v2736, %v2738
        %v2773 = vunpack.c.l.s4 1983009808
        %v2774 = vunpack.c.0.s8 %v2773
        %v2775 = vlaneseq
        %v2776 = vshrl.u32 %v2775, 7
        %v2777 = vsub.s32 %v2774, %v2776
        %v2778 = vrot.slane %v2771, %v2777
        %v2779 = vcombine.low %v2754, %v2762
        %v2780 = vcombine.high %v2754, %v2762
        %v2782 = vunpack.c.l.s4 1934713408
        %v2783 = vunpack.c.0.s8 %v2782
        %v2784 = vlaneseq
        %v2785 = vshrl.u32 %v2784, 7
        %v2786 = vsub.s32 %v2783, %v2785
        %v2787 = vrot.slane %v2779, %v2786
        %v2789 = vunpack.c.l.s4 1934713408
        %v2790 = vunpack.c.0.s8 %v2789
        %v2791 = vlaneseq
        %v2792 = vshrl.u32 %v2791, 7
        %v2793 = vsub.s32 %v2790, %v2792
        %v2794 = vrot.slane %v2780, %v2793
        %v2795 = vcombine.low %v2770, %v2778
        %v2796 = vcombine.high %v2770, %v2778
        %v2798 = vunpack.c.l.s4 1934713408
        %v2799 = vunpack.c.0.s8 %v2798
        %v2800 = vlaneseq
        %v2801 = vshrl.u32 %v2800, 7
        %v2802 = vsub.s32 %v2799, %v2801
        %v2803 = vrot.slane %v2795, %v2802
        %v2805 = vunpack.c.l.s4 1934713408
        %v2806 = vunpack.c.0.s8 %v2805
        %v2807 = vlaneseq
        %v2808 = vshrl.u32 %v2807, 7
        %v2809 = vsub.s32 %v2806, %v2808
        %v2810 = vrot.slane %v2796, %v2809
        %v2811 = vcombine.low %v2787, %v2803
        %v2812 = vcombine.high %v2787, %v2803
        %v2813 = vcombine.low %v2794, %v2810
        %v2814 = vcombine.high %v2794, %v2810
        %v2815 = vcombine.low %v2739, %v2741
        %v2817 = vunpack.c.l.s4 1983009808
        %v2818 = vunpack.c.0.s8 %v2817
        %v2819 = vlaneseq
        %v2820 = vshrl.u32 %v2819, 7
        %v2821 = vsub.s32 %v2818, %v2820
        %v2822 = vrot.slane %v2815, %v2821
        %v2823 = vcombine.low %v2740, %v2742
        %v2825 = vunpack.c.l.s4 1983009808
        %v2826 = vunpack.c.0.s8 %v2825
        %v2827 = vlaneseq
        %v2828 = vshrl.u32 %v2827, 7
        %v2829 = vsub.s32 %v2826, %v2828
        %v2830 = vrot.slane %v2823, %v2829
        %v2831 = vcombine.low %v2743, %v2745
        %v2833 = vunpack.c.l.s4 1983009808
        %v2834 = vunpack.c.0.s8 %v2833
        %v2835 = vlaneseq
        %v2836 = vshrl.u32 %v2835, 7
        %v2837 = vsub.s32 %v2834, %v2836
        %v2838 = vrot.slane %v2831, %v2837
        %v2839 = vcombine.low %v2744, %v2746
        %v2841 = vunpack.c.l.s4 1983009808
        %v2842 = vunpack.c.0.s8 %v2841
        %v2843 = vlaneseq
        %v2844 = vshrl.u32 %v2843, 7
        %v2845 = vsub.s32 %v2842, %v2844
        %v2846 = vrot.slane %v2839, %v2845
        %v2847 = vcombine.low %v2822, %v2830
        %v2848 = vcombine.high %v2822, %v2830
        %v2850 = vunpack.c.l.s4 1934713408
        %v2851 = vunpack.c.0.s8 %v2850
        %v2852 = vlaneseq
        %v2853 = vshrl.u32 %v2852, 7
        %v2854 = vsub.s32 %v2851, %v2853
        %v2855 = vrot.slane %v2847, %v2854
        %v2857 = vunpack.c.l.s4 1934713408
        %v2858 = vunpack.c.0.s8 %v2857
        %v2859 = vlaneseq
        %v2860 = vshrl.u32 %v2859, 7
        %v2861 = vsub.s32 %v2858, %v2860
        %v2862 = vrot.slane %v2848, %v2861
        %v2863 = vcombine.low %v2838, %v2846
        %v2864 = vcombine.high %v2838, %v2846
        %v2866 = vunpack.c.l.s4 1934713408
        %v2867 = vunpack.c.0.s8 %v2866
        %v2868 = vlaneseq
        %v2869 = vshrl.u32 %v2868, 7
        %v2870 = vsub.s32 %v2867, %v2869
        %v2871 = vrot.slane %v2863, %v2870
        %v2873 = vunpack.c.l.s4 1934713408
        %v2874 = vunpack.c.0.s8 %v2873
        %v2875 = vlaneseq
        %v2876 = vshrl.u32 %v2875, 7
        %v2877 = vsub.s32 %v2874, %v2876
        %v2878 = vrot.slane %v2864, %v2877
        %v2879 = vcombine.low %v2855, %v2871
        %v2880 = vcombine.high %v2855, %v2871
        %v2881 = vcombine.low %v2862, %v2878
        %v2882 = vcombine.high %v2862, %v2878
        %2885 = vrot.lane.b32.xlu0 %v2812, 2
        %v2886 = vpop.permute.xlu0 %2885
        %2887 = vrot.lane.b32.xlu0 %v2880, 2
        %v2888 = vpop.permute.xlu0 %2887
        %2893 = vrot.lane.b32.xlu0 %v2813, 4
        %v2894 = vpop.permute.xlu0 %2893
        %2895 = vrot.lane.b32.xlu0 %v2881, 4
        %v2896 = vpop.permute.xlu0 %2895
        %2901 = vrot.lane.b32.xlu0 %v2814, 6
        %v2902 = vpop.permute.xlu0 %2901
        %2903 = vrot.lane.b32.xlu0 %v2882, 6
        %v2904 = vpop.permute.xlu0 %2903
        %v2907 = vsel %vm916, %v2811, %v2886
        %v2908 = vsel %vm916, %v2879, %v2888
        %v2909 = vsel %vm919, %v2907, %v2894
        %v2910 = vsel %vm919, %v2908, %v2896
        %v2911 = vsel %vm922, %v2909, %v2902
        %v2912 = vsel %vm922, %v2910, %v2904
        %s2914 = sor.u32 256, 25
        %2915 = vbcast.lane.b32.xlu0 %v928, %s2914
        %v2916 = vpop.permute.xlu0 %2915
        %s2918 = sor.u32 256, 25
        %2919 = vbcast.lane.b32.xlu0 %v936, %s2918
        %v2920 = vpop.permute.xlu0 %2919
        %s2922 = sor.u32 256, 25
        %2923 = vbcast.lane.b32.xlu0 %v944, %s2922
        %v2924 = vpop.permute.xlu0 %2923
        %s2926 = sor.u32 256, 25
        %2927 = vbcast.lane.b32.xlu0 %v952, %s2926
        %v2928 = vpop.permute.xlu0 %2927
        %s2930 = sor.u32 256, 25
        %2931 = vbcast.lane.b32.xlu0 %v960, %s2930
        %v2932 = vpop.permute.xlu0 %2931
        %s2934 = sor.u32 256, 25
        %2935 = vbcast.lane.b32.xlu0 %v968, %s2934
        %v2936 = vpop.permute.xlu0 %2935
        %s2938 = sor.u32 256, 25
        %2939 = vbcast.lane.b32.xlu0 %v976, %s2938
        %v2940 = vpop.permute.xlu0 %2939
        %s2942 = sor.u32 256, 25
        %2943 = vbcast.lane.b32.xlu0 %v984, %s2942
        %v2944 = vpop.permute.xlu0 %2943
        %s2946 = sor.u32 256, 25
        %2947 = vbcast.lane.b32.xlu0 %v992, %s2946
        %v2948 = vpop.permute.xlu0 %2947
        %s2950 = sor.u32 256, 25
        %2951 = vbcast.lane.b32.xlu0 %v1000, %s2950
        %v2952 = vpop.permute.xlu0 %2951
        %s2954 = sor.u32 256, 25
        %2955 = vbcast.lane.b32.xlu0 %v1008, %s2954
        %v2956 = vpop.permute.xlu0 %2955
        %s2958 = sor.u32 256, 25
        %2959 = vbcast.lane.b32.xlu0 %v1016, %s2958
        %v2960 = vpop.permute.xlu0 %2959
        %s2962 = sor.u32 256, 25
        %2963 = vbcast.lane.b32.xlu0 %v1024, %s2962
        %v2964 = vpop.permute.xlu0 %2963
        %s2966 = sor.u32 256, 25
        %2967 = vbcast.lane.b32.xlu0 %v1032, %s2966
        %v2968 = vpop.permute.xlu0 %2967
        %s2970 = sor.u32 256, 25
        %2971 = vbcast.lane.b32.xlu0 %v1040, %s2970
        %v2972 = vpop.permute.xlu0 %2971
        %s2974 = sor.u32 256, 25
        %2975 = vbcast.lane.b32.xlu0 %v1048, %s2974
        %v2976 = vpop.permute.xlu0 %2975
        %s2978 = sor.u32 256, 25
        %2979 = vbcast.lane.b32.xlu0 %v1056, %s2978
        %v2980 = vpop.permute.xlu0 %2979
        %s2982 = sor.u32 256, 25
        %2983 = vbcast.lane.b32.xlu0 %v1064, %s2982
        %v2984 = vpop.permute.xlu0 %2983
        %s2986 = sor.u32 256, 25
        %2987 = vbcast.lane.b32.xlu0 %v1072, %s2986
        %v2988 = vpop.permute.xlu0 %2987
        %s2990 = sor.u32 256, 25
        %2991 = vbcast.lane.b32.xlu0 %v1080, %s2990
        %v2992 = vpop.permute.xlu0 %2991
        %s2994 = sor.u32 256, 25
        %2995 = vbcast.lane.b32.xlu0 %v1088, %s2994
        %v2996 = vpop.permute.xlu0 %2995
        %s2998 = sor.u32 256, 25
        %2999 = vbcast.lane.b32.xlu0 %v1096, %s2998
        %v3000 = vpop.permute.xlu0 %2999
        %s3002 = sor.u32 256, 25
        %3003 = vbcast.lane.b32.xlu0 %v1104, %s3002
        %v3004 = vpop.permute.xlu0 %3003
        %s3006 = sor.u32 256, 25
        %3007 = vbcast.lane.b32.xlu0 %v1112, %s3006
        %v3008 = vpop.permute.xlu0 %3007
        %s3010 = sor.u32 256, 25
        %3011 = vbcast.lane.b32.xlu0 %v1120, %s3010
        %v3012 = vpop.permute.xlu0 %3011
        %s3014 = sor.u32 256, 25
        %3015 = vbcast.lane.b32.xlu0 %v1128, %s3014
        %v3016 = vpop.permute.xlu0 %3015
        %s3018 = sor.u32 256, 25
        %3019 = vbcast.lane.b32.xlu0 %v1136, %s3018
        %v3020 = vpop.permute.xlu0 %3019
        %s3022 = sor.u32 256, 25
        %3023 = vbcast.lane.b32.xlu0 %v1144, %s3022
        %v3024 = vpop.permute.xlu0 %3023
        %s3026 = sor.u32 256, 25
        %3027 = vbcast.lane.b32.xlu0 %v1152, %s3026
        %v3028 = vpop.permute.xlu0 %3027
        %s3030 = sor.u32 256, 25
        %3031 = vbcast.lane.b32.xlu0 %v1160, %s3030
        %v3032 = vpop.permute.xlu0 %3031
        %s3034 = sor.u32 256, 25
        %3035 = vbcast.lane.b32.xlu0 %v1168, %s3034
        %v3036 = vpop.permute.xlu0 %3035
        %s3038 = sor.u32 256, 25
        %3039 = vbcast.lane.b32.xlu0 %v1176, %s3038
        %v3040 = vpop.permute.xlu0 %3039
        %v3041 = vsel %vm739, %v2916, %v2980
        %v3042 = vsel %vm739, %v2920, %v2984
        %v3043 = vsel %vm739, %v2924, %v2988
        %v3044 = vsel %vm739, %v2928, %v2992
        %v3045 = vsel %vm739, %v2932, %v2996
        %v3046 = vsel %vm739, %v2936, %v3000
        %v3047 = vsel %vm739, %v2940, %v3004
        %v3048 = vsel %vm739, %v2944, %v3008
        %v3049 = vsel %vm739, %v2948, %v3012
        %v3050 = vsel %vm739, %v2952, %v3016
        %v3051 = vsel %vm739, %v2956, %v3020
        %v3052 = vsel %vm739, %v2960, %v3024
        %v3053 = vsel %vm739, %v2964, %v3028
        %v3054 = vsel %vm739, %v2968, %v3032
        %v3055 = vsel %vm739, %v2972, %v3036
        %v3056 = vsel %vm739, %v2976, %v3040
        %v3057 = vcombine.low %v3041, %v3043
        %v3059 = vunpack.c.l.s4 1983009808
        %v3060 = vunpack.c.0.s8 %v3059
        %v3061 = vlaneseq
        %v3062 = vshrl.u32 %v3061, 7
        %v3063 = vsub.s32 %v3060, %v3062
        %v3064 = vrot.slane %v3057, %v3063
        %v3065 = vcombine.low %v3042, %v3044
        %v3067 = vunpack.c.l.s4 1983009808
        %v3068 = vunpack.c.0.s8 %v3067
        %v3069 = vlaneseq
        %v3070 = vshrl.u32 %v3069, 7
        %v3071 = vsub.s32 %v3068, %v3070
        %v3072 = vrot.slane %v3065, %v3071
        %v3073 = vcombine.low %v3045, %v3047
        %v3075 = vunpack.c.l.s4 1983009808
        %v3076 = vunpack.c.0.s8 %v3075
        %v3077 = vlaneseq
        %v3078 = vshrl.u32 %v3077, 7
        %v3079 = vsub.s32 %v3076, %v3078
        %v3080 = vrot.slane %v3073, %v3079
        %v3081 = vcombine.low %v3046, %v3048
        %v3083 = vunpack.c.l.s4 1983009808
        %v3084 = vunpack.c.0.s8 %v3083
        %v3085 = vlaneseq
        %v3086 = vshrl.u32 %v3085, 7
        %v3087 = vsub.s32 %v3084, %v3086
        %v3088 = vrot.slane %v3081, %v3087
        %v3089 = vcombine.low %v3064, %v3072
        %v3090 = vcombine.high %v3064, %v3072
        %v3092 = vunpack.c.l.s4 1934713408
        %v3093 = vunpack.c.0.s8 %v3092
        %v3094 = vlaneseq
        %v3095 = vshrl.u32 %v3094, 7
        %v3096 = vsub.s32 %v3093, %v3095
        %v3097 = vrot.slane %v3089, %v3096
        %v3099 = vunpack.c.l.s4 1934713408
        %v3100 = vunpack.c.0.s8 %v3099
        %v3101 = vlaneseq
        %v3102 = vshrl.u32 %v3101, 7
        %v3103 = vsub.s32 %v3100, %v3102
        %v3104 = vrot.slane %v3090, %v3103
        %v3105 = vcombine.low %v3080, %v3088
        %v3106 = vcombine.high %v3080, %v3088
        %v3108 = vunpack.c.l.s4 1934713408
        %v3109 = vunpack.c.0.s8 %v3108
        %v3110 = vlaneseq
        %v3111 = vshrl.u32 %v3110, 7
        %v3112 = vsub.s32 %v3109, %v3111
        %v3113 = vrot.slane %v3105, %v3112
        %v3115 = vunpack.c.l.s4 1934713408
        %v3116 = vunpack.c.0.s8 %v3115
        %v3117 = vlaneseq
        %v3118 = vshrl.u32 %v3117, 7
        %v3119 = vsub.s32 %v3116, %v3118
        %v3120 = vrot.slane %v3106, %v3119
        %v3121 = vcombine.low %v3097, %v3113
        %v3122 = vcombine.high %v3097, %v3113
        %v3123 = vcombine.low %v3104, %v3120
        %v3124 = vcombine.high %v3104, %v3120
        %v3125 = vcombine.low %v3049, %v3051
        %v3127 = vunpack.c.l.s4 1983009808
        %v3128 = vunpack.c.0.s8 %v3127
        %v3129 = vlaneseq
        %v3130 = vshrl.u32 %v3129, 7
        %v3131 = vsub.s32 %v3128, %v3130
        %v3132 = vrot.slane %v3125, %v3131
        %v3133 = vcombine.low %v3050, %v3052
        %v3135 = vunpack.c.l.s4 1983009808
        %v3136 = vunpack.c.0.s8 %v3135
        %v3137 = vlaneseq
        %v3138 = vshrl.u32 %v3137, 7
        %v3139 = vsub.s32 %v3136, %v3138
        %v3140 = vrot.slane %v3133, %v3139
        %v3141 = vcombine.low %v3053, %v3055
        %v3143 = vunpack.c.l.s4 1983009808
        %v3144 = vunpack.c.0.s8 %v3143
        %v3145 = vlaneseq
        %v3146 = vshrl.u32 %v3145, 7
        %v3147 = vsub.s32 %v3144, %v3146
        %v3148 = vrot.slane %v3141, %v3147
        %v3149 = vcombine.low %v3054, %v3056
        %v3151 = vunpack.c.l.s4 1983009808
        %v3152 = vunpack.c.0.s8 %v3151
        %v3153 = vlaneseq
        %v3154 = vshrl.u32 %v3153, 7
        %v3155 = vsub.s32 %v3152, %v3154
        %v3156 = vrot.slane %v3149, %v3155
        %v3157 = vcombine.low %v3132, %v3140
        %v3158 = vcombine.high %v3132, %v3140
        %v3160 = vunpack.c.l.s4 1934713408
        %v3161 = vunpack.c.0.s8 %v3160
        %v3162 = vlaneseq
        %v3163 = vshrl.u32 %v3162, 7
        %v3164 = vsub.s32 %v3161, %v3163
        %v3165 = vrot.slane %v3157, %v3164
        %v3167 = vunpack.c.l.s4 1934713408
        %v3168 = vunpack.c.0.s8 %v3167
        %v3169 = vlaneseq
        %v3170 = vshrl.u32 %v3169, 7
        %v3171 = vsub.s32 %v3168, %v3170
        %v3172 = vrot.slane %v3158, %v3171
        %v3173 = vcombine.low %v3148, %v3156
        %v3174 = vcombine.high %v3148, %v3156
        %v3176 = vunpack.c.l.s4 1934713408
        %v3177 = vunpack.c.0.s8 %v3176
        %v3178 = vlaneseq
        %v3179 = vshrl.u32 %v3178, 7
        %v3180 = vsub.s32 %v3177, %v3179
        %v3181 = vrot.slane %v3173, %v3180
        %v3183 = vunpack.c.l.s4 1934713408
        %v3184 = vunpack.c.0.s8 %v3183
        %v3185 = vlaneseq
        %v3186 = vshrl.u32 %v3185, 7
        %v3187 = vsub.s32 %v3184, %v3186
        %v3188 = vrot.slane %v3174, %v3187
        %v3189 = vcombine.low %v3165, %v3181
        %v3190 = vcombine.high %v3165, %v3181
        %v3191 = vcombine.low %v3172, %v3188
        %v3192 = vcombine.high %v3172, %v3188
        %3195 = vrot.lane.b32.xlu0 %v3122, 2
        %v3196 = vpop.permute.xlu0 %3195
        %3197 = vrot.lane.b32.xlu0 %v3190, 2
        %v3198 = vpop.permute.xlu0 %3197
        %3203 = vrot.lane.b32.xlu0 %v3123, 4
        %v3204 = vpop.permute.xlu0 %3203
        %3205 = vrot.lane.b32.xlu0 %v3191, 4
        %v3206 = vpop.permute.xlu0 %3205
        %3211 = vrot.lane.b32.xlu0 %v3124, 6
        %v3212 = vpop.permute.xlu0 %3211
        %3213 = vrot.lane.b32.xlu0 %v3192, 6
        %v3214 = vpop.permute.xlu0 %3213
        %v3217 = vsel %vm916, %v3121, %v3196
        %v3218 = vsel %vm916, %v3189, %v3198
        %v3219 = vsel %vm919, %v3217, %v3204
        %v3220 = vsel %vm919, %v3218, %v3206
        %v3221 = vsel %vm922, %v3219, %v3212
        %v3222 = vsel %vm922, %v3220, %v3214
        %3225 = vrot.lane.b32.xlu0 %v923, 11
        %v3226 = vpop.permute.xlu0 %3225
        %3227 = vrot.lane.b32.xlu0 %v924, 11
        %v3228 = vpop.permute.xlu0 %3227
        %3233 = vrot.lane.b32.xlu0 %v1361, 21
        %v3234 = vpop.permute.xlu0 %3233
        %3235 = vrot.lane.b32.xlu0 %v1362, 21
        %v3236 = vpop.permute.xlu0 %3235
        %3241 = vrot.lane.b32.xlu0 %v1671, 31
        %v3242 = vpop.permute.xlu0 %3241
        %3243 = vrot.lane.b32.xlu0 %v1672, 31
        %v3244 = vpop.permute.xlu0 %3243
        %3249 = vrot.lane.b32.xlu0 %v1981, 41
        %v3250 = vpop.permute.xlu0 %3249
        %3251 = vrot.lane.b32.xlu0 %v1982, 41
        %v3252 = vpop.permute.xlu0 %3251
        %3257 = vrot.lane.b32.xlu0 %v2291, 51
        %v3258 = vpop.permute.xlu0 %3257
        %3259 = vrot.lane.b32.xlu0 %v2292, 51
        %v3260 = vpop.permute.xlu0 %3259
        %3265 = vrot.lane.b32.xlu0 %v2601, 61
        %v3266 = vpop.permute.xlu0 %3265
        %3267 = vrot.lane.b32.xlu0 %v2602, 61
        %v3268 = vpop.permute.xlu0 %3267
        %3273 = vrot.lane.b32.xlu0 %v2911, 71
        %v3274 = vpop.permute.xlu0 %3273
        %3275 = vrot.lane.b32.xlu0 %v2912, 71
        %v3276 = vpop.permute.xlu0 %3275
        %3281 = vrot.lane.b32.xlu0 %v3221, 81
        %v3282 = vpop.permute.xlu0 %3281
        %3283 = vrot.lane.b32.xlu0 %v3222, 81
        %v3284 = vpop.permute.xlu0 %3283
        %vm3287 = vcmask 89088
        %v3288 = vsel %vm3287, 0.0, %v3226
        %v3289 = vsel %vm3287, 0.0, %v3228
        %vm3290 = vcmask 154624
        %v3291 = vsel %vm3290, %v3288, 0.0
        %v3292 = vsel %vm3290, %v3289, 0.0
        %vm3293 = vcmask 171008
        %v3294 = vsel %vm3293, %v3291, %v3234
        %v3295 = vsel %vm3293, %v3292, %v3236
        %vm3296 = vcmask 236544
        %v3297 = vsel %vm3296, %v3294, 0.0
        %v3298 = vsel %vm3296, %v3295, 0.0
        %vm3299 = vcmask 252928
        %v3300 = vsel %vm3299, %v3297, %v3242
        %v3301 = vsel %vm3299, %v3298, %v3244
        %vm3302 = vcmask 318464
        %v3303 = vsel %vm3302, %v3300, 0.0
        %v3304 = vsel %vm3302, %v3301, 0.0
        %vm3305 = vcmask 334848
        %v3306 = vsel %vm3305, %v3303, %v3250
        %v3307 = vsel %vm3305, %v3304, %v3252
        %vm3308 = vcmask 400384
        %v3309 = vsel %vm3308, %v3306, 0.0
        %v3310 = vsel %vm3308, %v3307, 0.0
        %vm3311 = vcmask 416768
        %v3312 = vsel %vm3311, %v3309, %v3258
        %v3313 = vsel %vm3311, %v3310, %v3260
        %vm3314 = vcmask 482304
        %v3315 = vsel %vm3314, %v3312, 0.0
        %v3316 = vsel %vm3314, %v3313, 0.0
        %vm3317 = vcmask 498688
        %v3318 = vsel %vm3317, %v3315, %v3266
        %v3319 = vsel %vm3317, %v3316, %v3268
        %vm3320 = vcmask 564224
        %v3321 = vsel %vm3320, %v3318, 0.0
        %v3322 = vsel %vm3320, %v3319, 0.0
        %vm3323 = vcmask 580608
        %v3324 = vsel %vm3323, %v3321, %v3274
        %v3325 = vsel %vm3323, %v3322, %v3276
        %vm3326 = vcmask 646144
        %v3327 = vsel %vm3326, %v3324, 0.0
        %v3328 = vsel %vm3326, %v3325, 0.0
        %vm3329 = vcmask 662528
        %v3330 = vsel %vm3329, %v3327, %v3282
        %v3331 = vsel %vm3329, %v3328, %v3284
        %vm3332 = vcmask 728064
        %v3333 = vsel %vm3332, %v3330, 0.0
        %v3334 = vsel %vm3332, %v3331, 0.0
        %vm3335 = vcmask 1048352
        %3336 = vrot.lane.b32.xlu0 %v3333, 100
        %v3337 = vpop.permute.xlu0 %3336
        %v3338 = vsel %vm3335, %v3337, %v3333
        %3339 = vrot.lane.b32.xlu0 %v3334, 100
        %v3340 = vpop.permute.xlu0 %3339
        %v3341 = vsel %vm3335, %v3340, %v3334
        %3342 = vrot.lane.b32.xlu0 %v3338, 100
        %v3343 = vpop.permute.xlu0 %3342
        %3344 = vrot.lane.b32.xlu0 %v3341, 100
        %v3345 = vpop.permute.xlu0 %3344
        %v3346 = vsel %vm3335, %v3343, %v3333
        %v3347 = vsel %vm3335, %v3345, %v3334
        %3352 = vrot.lane.b32.xlu0 %v3346, 127
        %v3353 = vpop.permute.xlu0 %3352
        %3354 = vrot.lane.b32.xlu0 %v3343, 127
        %v3355 = vpop.permute.xlu0 %3354
        %3356 = vrot.lane.b32.xlu0 %v3347, 127
        %v3357 = vpop.permute.xlu0 %3356
        %3358 = vrot.lane.b32.xlu0 %v3345, 127
        %v3359 = vpop.permute.xlu0 %3358
        %vm3360 = vcmask 1039360
        %v3361 = vsel %vm3360, %v3353, %v3355
        %v3362 = vsel %vm3360, %v3357, %v3359
        %3363 = vrot.lane.b32.xlu0 %v3346, 126
        %v3364 = vpop.permute.xlu0 %3363
        %3365 = vrot.lane.b32.xlu0 %v3343, 126
        %v3366 = vpop.permute.xlu0 %3365
        %3367 = vrot.lane.b32.xlu0 %v3347, 126
        %v3368 = vpop.permute.xlu0 %3367
        %3369 = vrot.lane.b32.xlu0 %v3345, 126
        %v3370 = vpop.permute.xlu0 %3369
        %vm3371 = vcmask 1031168
        %v3372 = vsel %vm3371, %v3364, %v3366
        %v3373 = vsel %vm3371, %v3368, %v3370
        %3374 = vrot.lane.b32.xlu0 %v3346, 118
        %v3375 = vpop.permute.xlu0 %3374
        %3376 = vrot.lane.b32.xlu0 %v3343, 118
        %v3377 = vpop.permute.xlu0 %3376
        %3378 = vrot.lane.b32.xlu0 %v3347, 118
        %v3379 = vpop.permute.xlu0 %3378
        %3380 = vrot.lane.b32.xlu0 %v3345, 118
        %v3381 = vpop.permute.xlu0 %3380
        %vm3382 = vcmask 965632
        %v3383 = vsel %vm3382, %v3375, %v3377
        %v3384 = vsel %vm3382, %v3379, %v3381
        %3387 = vrot.lane.b32.xlu0 %v3333, 89
        %v3388 = vpop.permute.xlu0 %3387
        %3389 = vrot.lane.b32.xlu0 %v3334, 89
        %v3390 = vpop.permute.xlu0 %3389
        %3391 = vrot.lane.b32.xlu0 %v3346, 88
        %v3392 = vpop.permute.xlu0 %3391
        %3393 = vrot.lane.b32.xlu0 %v3347, 88
        %v3394 = vpop.permute.xlu0 %3393
        %3395 = vrot.lane.b32.xlu0 %v3346, 80
        %v3396 = vpop.permute.xlu0 %3395
        %3397 = vrot.lane.b32.xlu0 %v3347, 80
        %v3398 = vpop.permute.xlu0 %3397
        %3399 = vrot.lane.b32.xlu0 %v3346, 79
        %v3400 = vpop.permute.xlu0 %3399
        %3401 = vrot.lane.b32.xlu0 %v3347, 79
        %v3402 = vpop.permute.xlu0 %3401
        %3403 = vrot.lane.b32.xlu0 %v3346, 78
        %v3404 = vpop.permute.xlu0 %3403
        %3405 = vrot.lane.b32.xlu0 %v3347, 78
        %v3406 = vpop.permute.xlu0 %3405
        %v3407 = vld [vmem:[%s4] sm:$0xff]
        %v3408 = vld [vmem:[%s4 + $0x8] sm:$0xff]
        %3409 = vrot.lane.b32.xlu0 %v3346, 39
        %v3410 = vpop.permute.xlu0 %3409
        %3411 = vrot.lane.b32.xlu0 %v3343, 39
        %v3412 = vpop.permute.xlu0 %3411
        %3413 = vrot.lane.b32.xlu0 %v3347, 39
        %v3414 = vpop.permute.xlu0 %3413
        %3415 = vrot.lane.b32.xlu0 %v3345, 39
        %v3416 = vpop.permute.xlu0 %3415
        %3417 = vrot.lane.b32.xlu0 %v3361, 39
        %v3418 = vpop.permute.xlu0 %3417
        %3419 = vrot.lane.b32.xlu0 %v3355, 39
        %v3420 = vpop.permute.xlu0 %3419
        %3421 = vrot.lane.b32.xlu0 %v3362, 39
        %v3422 = vpop.permute.xlu0 %3421
        %3423 = vrot.lane.b32.xlu0 %v3359, 39
        %v3424 = vpop.permute.xlu0 %3423
        %3425 = vrot.lane.b32.xlu0 %v3372, 39
        %v3426 = vpop.permute.xlu0 %3425
        %3427 = vrot.lane.b32.xlu0 %v3366, 39
        %v3428 = vpop.permute.xlu0 %3427
        %3429 = vrot.lane.b32.xlu0 %v3373, 39
        %v3430 = vpop.permute.xlu0 %3429
        %3431 = vrot.lane.b32.xlu0 %v3370, 39
        %v3432 = vpop.permute.xlu0 %3431
        %3433 = vrot.lane.b32.xlu0 %v3383, 39
        %v3434 = vpop.permute.xlu0 %3433
        %3435 = vrot.lane.b32.xlu0 %v3377, 39
        %v3436 = vpop.permute.xlu0 %3435
        %3437 = vrot.lane.b32.xlu0 %v3384, 39
        %v3438 = vpop.permute.xlu0 %3437
        %3439 = vrot.lane.b32.xlu0 %v3381, 39
        %v3440 = vpop.permute.xlu0 %3439
        %3441 = vrot.lane.b32.xlu0 %v3388, 39
        %v3442 = vpop.permute.xlu0 %3441
        %3443 = vrot.lane.b32.xlu0 %v3390, 39
        %v3444 = vpop.permute.xlu0 %3443
        %3445 = vrot.lane.b32.xlu0 %v3392, 39
        %v3446 = vpop.permute.xlu0 %3445
        %3447 = vrot.lane.b32.xlu0 %v3394, 39
        %v3448 = vpop.permute.xlu0 %3447
        %3449 = vrot.lane.b32.xlu0 %v3396, 39
        %v3450 = vpop.permute.xlu0 %3449
        %3451 = vrot.lane.b32.xlu0 %v3398, 39
        %v3452 = vpop.permute.xlu0 %3451
        %3453 = vrot.lane.b32.xlu0 %v3400, 39
        %v3454 = vpop.permute.xlu0 %3453
        %3455 = vrot.lane.b32.xlu0 %v3402, 39
        %v3456 = vpop.permute.xlu0 %3455
        %3457 = vrot.lane.b32.xlu0 %v3404, 39
        %v3458 = vpop.permute.xlu0 %3457
        %3459 = vrot.lane.b32.xlu0 %v3406, 39
        %v3460 = vpop.permute.xlu0 %3459
        %v3461 = vsel %vm3302, %v3410, %v3412
        %v3462 = vsel %vm3302, %v3414, %v3416
        %v3463 = vsel %vm3302, %v3418, %v3420
        %v3464 = vsel %vm3302, %v3422, %v3424
        %v3465 = vsel %vm3302, %v3426, %v3428
        %v3466 = vsel %vm3302, %v3430, %v3432
        %v3467 = vsel %vm3302, %v3434, %v3436
        %v3468 = vsel %vm3302, %v3438, %v3440
        %v3488 = vsel %vm353, %v3408, 0
        %3490 = vmatprep.subr.mxu0 0.0
        %3491 = vmatpush1.msra.mxu0 %v3461
        %3492 = vmatprep.subr.mxu0 0.0
        %3493 = vmatpush1.msra.mxu0 %v3462
        %3494 = vmatprep.subr.mxu0 0.0
        %3495 = vmatpush1.msra.mxu0 %v3463
        %3496 = vmatprep.subr.mxu0 0.0
        %3497 = vmatpush1.msra.mxu0 %v3464
        %3498 = vmatprep.subr.mxu0 0.0
        %3499 = vmatpush1.msra.mxu0 %v3465
        %3500 = vmatprep.subr.mxu0 0.0
        %3501 = vmatpush1.msra.mxu0 %v3466
        %3502 = vmatprep.subr.mxu0 0.0
        %3503 = vmatpush1.msra.mxu0 %v3467
        %3504 = vmatprep.subr.mxu0 0.0
        %3505 = vmatpush1.msra.mxu0 %v3468
        %3506 = vmatprep.subr.mxu0 0.0
        %3507 = vmatpush1.msra.mxu0 %v3442
        %3508 = vmatprep.subr.mxu0 0.0
        %3509 = vmatpush1.msra.mxu0 %v3444
        %3510 = vmatprep.subr.mxu0 0.0
        %3511 = vmatpush1.msra.mxu0 %v3446
        %3512 = vmatprep.subr.mxu0 0.0
        %3513 = vmatpush1.msra.mxu0 %v3448
        %3514 = vmatprep.subr.mxu0 0.0
        %3515 = vmatpush1.msra.mxu0 %v3450
        %3516 = vmatprep.subr.mxu0 0.0
        %3517 = vmatpush1.msra.mxu0 %v3452
        %3518 = vmatprep.subr.mxu0 0.0
        %3519 = vmatpush1.msra.mxu0 %v3454
        %3520 = vmatprep.subr.mxu0 0.0
        %3521 = vmatpush1.msra.mxu0 %v3456
        %3522 = vmatprep.subr.mxu0 0.0
        %3523 = vmatpush1.msra.mxu0 %v3458
        %3524 = vmatprep.subr.mxu0 0.0
        %3525 = vmatpush1.msra.mxu0 %v3460
        %3526 = vmatprep.subr.mxu0 0.0
        %3527 = vmatpush1.msra.mxu0 0.0
        %3528 = vmatprep.subr.mxu0 0.0
        %3529 = vmatpush1.msra.mxu0 0.0
        %3530 = vmatprep.subr.mxu0 0.0
        %3531 = vmatpush1.msra.mxu0 0.0
        %3532 = vmatprep.subr.mxu0 0.0
        %3533 = vmatpush1.msra.mxu0 0.0
        %3534 = vmatprep.subr.mxu0 0.0
        %3535 = vmatpush1.msra.mxu0 0.0
        %3536 = vmatprep.subr.mxu0 0.0
        %3537 = vmatpush1.msra.mxu0 0.0
        %3538 = vmatprep.subr.mxu0 0.0
        %3539 = vmatpush1.msra.mxu0 0.0
        %3540 = vmatprep.subr.mxu0 0.0
        %3541 = vmatpush1.msra.mxu0 0.0
        %3542 = vmatprep.subr.mxu0 0.0
        %3543 = vmatpush1.msra.mxu0 0.0
        %3544 = vmatprep.subr.mxu0 0.0
        %3545 = vmatpush1.msra.mxu0 0.0
        %3546 = vmatprep.subr.mxu0 0.0
        %3547 = vmatpush1.msra.mxu0 0.0
        %3548 = vmatprep.subr.mxu0 0.0
        %3549 = vmatpush1.msra.mxu0 0.0
        %3550 = vmatprep.subr.mxu0 0.0
        %3551 = vmatpush1.msra.mxu0 0.0
        %3552 = vmatprep.subr.mxu0 0.0
        %3553 = vmatpush1.msra.mxu0 0.0
        %3554 = vmatprep.mubr.f32.mxu0 %v3488
        %3555 = vmatmul.mubr.f32.gmra.mrb[0].mxu0 %v3407
        %v3556 = vpop.f32.mrb[0].mxu0
        %v3557 = vadd.f32 0.0, %v3556
        %v3558 = vpop.f32.mrb[0].mxu0
        %3559 = vdwg.mxu0
        %v3560 = vld [vmem:[%s5] sm:$0xff]
        %3562 = vset.pattern.permute.xlu0 0
        %3563 = vperm.xlu0 %3562, %v3560
        %v3564 = vpop.permute.xlu0 %3563
        %v3566 = vmul.f32 %v3557, %v3564
        %3567 = vset.pattern.permute.xlu0 1
        %3568 = vperm.xlu0 %3567, %v3560
        %v3569 = vpop.permute.xlu0 %3568
        %v3571 = vadd.f32 %v3566, %v3569
        %v3572 = vmax.f32 %v3571, 0.0
        %v3574 = vlaneseq
        %v3575 = vshrl.u32 %v3574, 7
        %v3576 = vsub.s32 0, %v3575
        %v3577 = vrot.slane %v294, %v3576
        %v3579 = vmul.f32 %v3572, %v3577
        %v3580 = vld [vmem:[%s293] sm:$0xff]
        %v3581 = vadd.f32 %v3579, %v3580
        %vm3582 = vcmask 818176
        %3583 = vst.msk [vmem:[%s284] sm:$0xff] %vm3582, %v3581
        %s3584 = sand.u32 %s186, 1
        %s3585 = scalar_lea.sflag [#allocation3], %s3584
        %s3586 = sand.u32 %s186, 1
        %s3587 = smul.addr %s3586, 8
        %s3588 = scalar_lea.vmem [#allocation2], %s3587
        // Predicated region
        $region49: #{tpu_custom_call.1} parent=47 // pred_check
          %p3589 = pneg %p196
        $region50: #{tpu_custom_call.1} parent=47 // pred_check_branch
          %3591 = sbr.rel (%p3589) target = $region52
        $region51: #{tpu_custom_call.1} parent=47 // pred_region
          %s3593 = ssub.s32 128, 128
          %3594 = vsyncadd %s3585, %s3593
          %s3595 = smul.addr %s21, 128
          %s3596 = scalar_lea.hbm %s7, %s3595
          %s3598 = sshll.u32 %s3588, 4
          %s3599 = int_to_ptr.vmem [resolvable:$true] %s3598
          %3601 = dma.vmem_to_hbm [thread:$0]  %s3599, 128, %s3596, %s3585
        $region52: #{tpu_custom_call.1} parent=47 // pred_fallthru
          _
      $region48: #{tpu_custom_call.1} parent=5 // pred_fallthru
        _
      %p3602 = scmp.le.s32.totalorder 2, %s16
      // Predicated region
      $region53: #{tpu_custom_call.1} parent=5 // pred_check
        %p3603 = pneg %p3602
      $region54: #{tpu_custom_call.1} parent=5 // pred_check_branch
        %3605 = sbr.rel (%p3603) target = $region56
      $region55: #{tpu_custom_call.1} parent=5 // pred_region
        %s3606 = ssub.s32 %s16, 2
        // Predicated region
        $region57: #{tpu_custom_call.1} parent=55 // pred_check
          %p3607 = pneg %p202
        $region58: #{tpu_custom_call.1} parent=55 // pred_check_branch
          %3609 = sbr.rel (%p3607) target = $region60
        $region59: #{tpu_custom_call.1} parent=55 // pred_region
          %s3610 = sand.u32 %s187, 1
          %s3611 = scalar_lea.sflag [#allocation3], %s3610
          %s3612 = sand.u32 %s187, 1
          %s3613 = smul.addr %s3612, 8
          %s3614 = scalar_lea.vmem [#allocation2], %s3613
          %3615 = dma.done %s3611, 128
        $region60: #{tpu_custom_call.1} parent=55 // pred_fallthru
          _
      $region56: #{tpu_custom_call.1} parent=5 // pred_fallthru
        _
    $region6: #{tpu_custom_call.1} parent=1 // loop_footer
      %s20 = sadd.s32 1, %s16
    $region7: #{tpu_custom_call.1} parent=1 // loop_footer_branch
      %15 = sbr.rel target = $region3
    $region8: #{tpu_custom_call.1} parent=1 // loop_exit
      _
    %3616 = vsyncpa [#allocation3], 1
    %s3617 = scalar_lea.sflag [#allocation3], 1
    %3618 = vsyncpa %s3617, 1

</llo_original>
